<compile_context>
chip_gen: v7x
topology: tpu7x:2x2x1
jax: 0.10.0
libtpu: 0.0.40
codegen_flags: <defaults>
</compile_context>

<pallas_src>
import jax
import jax.numpy as jnp
from jax.experimental import pallas as pl
from jax.experimental.pallas import tpu as pltpu

CHNS = [64, 192, 384, 256, 256]   # lhat_Loss.chns for net='alex'
EPS = 1e-10

# Budget for the (double-buffered) input blocks of one layer: 4 * C * thw * itemsize.
_BLOCK_VMEM_BUDGET = 24 << 20


def _make_layer_kernel(hw: int, thw: int):
    """Kernel for one LPIPS layer.

    Blocks: x0, x1 -> (1, C, THW); wo -> (2, C) [row0 = conv weight, row1 = ones];
    out -> (1, 1, 1).  Scratch: lane-wide f32 accumulator (1, THW).
    """
    need_mask = (hw % thw) != 0
    inv_hw = 1.0 / float(hw)

    def kernel(x0_ref, x1_ref, wo_ref, out_ref, acc_ref):
        h = pl.program_id(1)
        nh = pl.num_programs(1)

        @pl.when(h == 0)
        def _init():
            acc_ref[...] = jnp.zeros_like(acc_ref)

        x0 = x0_ref[0]                          # (C, THW), native dtype
        x1 = x1_ref[0]
        w = wo_ref[0:1, :].astype(x0.dtype)     # (1, C) conv weight row
        ones = wo_ref[1:2, :]                   # (1, C) f32 ones row

        # Weighted channel sums on the MXU (vector-extended slot), f32 accumulate.
        wx0 = jnp.dot(w, x0, precision=jax.lax.Precision.HIGHEST,
                      preferred_element_type=jnp.float32)          # (1, THW)
        wx1 = jnp.dot(w, x1, precision=jax.lax.Precision.HIGHEST,
                      preferred_element_type=jnp.float32)

        # Squared channel norms: square in f32 (keeps tolerance for bf16 feats),
        # contract over C on the MXU with the ones row.
        x0f = x0.astype(jnp.float32)
        x1f = x1.astype(jnp.float32)
        s0 = jnp.dot(ones, x0f * x0f, precision=jax.lax.Precision.HIGHEST,
                     preferred_element_type=jnp.float32)            # (1, THW)
        s1 = jnp.dot(ones, x1f * x1f, precision=jax.lax.Precision.HIGHEST,
                     preferred_element_type=jnp.float32)

        # conv1x1(f0 - f1) == wx0/(||x0||+eps) - wx1/(||x1||+eps)
        # (eps on the norm, matching normalize_tensor exactly)
        conv = wx0 / (jnp.sqrt(s0) + EPS) - wx1 / (jnp.sqrt(s1) + EPS)
        sq = conv * conv                                             # (1, THW)

        if need_mask:
            # Only the final tile is partial: gate the mask so full tiles skip it.
            # Keep it a select (jnp.where), so Inf/NaN from garbage-padded lanes
            # is discarded rather than propagated.
            @pl.when(h == nh - 1)
            def _acc_tail():
                lane = jax.lax.broadcasted_iota(jnp.int32, sq.shape, 1)
                acc_ref[...] += jnp.where(h * thw + lane < hw, sq, 0.0)

            @pl.when(h < nh - 1)
            def _acc_full():
                acc_ref[...] += sq
        else:
            acc_ref[...] += sq

        @pl.when(h == nh - 1)
        def _finalize():
            # Single cross-lane reduction + spatial mean + tiny store, once.
            res = jnp.sum(acc_ref[...], axis=1, keepdims=True) * inv_hw  # (1, 1)
            out_ref[0] = res

    return kernel


def _layer_loss(x0, x1, w, *, max_hw_tile=2048):
    """Per-layer LPIPS contribution: (N, 1, 1) = mean_hw(conv1x1(f0-f1)^2)."""
    assert max_hw_tile % 128 == 0
    n, c, hh, ww = x0.shape
    hw = hh * ww

    # Free reshapes of contiguous NCHW tensors (no transpose, no extra HBM pass).
    x0 = x0.reshape(n, c, hw)
    x1 = x1.reshape(n, c, hw)
    w_row = jnp.asarray(w, jnp.float32).reshape(1, c)
    wo = jnp.concatenate([w_row, jnp.ones((1, c), jnp.float32)], axis=0)  # (2, C)

    itemsize = jnp.dtype(x0.dtype).itemsize
    # Largest multiple-of-128 tile whose double-buffered blocks fit the budget.
    thw_budget = max(128, (_BLOCK_VMEM_BUDGET // (4 * c * itemsize)) // 128 * 128)
    cap = min(max_hw_tile, thw_budget)
    thw = hw if hw <= cap else cap          # full HW dim, or a multiple of 128
    num_tiles = pl.cdiv(hw, thw)

    # Scoped VMEM: 2 inputs x 2 pipeline buffers x block + weights + lane-wide
    # f32 accumulator + headroom.  Cap at 48 MiB (v7x has 64 MiB per TC).
    vmem_bytes = (4 * c * thw * itemsize) + (4 * c * 4) + (8 * thw * 4) + (8 << 20)
    vmem_bytes = int(min(max(vmem_bytes, 16 << 20), 48 << 20))

    kernel = _make_layer_kernel(hw, thw)
    return pl.pallas_call(
        kernel,
        out_shape=jax.ShapeDtypeStruct((n, 1, 1), jnp.float32),
        grid_spec=pltpu.PrefetchScalarGridSpec(
            num_scalar_prefetch=0,
            grid=(n, num_tiles),
            in_specs=[
                pl.BlockSpec((1, c, thw), lambda b, h: (b, 0, h)),
                pl.BlockSpec((1, c, thw), lambda b, h: (b, 0, h)),
                pl.BlockSpec((2, c), lambda b, h: (0, 0)),
            ],
            out_specs=pl.BlockSpec((1, 1, 1), lambda b, h: (b, 0, 0)),
            scratch_shapes=[pltpu.VMEM((1, thw), jnp.float32)],
        ),
        compiler_params=pltpu.CompilerParams(
            dimension_semantics=("parallel", "arbitrary"),
            vmem_limit_bytes=vmem_bytes,
        ),
    )(x0, x1, wo)


def lhat_loss(feats0, feats1, weights, *, max_hw_tile=2048):
    """feats0, feats1: lists of 5 NCHW feature arrays (per-layer shapes differ).
    weights: list of 5 arrays of shape (C_kk,) — 1x1-conv weights (no bias).
    Returns val of shape (N, 1, 1, 1), matching PyTorch keepdim semantics."""
    assert len(feats0) == len(feats1) == len(weights)
    vals = [
        _layer_loss(f0, f1, wk, max_hw_tile=max_hw_tile)
        for f0, f1, wk in zip(feats0, feats1, weights)
    ]
    val = vals[0]
    for v in vals[1:]:
        val = val + v
    n = feats0[0].shape[0]
    return val.reshape(n, 1, 1, 1)


def lhat_loss_ref(feats0, feats1, weights):
    """Pure-JAX reference mirroring the PyTorch forward (NCHW)."""
    val = 0.0
    for f0, f1, wk in zip(feats0, feats1, weights):
        n0 = jnp.sqrt(jnp.sum(f0 * f0, axis=1, keepdims=True))
        n1 = jnp.sqrt(jnp.sum(f1 * f1, axis=1, keepdims=True))
        d = f0 / (n0 + EPS) - f1 / (n1 + EPS)
        conv = jnp.sum(d * wk.reshape(1, -1, 1, 1), axis=1, keepdims=True)
        val = val + jnp.mean(conv ** 2, axis=(2, 3), keepdims=True)
    return val


if __name__ == "__main__":
    key = jax.random.PRNGKey(0)
    N = 2
    # Small spatial sizes consistent with the module; 18*18=324 exercises the
    # multi-tile + masked-tail path when max_hw_tile=128, 9*9=81 the single
    # full-HW-tile path.
    spatials = [18, 18, 9, 9, 9]

    feats0, feats1, weights = [], [], []
    for c, s in zip(CHNS, spatials):
        key, k0, k1, kw = jax.random.split(key, 4)
        feats0.append(jax.random.normal(k0, (N, c, s, s), jnp.float32))
        feats1.append(jax.random.normal(k1, (N, c, s, s), jnp.float32))
        bound = 1.0 / float(c) ** 0.5
        weights.append(jax.random.uniform(kw, (c,), jnp.float32, -bound, bound))

    ref = jax.block_until_ready(lhat_loss_ref(feats0, feats1, weights))

    # Default tile cap: every test layer runs as a single HW tile.
    val_big = jax.block_until_ready(lhat_loss(feats0, feats1, weights))
    # Forced small tiles: multi-tile reduction with a masked partial tail.
    val_small = jax.block_until_ready(
        lhat_loss(feats0, feats1, weights, max_hw_tile=128))

    assert val_big.shape == (N, 1, 1, 1), val_big.shape
    assert val_small.shape == (N, 1, 1, 1), val_small.shape
    assert jnp.allclose(val_big, ref, rtol=2e-4, atol=1e-6), (val_big, ref)
    assert jnp.allclose(val_small, ref, rtol=2e-4, atol=1e-6), (val_small, ref)
    print("KERNEL_OK")
</pallas_src>

<mosaic_0001>
module attributes {stable_mosaic.version = 11 : i64} {
  func.func @kernel(%arg0: i32, %arg1: i32, %arg2: memref<1x64x324xf32, #tpu.memory_space<vmem>>, %arg3: memref<1x64x324xf32, #tpu.memory_space<vmem>>, %arg4: memref<2x64xf32, #tpu.memory_space<vmem>>, %arg5: memref<1x1x1xf32, #tpu.memory_space<vmem>>, %arg6: memref<1x324xf32, #tpu.memory_space<vmem>>) attributes {dimension_semantics = [#tpu.dimension_semantics<parallel>, #tpu.dimension_semantics<arbitrary>], iteration_bounds = array<i64: 2, 1>, scalar_prefetch = 0 : i64, scratch_operands = 1 : i64, tpu.core_type = #tpu.core_type<tc>, window_params = [{transform_indices = @transform_0, window_bounds = array<i64: 1, 64, 324>}, {transform_indices = @transform_1, window_bounds = array<i64: 1, 64, 324>}, {pipeline_mode = #tpu.pipeline_mode<synchronous>, transform_indices = @transform_2, window_bounds = array<i64: 2, 64>}, {transform_indices = @transform_3, window_bounds = array<i64: 1, 1, 1>}]} {
    %c0_i32 = arith.constant 0 : i32
    %0 = arith.cmpi eq, %arg1, %c0_i32 : i32
    %1 = arith.extui %0 : i1 to i32
    %c0_i32_0 = arith.constant 0 : i32
    %2 = arith.cmpi ne, %1, %c0_i32_0 : i32
    scf.if %2 {
      %cst_20 = arith.constant 0.000000e+00 : f32
      %31 = vector.broadcast %cst_20 : f32 to vector<1x324xf32>
      %c0_21 = arith.constant 0 : index
      %c0_22 = arith.constant 0 : index
      %32 = vector.load %arg6[%c0_21, %c0_22] : memref<1x324xf32, #tpu.memory_space<vmem>>, vector<1x324xf32>
      tpu.vector_store %arg6[%c0_21, %c0_22], %31 {strides = array<i32>} : memref<1x324xf32, #tpu.memory_space<vmem>>, vector<1x324xf32>,
    } else {
    }
    %c0 = arith.constant 0 : index
    %c0_1 = arith.constant 0 : index
    %c0_2 = arith.constant 0 : index
    %3 = vector.load %arg2[%c0, %c0_1, %c0_2] : memref<1x64x324xf32, #tpu.memory_space<vmem>>, vector<1x64x324xf32>
    %4 = vector.shape_cast %3 : vector<1x64x324xf32> to vector<64x324xf32>
    %c0_3 = arith.constant 0 : index
    %c0_4 = arith.constant 0 : index
    %c0_5 = arith.constant 0 : index
    %5 = vector.load %arg3[%c0_3, %c0_4, %c0_5] : memref<1x64x324xf32, #tpu.memory_space<vmem>>, vector<1x64x324xf32>
    %6 = vector.shape_cast %5 : vector<1x64x324xf32> to vector<64x324xf32>
    %c0_6 = arith.constant 0 : index
    %c0_7 = arith.constant 0 : index
    %7 = vector.load %arg4[%c0_6, %c0_7] : memref<2x64xf32, #tpu.memory_space<vmem>>, vector<1x64xf32>
    %c1 = arith.constant 1 : index
    %c0_8 = arith.constant 0 : index
    %8 = vector.load %arg4[%c1, %c0_8] : memref<2x64xf32, #tpu.memory_space<vmem>>, vector<1x64xf32>
    %cst = arith.constant dense<0.000000e+00> : vector<1x324xf32>
    %9 = tpu.matmul %7, %4, %cst {dimension_numbers = #tpu.dot_dimension_numbers<[1], [0], [0], [1], [0, 0, 1, 1], [], []>, precision = #tpu.contract_precision<fp32>} : vector<1x64xf32>, vector<64x324xf32>, vector<1x324xf32> -> vector<1x324xf32>
    %cst_9 = arith.constant dense<0.000000e+00> : vector<1x324xf32>
    %10 = tpu.matmul %7, %6, %cst_9 {dimension_numbers = #tpu.dot_dimension_numbers<[1], [0], [0], [1], [0, 0, 1, 1], [], []>, precision = #tpu.contract_precision<fp32>} : vector<1x64xf32>, vector<64x324xf32>, vector<1x324xf32> -> vector<1x324xf32>
    %11 = arith.mulf %4, %4 : vector<64x324xf32>
    %cst_10 = arith.constant dense<0.000000e+00> : vector<1x324xf32>
    %12 = tpu.matmul %8, %11, %cst_10 {dimension_numbers = #tpu.dot_dimension_numbers<[1], [0], [0], [1], [0, 0, 1, 1], [], []>, precision = #tpu.contract_precision<fp32>} : vector<1x64xf32>, vector<64x324xf32>, vector<1x324xf32> -> vector<1x324xf32>
    %13 = arith.mulf %6, %6 : vector<64x324xf32>
    %cst_11 = arith.constant dense<0.000000e+00> : vector<1x324xf32>
    %14 = tpu.matmul %8, %13, %cst_11 {dimension_numbers = #tpu.dot_dimension_numbers<[1], [0], [0], [1], [0, 0, 1, 1], [], []>, precision = #tpu.contract_precision<fp32>} : vector<1x64xf32>, vector<64x324xf32>, vector<1x324xf32> -> vector<1x324xf32>
    %15 = math.sqrt %12 : vector<1x324xf32>
    %cst_12 = arith.constant 1.000000e-10 : f32
    %16 = vector.broadcast %cst_12 : f32 to vector<1x324xf32>
    %17 = arith.addf %15, %16 : vector<1x324xf32>
    %18 = arith.divf %9, %17 : vector<1x324xf32>
    %19 = math.sqrt %14 : vector<1x324xf32>
    %cst_13 = arith.constant 1.000000e-10 : f32
    %20 = vector.broadcast %cst_13 : f32 to vector<1x324xf32>
    %21 = arith.addf %19, %20 : vector<1x324xf32>
    %22 = arith.divf %10, %21 : vector<1x324xf32>
    %23 = arith.subf %18, %22 : vector<1x324xf32>
    %24 = arith.mulf %23, %23 : vector<1x324xf32>
    %c0_14 = arith.constant 0 : index
    %c0_15 = arith.constant 0 : index
    %25 = vector.load %arg6[%c0_14, %c0_15] : memref<1x324xf32, #tpu.memory_space<vmem>>, vector<1x324xf32>
    %26 = arith.addf %25, %24 : vector<1x324xf32>
    %c0_16 = arith.constant 0 : index
    %c0_17 = arith.constant 0 : index
    %27 = vector.load %arg6[%c0_16, %c0_17] : memref<1x324xf32, #tpu.memory_space<vmem>>, vector<1x324xf32>
    tpu.vector_store %arg6[%c0_16, %c0_17], %26 {strides = array<i32>} : memref<1x324xf32, #tpu.memory_space<vmem>>, vector<1x324xf32>,
    %c0_i32_18 = arith.constant 0 : i32
    %28 = arith.cmpi eq, %arg1, %c0_i32_18 : i32
    %29 = arith.extui %28 : i1 to i32
    %c0_i32_19 = arith.constant 0 : i32
    %30 = arith.cmpi ne, %29, %c0_i32_19 : i32
    scf.if %30 {
      %c0_20 = arith.constant 0 : index
      %c0_21 = arith.constant 0 : index
      %31 = vector.load %arg6[%c0_20, %c0_21] : memref<1x324xf32, #tpu.memory_space<vmem>>, vector<1x324xf32>
      %cst_22 = arith.constant dense<0.000000e+00> : vector<1xf32>
      %32 = vector.multi_reduction <add>, %31, %cst_22 [1] : vector<1x324xf32> to vector<1xf32>
      %33 = vector.shape_cast %32 : vector<1xf32> to vector<1x1xf32>
      %cst_23 = arith.constant 0.00308641978 : f32
      %34 = vector.broadcast %cst_23 : f32 to vector<1x1xf32>
      %35 = arith.mulf %33, %34 : vector<1x1xf32>
      %c0_24 = arith.constant 0 : index
      %c0_25 = arith.constant 0 : index
      %c0_26 = arith.constant 0 : index
      %36 = vector.load %arg5[%c0_24, %c0_25, %c0_26] : memref<1x1x1xf32, #tpu.memory_space<vmem>>, vector<1x1x1xf32>
      %37 = vector.shape_cast %36 : vector<1x1x1xf32> to vector<1x1xf32>
      %38 = vector.shape_cast %35 : vector<1x1xf32> to vector<1x1x1xf32>
      tpu.vector_store %arg5[%c0_24, %c0_25, %c0_26], %38 {strides = array<i32>} : memref<1x1x1xf32, #tpu.memory_space<vmem>>, vector<1x1x1xf32>,
    } else {
    }
    return
  }
  func.func @transform_0(%arg0: i32, %arg1: i32) -> (i32, i32, i32) {
    %c0_i32 = arith.constant 0 : i32
    %c0_i32_0 = arith.constant 0 : i32
    return %arg0, %c0_i32, %arg1 : i32, i32, i32
  }
  func.func @transform_1(%arg0: i32, %arg1: i32) -> (i32, i32, i32) {
    %c0_i32 = arith.constant 0 : i32
    %c0_i32_0 = arith.constant 0 : i32
    return %arg0, %c0_i32, %arg1 : i32, i32, i32
  }
  func.func @transform_2(%arg0: i32, %arg1: i32) -> (i32, i32) {
    %c0_i32 = arith.constant 0 : i32
    %c0_i32_0 = arith.constant 0 : i32
    %c0_i32_1 = arith.constant 0 : i32
    return %c0_i32, %c0_i32_0 : i32, i32
  }
  func.func @transform_3(%arg0: i32, %arg1: i32) -> (i32, i32, i32) {
    %c0_i32 = arith.constant 0 : i32
    %c0_i32_0 = arith.constant 0 : i32
    %c0_i32_1 = arith.constant 0 : i32
    return %arg0, %c0_i32, %c0_i32_0 : i32, i32, i32
  }
}

</mosaic_0001>

<llo_original>
// kernel: tpu_custom_call.1
$region0: #{tpu_custom_call.1}
  #allocation0 [shape = 'u32[]', space=smem, size = 0x4, offset = 0x4, fixed_abs, tag = 'smem constant byte address 0x4 - core index']
  #allocation1 [shape = 'u32[144,128]{1,0:T(1,128)}', space=vmem, size = 0x12000, scoped, tag = 'internal scratch']
  #allocation2 [shape = 'f32[1,324]{1,0:T(1,128)}', space=vmem, size = 0x600, scoped, tag = 'scratch operand']
  %s0 = inlined_call_operand.hbm [shape: f32[2,64,324], index: 0, kind: input, shape index: {}]
  %s1 = inlined_call_operand.hbm [shape: f32[2,64,324], index: 1, kind: input, shape index: {}]
  %s2 = inlined_call_operand.vmem [shape: f32[2,64], index: 2, kind: input, shape index: {}]
  %s3 = inlined_call_operand.vmem [shape: f32[2,1,1], index: 3, kind: output, shape index: {}]
  %s4 = sld [smem:[#allocation0]]
  $region61: #{tpu_custom_call.1} parent=0
    _
  %s6 = ssub.s32 1, %s4
  %s7 = scalar_select 0, %s6, %s4
  $region1: #{tpu_custom_call.1} parent=0
    #allocation3 [shape = 'u8[196608]{0}', space=vmem, size = 0x30000, scoped, tag = 'input window, operand 0']
    #allocation4 [shape = 's32[2]{0}', space=sflag, size = 0x8, scoped, tag = 'scoped memory for tpu_custom_call.1']
    #allocation5 [shape = 'u8[196608]{0}', space=vmem, size = 0x30000, scoped, tag = 'input window, operand 1']
    #allocation6 [shape = 's32[2]{0}', space=sflag, size = 0x8, scoped, tag = 'scoped memory for tpu_custom_call.1']
    %8 = vsyncpa [#allocation4], 0
    %s9 = scalar_lea.sflag [#allocation4], 1
    %10 = vsyncpa %s9, 0
    %11 = vsyncpa [#allocation6], 0
    %s12 = scalar_lea.sflag [#allocation6], 1
    %13 = vsyncpa %s12, 0
    loop: start=0, step=1, limit=4
    $region2: #{tpu_custom_call.1} parent=1 // loop_pre_header
      _
    $region3: #{tpu_custom_call.1} parent=1 // loop_header
      %s15 = sphi 0, %s19
      %p16 = scmp.ge.s32.totalorder %s15, 4
      %s22 = sphi 0, %s34
      %s23 = sphi 0, %s30
      %s24 = sphi 0, %s22
      %s25 = sphi 0, %s23
      %s26 = sphi 0, %s24
      %s27 = sphi 0, %s25
      %s39 = sphi 0, %s41
      %s42 = sphi 0, %s39
      %s43 = sphi 0, %s42
      %s59 = sphi 0, %s43
      %s67 = sphi 0, %s69
      %s70 = sphi 0, %s67
      %s71 = sphi 0, %s70
      %s87 = sphi 0, %s71
      %s91 = sphi 0, %s91
      %s93 = sphi 0, %s91
      %s94 = sphi 0, %s93
      %s108 = sphi 0, %s94
      %s114 = sphi 0, %s116
      %s117 = sphi 0, %s114
      %s118 = sphi 0, %s117
      %s134 = sphi 0, %s118
    $region4: #{tpu_custom_call.1} parent=1 // loop_header_branch
      %18 = sbr.rel (%p16) target = $region8
    $region5: #{tpu_custom_call.1} parent=1 // loop_body
      %s20 = ssub.s32 %s15, 1
      %s21 = ssub.s32 %s15, 2
      %s28 = sadd.s32 1, %s23
      %p29 = scmp.ge.s32.totalorder %s28, 1
      %s30 = scalar_select %p29, 0, %s28
      %s31 = sadd.s32 1, %s22
      %s32 = scalar_select %p29, %s31, %s22
      %p33 = scmp.ge.s32.totalorder %s32, 2
      %s34 = scalar_select %p33, 0, %s32
      %s35 = ssub.s32 %s22, %s34
      %s36 = ssub.s32 %s23, %s30
      %s37 = sor.u32 %s35, %s36
      %p38 = scmp.eq.s32.totalorder %s37, 0
      %s40 = sadd.s32 %s39, 1
      %s41 = scalar_select %p38, %s39, %s40
      %p44 = pneg %p38
      %p45 = scmp.eq.s32.totalorder %s15, 1
      %p46 = por %p44, %p45
      %p47 = scmp.ne.s32.totalorder %s39, %s42
      %p48 = scmp.eq.s32.totalorder %s15, 0
      %p49 = por %p47, %p48
      %p50 = scmp.ne.s32.totalorder %s39, %s42
      %p51 = scmp.eq.s32.totalorder %s20, 1
      %p52 = por %p50, %p51
      %p53 = scmp.ne.s32.totalorder %s42, %s43
      %p54 = scmp.eq.s32.totalorder %s20, 0
      %p55 = por %p53, %p54
      %p56 = scmp.ne.s32.totalorder %s42, %s43
      %p57 = scmp.eq.s32.totalorder %s21, 1
      %p58 = por %p56, %p57
      %p60 = scmp.ne.s32.totalorder %s43, %s59
      %p61 = scmp.eq.s32.totalorder %s21, 0
      %p62 = por %p60, %p61
      %s63 = ssub.s32 %s22, %s34
      %s64 = ssub.s32 %s23, %s30
      %s65 = sor.u32 %s63, %s64
      %p66 = scmp.eq.s32.totalorder %s65, 0
      %s68 = sadd.s32 %s67, 1
      %s69 = scalar_select %p66, %s67, %s68
      %p72 = pneg %p66
      %p73 = scmp.eq.s32.totalorder %s15, 1
      %p74 = por %p72, %p73
      %p75 = scmp.ne.s32.totalorder %s67, %s70
      %p76 = scmp.eq.s32.totalorder %s15, 0
      %p77 = por %p75, %p76
      %p78 = scmp.ne.s32.totalorder %s67, %s70
      %p79 = scmp.eq.s32.totalorder %s20, 1
      %p80 = por %p78, %p79
      %p81 = scmp.ne.s32.totalorder %s70, %s71
      %p82 = scmp.eq.s32.totalorder %s20, 0
      %p83 = por %p81, %p82
      %p84 = scmp.ne.s32.totalorder %s70, %s71
      %p85 = scmp.eq.s32.totalorder %s21, 1
      %p86 = por %p84, %p85
      %p88 = scmp.ne.s32.totalorder %s71, %s87
      %p89 = scmp.eq.s32.totalorder %s21, 0
      %p90 = por %p88, %p89
      %s92 = sadd.s32 %s91, 1
      %p95 = scmp.eq.s32.totalorder %s15, 1
      %p96 = scmp.ne.s32.totalorder %s91, %s93
      %p97 = scmp.eq.s32.totalorder %s15, 0
      %p98 = por %p96, %p97
      %p99 = scmp.ne.s32.totalorder %s91, %s93
      %p100 = scmp.eq.s32.totalorder %s20, 1
      %p101 = por %p99, %p100
      %p102 = scmp.ne.s32.totalorder %s93, %s94
      %p103 = scmp.eq.s32.totalorder %s20, 0
      %p104 = por %p102, %p103
      %p105 = scmp.ne.s32.totalorder %s93, %s94
      %p106 = scmp.eq.s32.totalorder %s21, 1
      %p107 = por %p105, %p106
      %p109 = scmp.ne.s32.totalorder %s94, %s108
      %p110 = scmp.eq.s32.totalorder %s21, 0
      %p111 = por %p109, %p110
      %s112 = ssub.s32 %s22, %s34
      %p113 = scmp.eq.s32.totalorder %s112, 0
      %s115 = sadd.s32 %s114, 1
      %s116 = scalar_select %p113, %s114, %s115
      %p119 = pneg %p113
      %p120 = scmp.eq.s32.totalorder %s15, 1
      %p121 = por %p119, %p120
      %p122 = scmp.ne.s32.totalorder %s114, %s117
      %p123 = scmp.eq.s32.totalorder %s15, 0
      %p124 = por %p122, %p123
      %p125 = scmp.ne.s32.totalorder %s114, %s117
      %p126 = scmp.eq.s32.totalorder %s20, 1
      %p127 = por %p125, %p126
      %p128 = scmp.ne.s32.totalorder %s117, %s118
      %p129 = scmp.eq.s32.totalorder %s20, 0
      %p130 = por %p128, %p129
      %p131 = scmp.ne.s32.totalorder %s117, %s118
      %p132 = scmp.eq.s32.totalorder %s21, 1
      %p133 = por %p131, %p132
      %p135 = scmp.ne.s32.totalorder %s118, %s134
      %p136 = scmp.eq.s32.totalorder %s21, 0
      %p137 = por %p135, %p136
      %p138 = scmp.le.s32.totalorder 1, %s15
      %p139 = scmp.lt.s32.totalorder %s15, 3
      %p140 = pnand %p138, %p139
      %p141 = pneg %p140
      // Predicated region
      $region9: #{tpu_custom_call.1} parent=5 // pred_check
        _
      $region10: #{tpu_custom_call.1} parent=5 // pred_check_branch
        %143 = sbr.rel (%p140) target = $region12
      $region11: #{tpu_custom_call.1} parent=5 // pred_region
        %s144 = ssub.s32 %s15, 1
        // Predicated region
        $region13: #{tpu_custom_call.1} parent=11 // pred_check
          %p145 = pneg %p104
        $region14: #{tpu_custom_call.1} parent=11 // pred_check_branch
          %147 = sbr.rel (%p145) target = $region16
        $region15: #{tpu_custom_call.1} parent=11 // pred_region
          _
        $region16: #{tpu_custom_call.1} parent=11 // pred_fallthru
          _
      $region12: #{tpu_custom_call.1} parent=5 // pred_fallthru
        _
      %p148 = scmp.lt.s32.totalorder %s15, 2
      // Predicated region
      $region17: #{tpu_custom_call.1} parent=5 // pred_check
        %p149 = pneg %p148
      $region18: #{tpu_custom_call.1} parent=5 // pred_check_branch
        %151 = sbr.rel (%p149) target = $region20
      $region19: #{tpu_custom_call.1} parent=5 // pred_region
        // Predicated region
        $region21: #{tpu_custom_call.1} parent=19 // pred_check
          %p152 = pneg %p49
        $region22: #{tpu_custom_call.1} parent=19 // pred_check_branch
          %154 = sbr.rel (%p152) target = $region24
        $region23: #{tpu_custom_call.1} parent=19 // pred_region
          %s155 = sand.u32 %s39, 1
          %s156 = scalar_lea.sflag [#allocation4], %s155
          %s157 = sand.u32 %s39, 1
          %s158 = smul.addr %s157, 192
          %s159 = scalar_lea.vmem [#allocation3], %s158
          %s160 = smul.u32 3, %s23
          %s162 = ssub.s32 3072, 3072
          %163 = vsyncadd %s156, %s162
          %s164 = smul.addr %s22, 24
          %s165 = sadd.s32 %s160, %s164
          %s166 = smul.addr %s165, 128
          %s167 = scalar_lea.hbm %s0, %s166
          %s168 = sshll.u32 %s159, 4
          %s169 = int_to_ptr.vmem [resolvable:$true] %s168
          %174 = dma.hbm_to_vmem [thread:$0]  %s167, 3072, %s169, %s156, 384, 384, 24
        $region24: #{tpu_custom_call.1} parent=19 // pred_fallthru
          _
        // Predicated region
        $region25: #{tpu_custom_call.1} parent=19 // pred_check
          %p175 = pneg %p77
        $region26: #{tpu_custom_call.1} parent=19 // pred_check_branch
          %177 = sbr.rel (%p175) target = $region28
        $region27: #{tpu_custom_call.1} parent=19 // pred_region
          %s178 = sand.u32 %s67, 1
          %s179 = scalar_lea.sflag [#allocation6], %s178
          %s180 = sand.u32 %s67, 1
          %s181 = smul.addr %s180, 192
          %s182 = scalar_lea.vmem [#allocation5], %s181
          %s183 = smul.u32 3, %s23
          %s185 = ssub.s32 3072, 3072
          %186 = vsyncadd %s179, %s185
          %s187 = smul.addr %s22, 24
          %s188 = sadd.s32 %s183, %s187
          %s189 = smul.addr %s188, 128
          %s190 = scalar_lea.hbm %s1, %s189
          %s191 = sshll.u32 %s182, 4
          %s192 = int_to_ptr.vmem [resolvable:$true] %s191
          %197 = dma.hbm_to_vmem [thread:$0]  %s190, 3072, %s192, %s179, 384, 384, 24
        $region28: #{tpu_custom_call.1} parent=19 // pred_fallthru
          _
      $region20: #{tpu_custom_call.1} parent=5 // pred_fallthru
        _
      %p198 = scmp.le.s32.totalorder 1, %s15
      %p199 = scmp.lt.s32.totalorder %s15, 3
      %p200 = pnand %p198, %p199
      %p201 = pneg %p200
      // Predicated region
      $region29: #{tpu_custom_call.1} parent=5 // pred_check
        _
      $region30: #{tpu_custom_call.1} parent=5 // pred_check_branch
        %203 = sbr.rel (%p200) target = $region32
      $region31: #{tpu_custom_call.1} parent=5 // pred_region
        %s204 = ssub.s32 %s15, 1
        %s205 = sand.u32 %s42, 1
        %s206 = scalar_lea.sflag [#allocation4], %s205
        %s207 = sand.u32 %s42, 1
        %s208 = smul.addr %s207, 192
        %s209 = scalar_lea.vmem [#allocation3], %s208
        // Predicated region
        $region33: #{tpu_custom_call.1} parent=31 // pred_check
          %p210 = pneg %p55
        $region34: #{tpu_custom_call.1} parent=31 // pred_check_branch
          %212 = sbr.rel (%p210) target = $region36
        $region35: #{tpu_custom_call.1} parent=31 // pred_region
          %213 = dma.done %s206, 3072
        $region36: #{tpu_custom_call.1} parent=31 // pred_fallthru
          _
        %s214 = sand.u32 %s70, 1
        %s215 = scalar_lea.sflag [#allocation6], %s214
        %s216 = sand.u32 %s70, 1
        %s217 = smul.addr %s216, 192
        %s218 = scalar_lea.vmem [#allocation5], %s217
        // Predicated region
        $region37: #{tpu_custom_call.1} parent=31 // pred_check
          %p219 = pneg %p83
        $region38: #{tpu_custom_call.1} parent=31 // pred_check_branch
          %221 = sbr.rel (%p219) target = $region40
        $region39: #{tpu_custom_call.1} parent=31 // pred_region
          %222 = dma.done %s215, 3072
        $region40: #{tpu_custom_call.1} parent=31 // pred_fallthru
          _
        %s223 = sand.u32 %s42, 1
        %s224 = scalar_lea.sflag [#allocation4], %s223
        %s225 = sand.u32 %s42, 1
        %s226 = smul.addr %s225, 192
        %s227 = scalar_lea.vmem [#allocation3], %s226
        %p228 = pneg %p55
        %p229 = pneg %p52
        %s230 = sand.u32 %s70, 1
        %s231 = scalar_lea.sflag [#allocation6], %s230
        %s232 = sand.u32 %s70, 1
        %s233 = smul.addr %s232, 192
        %s234 = scalar_lea.vmem [#allocation5], %s233
        %p235 = pneg %p83
        %p236 = pneg %p80
        %p237 = pneg %p104
        %p238 = pneg %p101
        %p239 = pneg %p130
        %p240 = pneg %p127
        %p241 = scmp.lt.s32.totalorder %s24, 1
        %s242 = scalar_select %p241, %s24, 1
        %s243 = scalar_lea.vmem %s3, %s242
        %s244 = smul.u32 3, %s25
        %s245 = smul.u32 3, %s25
        %p246 = scmp.lt.s32.totalorder %s24, 1
        %s247 = scalar_select %p246, %s24, 1
        %s248 = scalar_lea.vmem %s3, %s247
        %p249 = scmp.eq.s32.totalorder %s25, 0
        // Predicated region
        $region41: #{tpu_custom_call.1} parent=31 // pred_check
          %p250 = pneg %p249
        $region42: #{tpu_custom_call.1} parent=31 // pred_check_branch
          %252 = sbr.rel (%p250) target = $region44
        $region43: #{tpu_custom_call.1} parent=31 // pred_region
          %v253 = vlaneseq
          %vm254 = vcmp.ge.s32.totalorder %v253, 0
          %vm255 = vcmp.lt.s32.totalorder %v253, 324
          %vm256 = vmand %vm254, %vm255
          %257 = vst.msk [vmem:[#allocation2] sm:$0x7] %vm256, 0.0
        $region44: #{tpu_custom_call.1} parent=31 // pred_fallthru
          _
        %v258 = vld [vmem:[%s209] sm:$0xff]
        %v259 = vld [vmem:[%s209 + $0x8] sm:$0xff]
        %v260 = vld [vmem:[%s209 + $0x10] sm:$0xff]
        %v261 = vld [vmem:[%s209 + $0x18] sm:$0xff]
        %v262 = vld [vmem:[%s209 + $0x20] sm:$0xff]
        %v263 = vld [vmem:[%s209 + $0x28] sm:$0xff]
        %v264 = vld [vmem:[%s209 + $0x30] sm:$0xff]
        %v265 = vld [vmem:[%s209 + $0x38] sm:$0xff]
        %v266 = vld [vmem:[%s209 + $0x40] sm:$0xff]
        %v267 = vld [vmem:[%s209 + $0x48] sm:$0xff]
        %v268 = vld [vmem:[%s209 + $0x50] sm:$0xff]
        %v269 = vld [vmem:[%s209 + $0x58] sm:$0xff]
        %v270 = vld [vmem:[%s209 + $0x60] sm:$0xff]
        %v271 = vld [vmem:[%s209 + $0x68] sm:$0xff]
        %v272 = vld [vmem:[%s209 + $0x70] sm:$0xff]
        %v273 = vld [vmem:[%s209 + $0x78] sm:$0xff]
        %v274 = vld [vmem:[%s209 + $0x80] sm:$0xff]
        %v275 = vld [vmem:[%s209 + $0x88] sm:$0xff]
        %v276 = vld [vmem:[%s209 + $0x90] sm:$0xff]
        %v277 = vld [vmem:[%s209 + $0x98] sm:$0xff]
        %v278 = vld [vmem:[%s209 + $0xa0] sm:$0xff]
        %v279 = vld [vmem:[%s209 + $0xa8] sm:$0xff]
        %v280 = vld [vmem:[%s209 + $0xb0] sm:$0xff]
        %v281 = vld [vmem:[%s209 + $0xb8] sm:$0xff]
        %v282 = vld [vmem:[%s218] sm:$0xff]
        %v283 = vld [vmem:[%s218 + $0x8] sm:$0xff]
        %v284 = vld [vmem:[%s218 + $0x10] sm:$0xff]
        %v285 = vld [vmem:[%s218 + $0x18] sm:$0xff]
        %v286 = vld [vmem:[%s218 + $0x20] sm:$0xff]
        %v287 = vld [vmem:[%s218 + $0x28] sm:$0xff]
        %v288 = vld [vmem:[%s218 + $0x30] sm:$0xff]
        %v289 = vld [vmem:[%s218 + $0x38] sm:$0xff]
        %v290 = vld [vmem:[%s218 + $0x40] sm:$0xff]
        %v291 = vld [vmem:[%s218 + $0x48] sm:$0xff]
        %v292 = vld [vmem:[%s218 + $0x50] sm:$0xff]
        %v293 = vld [vmem:[%s218 + $0x58] sm:$0xff]
        %v294 = vld [vmem:[%s218 + $0x60] sm:$0xff]
        %v295 = vld [vmem:[%s218 + $0x68] sm:$0xff]
        %v296 = vld [vmem:[%s218 + $0x70] sm:$0xff]
        %v297 = vld [vmem:[%s218 + $0x78] sm:$0xff]
        %v298 = vld [vmem:[%s218 + $0x80] sm:$0xff]
        %v299 = vld [vmem:[%s218 + $0x88] sm:$0xff]
        %v300 = vld [vmem:[%s218 + $0x90] sm:$0xff]
        %v301 = vld [vmem:[%s218 + $0x98] sm:$0xff]
        %v302 = vld [vmem:[%s218 + $0xa0] sm:$0xff]
        %v303 = vld [vmem:[%s218 + $0xa8] sm:$0xff]
        %v304 = vld [vmem:[%s218 + $0xb0] sm:$0xff]
        %v305 = vld [vmem:[%s218 + $0xb8] sm:$0xff]
        %v306 = vld [vmem:[%s2] sm:$0x1]
        %v307 = vld [vmem:[%s2 + $0x1] sm:$0x1]
        %vm308 = vcmask 523264
        %v310 = vsel %vm308, %v306, 0
        %v312 = vand.u32 %v259, 4294901760
        %313 = vmatprep.subr.mxu0 %v312
        %v314 = vand.u32 %v258, 4294901760
        %315 = vmatpush1.msra.mxu0 %v314
        %v316 = vand.u32 %v262, 4294901760
        %317 = vmatprep.subr.mxu0 %v316
        %v318 = vand.u32 %v261, 4294901760
        %319 = vmatpush1.msra.mxu0 %v318
        %v320 = vand.u32 %v265, 4294901760
        %321 = vmatprep.subr.mxu0 %v320
        %v322 = vand.u32 %v264, 4294901760
        %323 = vmatpush1.msra.mxu0 %v322
        %v324 = vand.u32 %v268, 4294901760
        %325 = vmatprep.subr.mxu0 %v324
        %v326 = vand.u32 %v267, 4294901760
        %327 = vmatpush1.msra.mxu0 %v326
        %v328 = vand.u32 %v271, 4294901760
        %329 = vmatprep.subr.mxu0 %v328
        %v330 = vand.u32 %v270, 4294901760
        %331 = vmatpush1.msra.mxu0 %v330
        %v332 = vand.u32 %v274, 4294901760
        %333 = vmatprep.subr.mxu0 %v332
        %v334 = vand.u32 %v273, 4294901760
        %335 = vmatpush1.msra.mxu0 %v334
        %v336 = vand.u32 %v277, 4294901760
        %337 = vmatprep.subr.mxu0 %v336
        %v338 = vand.u32 %v276, 4294901760
        %339 = vmatpush1.msra.mxu0 %v338
        %v340 = vand.u32 %v280, 4294901760
        %341 = vmatprep.subr.mxu0 %v340
        %v342 = vand.u32 %v279, 4294901760
        %343 = vmatpush1.msra.mxu0 %v342
        %344 = vmatprep.subr.mxu0 0.0
        %345 = vmatpush1.msra.mxu0 0.0
        %346 = vmatprep.subr.mxu0 0.0
        %347 = vmatpush1.msra.mxu0 0.0
        %348 = vmatprep.subr.mxu0 0.0
        %349 = vmatpush1.msra.mxu0 0.0
        %350 = vmatprep.subr.mxu0 0.0
        %351 = vmatpush1.msra.mxu0 0.0
        %352 = vmatprep.subr.mxu0 0.0
        %353 = vmatpush1.msra.mxu0 0.0
        %354 = vmatprep.subr.mxu0 0.0
        %355 = vmatpush1.msra.mxu0 0.0
        %356 = vmatprep.subr.mxu0 0.0
        %357 = vmatpush1.msra.mxu0 0.0
        %358 = vmatprep.subr.mxu0 0.0
        %359 = vmatpush1.msra.mxu0 0.0
        %360 = vmatprep.subr.mxu0 0.0
        %361 = vmatpush1.msra.mxu0 0.0
        %362 = vmatprep.subr.mxu0 0.0
        %363 = vmatpush1.msra.mxu0 0.0
        %364 = vmatprep.subr.mxu0 0.0
        %365 = vmatpush1.msra.mxu0 0.0
        %366 = vmatprep.subr.mxu0 0.0
        %367 = vmatpush1.msra.mxu0 0.0
        %368 = vmatprep.subr.mxu0 0.0
        %369 = vmatpush1.msra.mxu0 0.0
        %370 = vmatprep.subr.mxu0 0.0
        %371 = vmatpush1.msra.mxu0 0.0
        %372 = vmatprep.subr.mxu0 0.0
        %373 = vmatpush1.msra.mxu0 0.0
        %374 = vmatprep.subr.mxu0 0.0
        %375 = vmatpush1.msra.mxu0 0.0
        %376 = vmatprep.subr.mxu0 0.0
        %377 = vmatpush1.msra.mxu0 0.0
        %378 = vmatprep.subr.mxu0 0.0
        %379 = vmatpush1.msra.mxu0 0.0
        %380 = vmatprep.subr.mxu0 0.0
        %381 = vmatpush1.msra.mxu0 0.0
        %382 = vmatprep.subr.mxu0 0.0
        %383 = vmatpush1.msra.mxu0 0.0
        %384 = vmatprep.subr.mxu0 0.0
        %385 = vmatpush1.msra.mxu0 0.0
        %386 = vmatprep.subr.mxu0 0.0
        %387 = vmatpush1.msra.mxu0 0.0
        %388 = vmatprep.subr.mxu0 0.0
        %389 = vmatpush1.msra.mxu0 0.0
        %390 = vmatprep.subr.mxu0 0.0
        %391 = vmatpush1.msra.mxu0 0.0
        %392 = vmatprep.mubr.f32.mxu0 0.0
        %v393 = vand.u32 %v310, 4294901760
        %v394 = vsub.f32 %v310, %v393
        %v395 = vand.u32 %v394, 4294901760
        %v396 = vsub.f32 %v394, %v395
        %v397 = vand.u32 %v396, 4294901760
        %398 = vmatmul.mubr.f32.gmra.mrb[0].mxu0 %v397
        %v399 = vpop.f32.mrb[0].mxu0
        %v400 = vadd.f32 0.0, %v399
        %v401 = vpop.f32.mrb[0].mxu0
        %v402 = vadd.f32 0.0, %v401
        %403 = vdwg.mxu0
        %v404 = vand.u32 %v259, 4294901760
        %v405 = vsub.f32 %v259, %v404
        %v406 = vand.u32 %v405, 4294901760
        %v407 = vsub.f32 %v405, %v406
        %v408 = vand.u32 %v407, 4294901760
        %409 = vmatprep.subr.mxu0 %v408
        %v410 = vand.u32 %v258, 4294901760
        %v411 = vsub.f32 %v258, %v410
        %v412 = vand.u32 %v411, 4294901760
        %v413 = vsub.f32 %v411, %v412
        %v414 = vand.u32 %v413, 4294901760
        %415 = vmatpush1.msra.mxu0 %v414
        %v416 = vand.u32 %v262, 4294901760
        %v417 = vsub.f32 %v262, %v416
        %v418 = vand.u32 %v417, 4294901760
        %v419 = vsub.f32 %v417, %v418
        %v420 = vand.u32 %v419, 4294901760
        %421 = vmatprep.subr.mxu0 %v420
        %v422 = vand.u32 %v261, 4294901760
        %v423 = vsub.f32 %v261, %v422
        %v424 = vand.u32 %v423, 4294901760
        %v425 = vsub.f32 %v423, %v424
        %v426 = vand.u32 %v425, 4294901760
        %427 = vmatpush1.msra.mxu0 %v426
        %v428 = vand.u32 %v265, 4294901760
        %v429 = vsub.f32 %v265, %v428
        %v430 = vand.u32 %v429, 4294901760
        %v431 = vsub.f32 %v429, %v430
        %v432 = vand.u32 %v431, 4294901760
        %433 = vmatprep.subr.mxu0 %v432
        %v434 = vand.u32 %v264, 4294901760
        %v435 = vsub.f32 %v264, %v434
        %v436 = vand.u32 %v435, 4294901760
        %v437 = vsub.f32 %v435, %v436
        %v438 = vand.u32 %v437, 4294901760
        %439 = vmatpush1.msra.mxu0 %v438
        %v440 = vand.u32 %v268, 4294901760
        %v441 = vsub.f32 %v268, %v440
        %v442 = vand.u32 %v441, 4294901760
        %v443 = vsub.f32 %v441, %v442
        %v444 = vand.u32 %v443, 4294901760
        %445 = vmatprep.subr.mxu0 %v444
        %v446 = vand.u32 %v267, 4294901760
        %v447 = vsub.f32 %v267, %v446
        %v448 = vand.u32 %v447, 4294901760
        %v449 = vsub.f32 %v447, %v448
        %v450 = vand.u32 %v449, 4294901760
        %451 = vmatpush1.msra.mxu0 %v450
        %v452 = vand.u32 %v271, 4294901760
        %v453 = vsub.f32 %v271, %v452
        %v454 = vand.u32 %v453, 4294901760
        %v455 = vsub.f32 %v453, %v454
        %v456 = vand.u32 %v455, 4294901760
        %457 = vmatprep.subr.mxu0 %v456
        %v458 = vand.u32 %v270, 4294901760
        %v459 = vsub.f32 %v270, %v458
        %v460 = vand.u32 %v459, 4294901760
        %v461 = vsub.f32 %v459, %v460
        %v462 = vand.u32 %v461, 4294901760
        %463 = vmatpush1.msra.mxu0 %v462
        %v464 = vand.u32 %v274, 4294901760
        %v465 = vsub.f32 %v274, %v464
        %v466 = vand.u32 %v465, 4294901760
        %v467 = vsub.f32 %v465, %v466
        %v468 = vand.u32 %v467, 4294901760
        %469 = vmatprep.subr.mxu0 %v468
        %v470 = vand.u32 %v273, 4294901760
        %v471 = vsub.f32 %v273, %v470
        %v472 = vand.u32 %v471, 4294901760
        %v473 = vsub.f32 %v471, %v472
        %v474 = vand.u32 %v473, 4294901760
        %475 = vmatpush1.msra.mxu0 %v474
        %v476 = vand.u32 %v277, 4294901760
        %v477 = vsub.f32 %v277, %v476
        %v478 = vand.u32 %v477, 4294901760
        %v479 = vsub.f32 %v477, %v478
        %v480 = vand.u32 %v479, 4294901760
        %481 = vmatprep.subr.mxu0 %v480
        %v482 = vand.u32 %v276, 4294901760
        %v483 = vsub.f32 %v276, %v482
        %v484 = vand.u32 %v483, 4294901760
        %v485 = vsub.f32 %v483, %v484
        %v486 = vand.u32 %v485, 4294901760
        %487 = vmatpush1.msra.mxu0 %v486
        %v488 = vand.u32 %v280, 4294901760
        %v489 = vsub.f32 %v280, %v488
        %v490 = vand.u32 %v489, 4294901760
        %v491 = vsub.f32 %v489, %v490
        %v492 = vand.u32 %v491, 4294901760
        %493 = vmatprep.subr.mxu0 %v492
        %v494 = vand.u32 %v279, 4294901760
        %v495 = vsub.f32 %v279, %v494
        %v496 = vand.u32 %v495, 4294901760
        %v497 = vsub.f32 %v495, %v496
        %v498 = vand.u32 %v497, 4294901760
        %499 = vmatpush1.msra.mxu0 %v498
        %500 = vmatprep.subr.mxu0 0.0
        %501 = vmatpush1.msra.mxu0 0.0
        %502 = vmatprep.subr.mxu0 0.0
        %503 = vmatpush1.msra.mxu0 0.0
        %504 = vmatprep.subr.mxu0 0.0
        %505 = vmatpush1.msra.mxu0 0.0
        %506 = vmatprep.subr.mxu0 0.0
        %507 = vmatpush1.msra.mxu0 0.0
        %508 = vmatprep.subr.mxu0 0.0
        %509 = vmatpush1.msra.mxu0 0.0
        %510 = vmatprep.subr.mxu0 0.0
        %511 = vmatpush1.msra.mxu0 0.0
        %512 = vmatprep.subr.mxu0 0.0
        %513 = vmatpush1.msra.mxu0 0.0
        %514 = vmatprep.subr.mxu0 0.0
        %515 = vmatpush1.msra.mxu0 0.0
        %516 = vmatprep.subr.mxu0 0.0
        %517 = vmatpush1.msra.mxu0 0.0
        %518 = vmatprep.subr.mxu0 0.0
        %519 = vmatpush1.msra.mxu0 0.0
        %520 = vmatprep.subr.mxu0 0.0
        %521 = vmatpush1.msra.mxu0 0.0
        %522 = vmatprep.subr.mxu0 0.0
        %523 = vmatpush1.msra.mxu0 0.0
        %524 = vmatprep.subr.mxu0 0.0
        %525 = vmatpush1.msra.mxu0 0.0
        %526 = vmatprep.subr.mxu0 0.0
        %527 = vmatpush1.msra.mxu0 0.0
        %528 = vmatprep.subr.mxu0 0.0
        %529 = vmatpush1.msra.mxu0 0.0
        %530 = vmatprep.subr.mxu0 0.0
        %531 = vmatpush1.msra.mxu0 0.0
        %532 = vmatprep.subr.mxu0 0.0
        %533 = vmatpush1.msra.mxu0 0.0
        %534 = vmatprep.subr.mxu0 0.0
        %535 = vmatpush1.msra.mxu0 0.0
        %536 = vmatprep.subr.mxu0 0.0
        %537 = vmatpush1.msra.mxu0 0.0
        %538 = vmatprep.subr.mxu0 0.0
        %539 = vmatpush1.msra.mxu0 0.0
        %540 = vmatprep.subr.mxu0 0.0
        %541 = vmatpush1.msra.mxu0 0.0
        %542 = vmatprep.subr.mxu0 0.0
        %543 = vmatpush1.msra.mxu0 0.0
        %544 = vmatprep.subr.mxu0 0.0
        %545 = vmatpush1.msra.mxu0 0.0
        %546 = vmatprep.subr.mxu0 0.0
        %547 = vmatpush1.msra.mxu0 0.0
        %548 = vmatprep.mubr.f32.mxu0 0.0
        %v549 = vand.u32 %v310, 4294901760
        %550 = vmatmul.mubr.f32.gmra.mrb[0].mxu0 %v549
        %v551 = vpop.f32.mrb[0].mxu0
        %v552 = vadd.f32 %v400, %v551
        %v553 = vpop.f32.mrb[0].mxu0
        %v554 = vadd.f32 %v402, %v553
        %555 = vdwg.mxu0
        %v556 = vand.u32 %v259, 4294901760
        %v557 = vsub.f32 %v259, %v556
        %558 = vmatprep.subr.mxu0 %v557
        %v559 = vand.u32 %v258, 4294901760
        %v560 = vsub.f32 %v258, %v559
        %561 = vmatpush1.msra.mxu0 %v560
        %v562 = vand.u32 %v262, 4294901760
        %v563 = vsub.f32 %v262, %v562
        %564 = vmatprep.subr.mxu0 %v563
        %v565 = vand.u32 %v261, 4294901760
        %v566 = vsub.f32 %v261, %v565
        %567 = vmatpush1.msra.mxu0 %v566
        %v568 = vand.u32 %v265, 4294901760
        %v569 = vsub.f32 %v265, %v568
        %570 = vmatprep.subr.mxu0 %v569
        %v571 = vand.u32 %v264, 4294901760
        %v572 = vsub.f32 %v264, %v571
        %573 = vmatpush1.msra.mxu0 %v572
        %v574 = vand.u32 %v268, 4294901760
        %v575 = vsub.f32 %v268, %v574
        %576 = vmatprep.subr.mxu0 %v575
        %v577 = vand.u32 %v267, 4294901760
        %v578 = vsub.f32 %v267, %v577
        %579 = vmatpush1.msra.mxu0 %v578
        %v580 = vand.u32 %v271, 4294901760
        %v581 = vsub.f32 %v271, %v580
        %582 = vmatprep.subr.mxu0 %v581
        %v583 = vand.u32 %v270, 4294901760
        %v584 = vsub.f32 %v270, %v583
        %585 = vmatpush1.msra.mxu0 %v584
        %v586 = vand.u32 %v274, 4294901760
        %v587 = vsub.f32 %v274, %v586
        %588 = vmatprep.subr.mxu0 %v587
        %v589 = vand.u32 %v273, 4294901760
        %v590 = vsub.f32 %v273, %v589
        %591 = vmatpush1.msra.mxu0 %v590
        %v592 = vand.u32 %v277, 4294901760
        %v593 = vsub.f32 %v277, %v592
        %594 = vmatprep.subr.mxu0 %v593
        %v595 = vand.u32 %v276, 4294901760
        %v596 = vsub.f32 %v276, %v595
        %597 = vmatpush1.msra.mxu0 %v596
        %v598 = vand.u32 %v280, 4294901760
        %v599 = vsub.f32 %v280, %v598
        %600 = vmatprep.subr.mxu0 %v599
        %v601 = vand.u32 %v279, 4294901760
        %v602 = vsub.f32 %v279, %v601
        %603 = vmatpush1.msra.mxu0 %v602
        %604 = vmatprep.subr.mxu0 0.0
        %605 = vmatpush1.msra.mxu0 0.0
        %606 = vmatprep.subr.mxu0 0.0
        %607 = vmatpush1.msra.mxu0 0.0
        %608 = vmatprep.subr.mxu0 0.0
        %609 = vmatpush1.msra.mxu0 0.0
        %610 = vmatprep.subr.mxu0 0.0
        %611 = vmatpush1.msra.mxu0 0.0
        %612 = vmatprep.subr.mxu0 0.0
        %613 = vmatpush1.msra.mxu0 0.0
        %614 = vmatprep.subr.mxu0 0.0
        %615 = vmatpush1.msra.mxu0 0.0
        %616 = vmatprep.subr.mxu0 0.0
        %617 = vmatpush1.msra.mxu0 0.0
        %618 = vmatprep.subr.mxu0 0.0
        %619 = vmatpush1.msra.mxu0 0.0
        %620 = vmatprep.subr.mxu0 0.0
        %621 = vmatpush1.msra.mxu0 0.0
        %622 = vmatprep.subr.mxu0 0.0
        %623 = vmatpush1.msra.mxu0 0.0
        %624 = vmatprep.subr.mxu0 0.0
        %625 = vmatpush1.msra.mxu0 0.0
        %626 = vmatprep.subr.mxu0 0.0
        %627 = vmatpush1.msra.mxu0 0.0
        %628 = vmatprep.subr.mxu0 0.0
        %629 = vmatpush1.msra.mxu0 0.0
        %630 = vmatprep.subr.mxu0 0.0
        %631 = vmatpush1.msra.mxu0 0.0
        %632 = vmatprep.subr.mxu0 0.0
        %633 = vmatpush1.msra.mxu0 0.0
        %634 = vmatprep.subr.mxu0 0.0
        %635 = vmatpush1.msra.mxu0 0.0
        %636 = vmatprep.subr.mxu0 0.0
        %637 = vmatpush1.msra.mxu0 0.0
        %638 = vmatprep.subr.mxu0 0.0
        %639 = vmatpush1.msra.mxu0 0.0
        %640 = vmatprep.subr.mxu0 0.0
        %641 = vmatpush1.msra.mxu0 0.0
        %642 = vmatprep.subr.mxu0 0.0
        %643 = vmatpush1.msra.mxu0 0.0
        %644 = vmatprep.subr.mxu0 0.0
        %645 = vmatpush1.msra.mxu0 0.0
        %646 = vmatprep.subr.mxu0 0.0
        %647 = vmatpush1.msra.mxu0 0.0
        %648 = vmatprep.subr.mxu0 0.0
        %649 = vmatpush1.msra.mxu0 0.0
        %650 = vmatprep.subr.mxu0 0.0
        %651 = vmatpush1.msra.mxu0 0.0
        %652 = vmatprep.mubr.f32.mxu0 0.0
        %v653 = vand.u32 %v310, 4294901760
        %v654 = vsub.f32 %v310, %v653
        %655 = vmatmul.mubr.f32.gmra.mrb[0].mxu0 %v654
        %v656 = vpop.f32.mrb[0].mxu0
        %v657 = vadd.f32 %v552, %v656
        %v658 = vpop.f32.mrb[0].mxu0
        %v659 = vadd.f32 %v554, %v658
        %660 = vdwg.mxu0
        %v661 = vand.u32 %v259, 4294901760
        %662 = vmatprep.subr.mxu0 %v661
        %v663 = vand.u32 %v258, 4294901760
        %664 = vmatpush1.msra.mxu0 %v663
        %v665 = vand.u32 %v262, 4294901760
        %666 = vmatprep.subr.mxu0 %v665
        %v667 = vand.u32 %v261, 4294901760
        %668 = vmatpush1.msra.mxu0 %v667
        %v669 = vand.u32 %v265, 4294901760
        %670 = vmatprep.subr.mxu0 %v669
        %v671 = vand.u32 %v264, 4294901760
        %672 = vmatpush1.msra.mxu0 %v671
        %v673 = vand.u32 %v268, 4294901760
        %674 = vmatprep.subr.mxu0 %v673
        %v675 = vand.u32 %v267, 4294901760
        %676 = vmatpush1.msra.mxu0 %v675
        %v677 = vand.u32 %v271, 4294901760
        %678 = vmatprep.subr.mxu0 %v677
        %v679 = vand.u32 %v270, 4294901760
        %680 = vmatpush1.msra.mxu0 %v679
        %v681 = vand.u32 %v274, 4294901760
        %682 = vmatprep.subr.mxu0 %v681
        %v683 = vand.u32 %v273, 4294901760
        %684 = vmatpush1.msra.mxu0 %v683
        %v685 = vand.u32 %v277, 4294901760
        %686 = vmatprep.subr.mxu0 %v685
        %v687 = vand.u32 %v276, 4294901760
        %688 = vmatpush1.msra.mxu0 %v687
        %v689 = vand.u32 %v280, 4294901760
        %690 = vmatprep.subr.mxu0 %v689
        %v691 = vand.u32 %v279, 4294901760
        %692 = vmatpush1.msra.mxu0 %v691
        %693 = vmatprep.subr.mxu0 0.0
        %694 = vmatpush1.msra.mxu0 0.0
        %695 = vmatprep.subr.mxu0 0.0
        %696 = vmatpush1.msra.mxu0 0.0
        %697 = vmatprep.subr.mxu0 0.0
        %698 = vmatpush1.msra.mxu0 0.0
        %699 = vmatprep.subr.mxu0 0.0
        %700 = vmatpush1.msra.mxu0 0.0
        %701 = vmatprep.subr.mxu0 0.0
        %702 = vmatpush1.msra.mxu0 0.0
        %703 = vmatprep.subr.mxu0 0.0
        %704 = vmatpush1.msra.mxu0 0.0
        %705 = vmatprep.subr.mxu0 0.0
        %706 = vmatpush1.msra.mxu0 0.0
        %707 = vmatprep.subr.mxu0 0.0
        %708 = vmatpush1.msra.mxu0 0.0
        %709 = vmatprep.subr.mxu0 0.0
        %710 = vmatpush1.msra.mxu0 0.0
        %711 = vmatprep.subr.mxu0 0.0
        %712 = vmatpush1.msra.mxu0 0.0
        %713 = vmatprep.subr.mxu0 0.0
        %714 = vmatpush1.msra.mxu0 0.0
        %715 = vmatprep.subr.mxu0 0.0
        %716 = vmatpush1.msra.mxu0 0.0
        %717 = vmatprep.subr.mxu0 0.0
        %718 = vmatpush1.msra.mxu0 0.0
        %719 = vmatprep.subr.mxu0 0.0
        %720 = vmatpush1.msra.mxu0 0.0
        %721 = vmatprep.subr.mxu0 0.0
        %722 = vmatpush1.msra.mxu0 0.0
        %723 = vmatprep.subr.mxu0 0.0
        %724 = vmatpush1.msra.mxu0 0.0
        %725 = vmatprep.subr.mxu0 0.0
        %726 = vmatpush1.msra.mxu0 0.0
        %727 = vmatprep.subr.mxu0 0.0
        %728 = vmatpush1.msra.mxu0 0.0
        %729 = vmatprep.subr.mxu0 0.0
        %730 = vmatpush1.msra.mxu0 0.0
        %731 = vmatprep.subr.mxu0 0.0
        %732 = vmatpush1.msra.mxu0 0.0
        %733 = vmatprep.subr.mxu0 0.0
        %734 = vmatpush1.msra.mxu0 0.0
        %735 = vmatprep.subr.mxu0 0.0
        %736 = vmatpush1.msra.mxu0 0.0
        %737 = vmatprep.subr.mxu0 0.0
        %738 = vmatpush1.msra.mxu0 0.0
        %739 = vmatprep.subr.mxu0 0.0
        %740 = vmatpush1.msra.mxu0 0.0
        %741 = vmatprep.mubr.f32.mxu0 0.0
        %v742 = vand.u32 %v310, 4294901760
        %v743 = vsub.f32 %v310, %v742
        %v744 = vand.u32 %v743, 4294901760
        %745 = vmatmul.mubr.f32.gmra.mrb[0].mxu0 %v744
        %v746 = vpop.f32.mrb[0].mxu0
        %v747 = vadd.f32 %v657, %v746
        %v748 = vpop.f32.mrb[0].mxu0
        %v749 = vadd.f32 %v659, %v748
        %750 = vdwg.mxu0
        %v751 = vand.u32 %v259, 4294901760
        %v752 = vsub.f32 %v259, %v751
        %v753 = vand.u32 %v752, 4294901760
        %754 = vmatprep.subr.mxu0 %v753
        %v755 = vand.u32 %v258, 4294901760
        %v756 = vsub.f32 %v258, %v755
        %v757 = vand.u32 %v756, 4294901760
        %758 = vmatpush1.msra.mxu0 %v757
        %v759 = vand.u32 %v262, 4294901760
        %v760 = vsub.f32 %v262, %v759
        %v761 = vand.u32 %v760, 4294901760
        %762 = vmatprep.subr.mxu0 %v761
        %v763 = vand.u32 %v261, 4294901760
        %v764 = vsub.f32 %v261, %v763
        %v765 = vand.u32 %v764, 4294901760
        %766 = vmatpush1.msra.mxu0 %v765
        %v767 = vand.u32 %v265, 4294901760
        %v768 = vsub.f32 %v265, %v767
        %v769 = vand.u32 %v768, 4294901760
        %770 = vmatprep.subr.mxu0 %v769
        %v771 = vand.u32 %v264, 4294901760
        %v772 = vsub.f32 %v264, %v771
        %v773 = vand.u32 %v772, 4294901760
        %774 = vmatpush1.msra.mxu0 %v773
        %v775 = vand.u32 %v268, 4294901760
        %v776 = vsub.f32 %v268, %v775
        %v777 = vand.u32 %v776, 4294901760
        %778 = vmatprep.subr.mxu0 %v777
        %v779 = vand.u32 %v267, 4294901760
        %v780 = vsub.f32 %v267, %v779
        %v781 = vand.u32 %v780, 4294901760
        %782 = vmatpush1.msra.mxu0 %v781
        %v783 = vand.u32 %v271, 4294901760
        %v784 = vsub.f32 %v271, %v783
        %v785 = vand.u32 %v784, 4294901760
        %786 = vmatprep.subr.mxu0 %v785
        %v787 = vand.u32 %v270, 4294901760
        %v788 = vsub.f32 %v270, %v787
        %v789 = vand.u32 %v788, 4294901760
        %790 = vmatpush1.msra.mxu0 %v789
        %v791 = vand.u32 %v274, 4294901760
        %v792 = vsub.f32 %v274, %v791
        %v793 = vand.u32 %v792, 4294901760
        %794 = vmatprep.subr.mxu0 %v793
        %v795 = vand.u32 %v273, 4294901760
        %v796 = vsub.f32 %v273, %v795
        %v797 = vand.u32 %v796, 4294901760
        %798 = vmatpush1.msra.mxu0 %v797
        %v799 = vand.u32 %v277, 4294901760
        %v800 = vsub.f32 %v277, %v799
        %v801 = vand.u32 %v800, 4294901760
        %802 = vmatprep.subr.mxu0 %v801
        %v803 = vand.u32 %v276, 4294901760
        %v804 = vsub.f32 %v276, %v803
        %v805 = vand.u32 %v804, 4294901760
        %806 = vmatpush1.msra.mxu0 %v805
        %v807 = vand.u32 %v280, 4294901760
        %v808 = vsub.f32 %v280, %v807
        %v809 = vand.u32 %v808, 4294901760
        %810 = vmatprep.subr.mxu0 %v809
        %v811 = vand.u32 %v279, 4294901760
        %v812 = vsub.f32 %v279, %v811
        %v813 = vand.u32 %v812, 4294901760
        %814 = vmatpush1.msra.mxu0 %v813
        %815 = vmatprep.subr.mxu0 0.0
        %816 = vmatpush1.msra.mxu0 0.0
        %817 = vmatprep.subr.mxu0 0.0
        %818 = vmatpush1.msra.mxu0 0.0
        %819 = vmatprep.subr.mxu0 0.0
        %820 = vmatpush1.msra.mxu0 0.0
        %821 = vmatprep.subr.mxu0 0.0
        %822 = vmatpush1.msra.mxu0 0.0
        %823 = vmatprep.subr.mxu0 0.0
        %824 = vmatpush1.msra.mxu0 0.0
        %825 = vmatprep.subr.mxu0 0.0
        %826 = vmatpush1.msra.mxu0 0.0
        %827 = vmatprep.subr.mxu0 0.0
        %828 = vmatpush1.msra.mxu0 0.0
        %829 = vmatprep.subr.mxu0 0.0
        %830 = vmatpush1.msra.mxu0 0.0
        %831 = vmatprep.subr.mxu0 0.0
        %832 = vmatpush1.msra.mxu0 0.0
        %833 = vmatprep.subr.mxu0 0.0
        %834 = vmatpush1.msra.mxu0 0.0
        %835 = vmatprep.subr.mxu0 0.0
        %836 = vmatpush1.msra.mxu0 0.0
        %837 = vmatprep.subr.mxu0 0.0
        %838 = vmatpush1.msra.mxu0 0.0
        %839 = vmatprep.subr.mxu0 0.0
        %840 = vmatpush1.msra.mxu0 0.0
        %841 = vmatprep.subr.mxu0 0.0
        %842 = vmatpush1.msra.mxu0 0.0
        %843 = vmatprep.subr.mxu0 0.0
        %844 = vmatpush1.msra.mxu0 0.0
        %845 = vmatprep.subr.mxu0 0.0
        %846 = vmatpush1.msra.mxu0 0.0
        %847 = vmatprep.subr.mxu0 0.0
        %848 = vmatpush1.msra.mxu0 0.0
        %849 = vmatprep.subr.mxu0 0.0
        %850 = vmatpush1.msra.mxu0 0.0
        %851 = vmatprep.subr.mxu0 0.0
        %852 = vmatpush1.msra.mxu0 0.0
        %853 = vmatprep.subr.mxu0 0.0
        %854 = vmatpush1.msra.mxu0 0.0
        %855 = vmatprep.subr.mxu0 0.0
        %856 = vmatpush1.msra.mxu0 0.0
        %857 = vmatprep.subr.mxu0 0.0
        %858 = vmatpush1.msra.mxu0 0.0
        %859 = vmatprep.subr.mxu0 0.0
        %860 = vmatpush1.msra.mxu0 0.0
        %861 = vmatprep.subr.mxu0 0.0
        %862 = vmatpush1.msra.mxu0 0.0
        %863 = vmatprep.mubr.f32.mxu0 0.0
        %v864 = vand.u32 %v310, 4294901760
        %865 = vmatmul.mubr.f32.gmra.mrb[0].mxu0 %v864
        %v866 = vpop.f32.mrb[0].mxu0
        %v867 = vadd.f32 %v747, %v866
        %v868 = vpop.f32.mrb[0].mxu0
        %v869 = vadd.f32 %v749, %v868
        %870 = vdwg.mxu0
        %v871 = vand.u32 %v259, 4294901760
        %872 = vmatprep.subr.mxu0 %v871
        %v873 = vand.u32 %v258, 4294901760
        %874 = vmatpush1.msra.mxu0 %v873
        %v875 = vand.u32 %v262, 4294901760
        %876 = vmatprep.subr.mxu0 %v875
        %v877 = vand.u32 %v261, 4294901760
        %878 = vmatpush1.msra.mxu0 %v877
        %v879 = vand.u32 %v265, 4294901760
        %880 = vmatprep.subr.mxu0 %v879
        %v881 = vand.u32 %v264, 4294901760
        %882 = vmatpush1.msra.mxu0 %v881
        %v883 = vand.u32 %v268, 4294901760
        %884 = vmatprep.subr.mxu0 %v883
        %v885 = vand.u32 %v267, 4294901760
        %886 = vmatpush1.msra.mxu0 %v885
        %v887 = vand.u32 %v271, 4294901760
        %888 = vmatprep.subr.mxu0 %v887
        %v889 = vand.u32 %v270, 4294901760
        %890 = vmatpush1.msra.mxu0 %v889
        %v891 = vand.u32 %v274, 4294901760
        %892 = vmatprep.subr.mxu0 %v891
        %v893 = vand.u32 %v273, 4294901760
        %894 = vmatpush1.msra.mxu0 %v893
        %v895 = vand.u32 %v277, 4294901760
        %896 = vmatprep.subr.mxu0 %v895
        %v897 = vand.u32 %v276, 4294901760
        %898 = vmatpush1.msra.mxu0 %v897
        %v899 = vand.u32 %v280, 4294901760
        %900 = vmatprep.subr.mxu0 %v899
        %v901 = vand.u32 %v279, 4294901760
        %902 = vmatpush1.msra.mxu0 %v901
        %903 = vmatprep.subr.mxu0 0.0
        %904 = vmatpush1.msra.mxu0 0.0
        %905 = vmatprep.subr.mxu0 0.0
        %906 = vmatpush1.msra.mxu0 0.0
        %907 = vmatprep.subr.mxu0 0.0
        %908 = vmatpush1.msra.mxu0 0.0
        %909 = vmatprep.subr.mxu0 0.0
        %910 = vmatpush1.msra.mxu0 0.0
        %911 = vmatprep.subr.mxu0 0.0
        %912 = vmatpush1.msra.mxu0 0.0
        %913 = vmatprep.subr.mxu0 0.0
        %914 = vmatpush1.msra.mxu0 0.0
        %915 = vmatprep.subr.mxu0 0.0
        %916 = vmatpush1.msra.mxu0 0.0
        %917 = vmatprep.subr.mxu0 0.0
        %918 = vmatpush1.msra.mxu0 0.0
        %919 = vmatprep.subr.mxu0 0.0
        %920 = vmatpush1.msra.mxu0 0.0
        %921 = vmatprep.subr.mxu0 0.0
        %922 = vmatpush1.msra.mxu0 0.0
        %923 = vmatprep.subr.mxu0 0.0
        %924 = vmatpush1.msra.mxu0 0.0
        %925 = vmatprep.subr.mxu0 0.0
        %926 = vmatpush1.msra.mxu0 0.0
        %927 = vmatprep.subr.mxu0 0.0
        %928 = vmatpush1.msra.mxu0 0.0
        %929 = vmatprep.subr.mxu0 0.0
        %930 = vmatpush1.msra.mxu0 0.0
        %931 = vmatprep.subr.mxu0 0.0
        %932 = vmatpush1.msra.mxu0 0.0
        %933 = vmatprep.subr.mxu0 0.0
        %934 = vmatpush1.msra.mxu0 0.0
        %935 = vmatprep.subr.mxu0 0.0
        %936 = vmatpush1.msra.mxu0 0.0
        %937 = vmatprep.subr.mxu0 0.0
        %938 = vmatpush1.msra.mxu0 0.0
        %939 = vmatprep.subr.mxu0 0.0
        %940 = vmatpush1.msra.mxu0 0.0
        %941 = vmatprep.subr.mxu0 0.0
        %942 = vmatpush1.msra.mxu0 0.0
        %943 = vmatprep.subr.mxu0 0.0
        %944 = vmatpush1.msra.mxu0 0.0
        %945 = vmatprep.subr.mxu0 0.0
        %946 = vmatpush1.msra.mxu0 0.0
        %947 = vmatprep.subr.mxu0 0.0
        %948 = vmatpush1.msra.mxu0 0.0
        %949 = vmatprep.subr.mxu0 0.0
        %950 = vmatpush1.msra.mxu0 0.0
        %951 = vmatprep.mubr.f32.mxu0 0.0
        %v952 = vand.u32 %v310, 4294901760
        %953 = vmatmul.mubr.f32.gmra.mrb[0].mxu0 %v952
        %v954 = vpop.f32.mrb[0].mxu0
        %v955 = vadd.f32 %v867, %v954
        %v956 = vpop.f32.mrb[0].mxu0
        %v957 = vadd.f32 %v869, %v956
        %958 = vdwg.mxu0
        %959 = vmatprep.subr.mxu0 0.0
        %v960 = vand.u32 %v260, 4294901760
        %961 = vmatpush1.msra.mxu0 %v960
        %962 = vmatprep.subr.mxu0 0.0
        %v963 = vand.u32 %v263, 4294901760
        %964 = vmatpush1.msra.mxu0 %v963
        %965 = vmatprep.subr.mxu0 0.0
        %v966 = vand.u32 %v266, 4294901760
        %967 = vmatpush1.msra.mxu0 %v966
        %968 = vmatprep.subr.mxu0 0.0
        %v969 = vand.u32 %v269, 4294901760
        %970 = vmatpush1.msra.mxu0 %v969
        %971 = vmatprep.subr.mxu0 0.0
        %v972 = vand.u32 %v272, 4294901760
        %973 = vmatpush1.msra.mxu0 %v972
        %974 = vmatprep.subr.mxu0 0.0
        %v975 = vand.u32 %v275, 4294901760
        %976 = vmatpush1.msra.mxu0 %v975
        %977 = vmatprep.subr.mxu0 0.0
        %v978 = vand.u32 %v278, 4294901760
        %979 = vmatpush1.msra.mxu0 %v978
        %980 = vmatprep.subr.mxu0 0.0
        %v981 = vand.u32 %v281, 4294901760
        %982 = vmatpush1.msra.mxu0 %v981
        %983 = vmatprep.subr.mxu0 0.0
        %984 = vmatpush1.msra.mxu0 0.0
        %985 = vmatprep.subr.mxu0 0.0
        %986 = vmatpush1.msra.mxu0 0.0
        %987 = vmatprep.subr.mxu0 0.0
        %988 = vmatpush1.msra.mxu0 0.0
        %989 = vmatprep.subr.mxu0 0.0
        %990 = vmatpush1.msra.mxu0 0.0
        %991 = vmatprep.subr.mxu0 0.0
        %992 = vmatpush1.msra.mxu0 0.0
        %993 = vmatprep.subr.mxu0 0.0
        %994 = vmatpush1.msra.mxu0 0.0
        %995 = vmatprep.subr.mxu0 0.0
        %996 = vmatpush1.msra.mxu0 0.0
        %997 = vmatprep.subr.mxu0 0.0
        %998 = vmatpush1.msra.mxu0 0.0
        %999 = vmatprep.subr.mxu0 0.0
        %1000 = vmatpush1.msra.mxu0 0.0
        %1001 = vmatprep.subr.mxu0 0.0
        %1002 = vmatpush1.msra.mxu0 0.0
        %1003 = vmatprep.subr.mxu0 0.0
        %1004 = vmatpush1.msra.mxu0 0.0
        %1005 = vmatprep.subr.mxu0 0.0
        %1006 = vmatpush1.msra.mxu0 0.0
        %1007 = vmatprep.subr.mxu0 0.0
        %1008 = vmatpush1.msra.mxu0 0.0
        %1009 = vmatprep.subr.mxu0 0.0
        %1010 = vmatpush1.msra.mxu0 0.0
        %1011 = vmatprep.subr.mxu0 0.0
        %1012 = vmatpush1.msra.mxu0 0.0
        %1013 = vmatprep.subr.mxu0 0.0
        %1014 = vmatpush1.msra.mxu0 0.0
        %1015 = vmatprep.subr.mxu0 0.0
        %1016 = vmatpush1.msra.mxu0 0.0
        %1017 = vmatprep.subr.mxu0 0.0
        %1018 = vmatpush1.msra.mxu0 0.0
        %1019 = vmatprep.subr.mxu0 0.0
        %1020 = vmatpush1.msra.mxu0 0.0
        %1021 = vmatprep.subr.mxu0 0.0
        %1022 = vmatpush1.msra.mxu0 0.0
        %1023 = vmatprep.subr.mxu0 0.0
        %1024 = vmatpush1.msra.mxu0 0.0
        %1025 = vmatprep.subr.mxu0 0.0
        %1026 = vmatpush1.msra.mxu0 0.0
        %1027 = vmatprep.subr.mxu0 0.0
        %1028 = vmatpush1.msra.mxu0 0.0
        %1029 = vmatprep.subr.mxu0 0.0
        %1030 = vmatpush1.msra.mxu0 0.0
        %1031 = vmatprep.mubr.f32.mxu0 0.0
        %v1032 = vand.u32 %v310, 4294901760
        %v1033 = vsub.f32 %v310, %v1032
        %v1034 = vand.u32 %v1033, 4294901760
        %v1035 = vsub.f32 %v1033, %v1034
        %v1036 = vand.u32 %v1035, 4294901760
        %1037 = vmatmul.mubr.f32.gmra.mrb[0].mxu0 %v1036
        %v1038 = vpop.f32.mrb[0].mxu0
        %v1039 = vadd.f32 0.0, %v1038
        %v1040 = vpop.f32.mrb[0].mxu0
        %1041 = vdwg.mxu0
        %1042 = vmatprep.subr.mxu0 0.0
        %v1043 = vand.u32 %v260, 4294901760
        %v1044 = vsub.f32 %v260, %v1043
        %v1045 = vand.u32 %v1044, 4294901760
        %v1046 = vsub.f32 %v1044, %v1045
        %v1047 = vand.u32 %v1046, 4294901760
        %1048 = vmatpush1.msra.mxu0 %v1047
        %1049 = vmatprep.subr.mxu0 0.0
        %v1050 = vand.u32 %v263, 4294901760
        %v1051 = vsub.f32 %v263, %v1050
        %v1052 = vand.u32 %v1051, 4294901760
        %v1053 = vsub.f32 %v1051, %v1052
        %v1054 = vand.u32 %v1053, 4294901760
        %1055 = vmatpush1.msra.mxu0 %v1054
        %1056 = vmatprep.subr.mxu0 0.0
        %v1057 = vand.u32 %v266, 4294901760
        %v1058 = vsub.f32 %v266, %v1057
        %v1059 = vand.u32 %v1058, 4294901760
        %v1060 = vsub.f32 %v1058, %v1059
        %v1061 = vand.u32 %v1060, 4294901760
        %1062 = vmatpush1.msra.mxu0 %v1061
        %1063 = vmatprep.subr.mxu0 0.0
        %v1064 = vand.u32 %v269, 4294901760
        %v1065 = vsub.f32 %v269, %v1064
        %v1066 = vand.u32 %v1065, 4294901760
        %v1067 = vsub.f32 %v1065, %v1066
        %v1068 = vand.u32 %v1067, 4294901760
        %1069 = vmatpush1.msra.mxu0 %v1068
        %1070 = vmatprep.subr.mxu0 0.0
        %v1071 = vand.u32 %v272, 4294901760
        %v1072 = vsub.f32 %v272, %v1071
        %v1073 = vand.u32 %v1072, 4294901760
        %v1074 = vsub.f32 %v1072, %v1073
        %v1075 = vand.u32 %v1074, 4294901760
        %1076 = vmatpush1.msra.mxu0 %v1075
        %1077 = vmatprep.subr.mxu0 0.0
        %v1078 = vand.u32 %v275, 4294901760
        %v1079 = vsub.f32 %v275, %v1078
        %v1080 = vand.u32 %v1079, 4294901760
        %v1081 = vsub.f32 %v1079, %v1080
        %v1082 = vand.u32 %v1081, 4294901760
        %1083 = vmatpush1.msra.mxu0 %v1082
        %1084 = vmatprep.subr.mxu0 0.0
        %v1085 = vand.u32 %v278, 4294901760
        %v1086 = vsub.f32 %v278, %v1085
        %v1087 = vand.u32 %v1086, 4294901760
        %v1088 = vsub.f32 %v1086, %v1087
        %v1089 = vand.u32 %v1088, 4294901760
        %1090 = vmatpush1.msra.mxu0 %v1089
        %1091 = vmatprep.subr.mxu0 0.0
        %v1092 = vand.u32 %v281, 4294901760
        %v1093 = vsub.f32 %v281, %v1092
        %v1094 = vand.u32 %v1093, 4294901760
        %v1095 = vsub.f32 %v1093, %v1094
        %v1096 = vand.u32 %v1095, 4294901760
        %1097 = vmatpush1.msra.mxu0 %v1096
        %1098 = vmatprep.subr.mxu0 0.0
        %1099 = vmatpush1.msra.mxu0 0.0
        %1100 = vmatprep.subr.mxu0 0.0
        %1101 = vmatpush1.msra.mxu0 0.0
        %1102 = vmatprep.subr.mxu0 0.0
        %1103 = vmatpush1.msra.mxu0 0.0
        %1104 = vmatprep.subr.mxu0 0.0
        %1105 = vmatpush1.msra.mxu0 0.0
        %1106 = vmatprep.subr.mxu0 0.0
        %1107 = vmatpush1.msra.mxu0 0.0
        %1108 = vmatprep.subr.mxu0 0.0
        %1109 = vmatpush1.msra.mxu0 0.0
        %1110 = vmatprep.subr.mxu0 0.0
        %1111 = vmatpush1.msra.mxu0 0.0
        %1112 = vmatprep.subr.mxu0 0.0
        %1113 = vmatpush1.msra.mxu0 0.0
        %1114 = vmatprep.subr.mxu0 0.0
        %1115 = vmatpush1.msra.mxu0 0.0
        %1116 = vmatprep.subr.mxu0 0.0
        %1117 = vmatpush1.msra.mxu0 0.0
        %1118 = vmatprep.subr.mxu0 0.0
        %1119 = vmatpush1.msra.mxu0 0.0
        %1120 = vmatprep.subr.mxu0 0.0
        %1121 = vmatpush1.msra.mxu0 0.0
        %1122 = vmatprep.subr.mxu0 0.0
        %1123 = vmatpush1.msra.mxu0 0.0
        %1124 = vmatprep.subr.mxu0 0.0
        %1125 = vmatpush1.msra.mxu0 0.0
        %1126 = vmatprep.subr.mxu0 0.0
        %1127 = vmatpush1.msra.mxu0 0.0
        %1128 = vmatprep.subr.mxu0 0.0
        %1129 = vmatpush1.msra.mxu0 0.0
        %1130 = vmatprep.subr.mxu0 0.0
        %1131 = vmatpush1.msra.mxu0 0.0
        %1132 = vmatprep.subr.mxu0 0.0
        %1133 = vmatpush1.msra.mxu0 0.0
        %1134 = vmatprep.subr.mxu0 0.0
        %1135 = vmatpush1.msra.mxu0 0.0
        %1136 = vmatprep.subr.mxu0 0.0
        %1137 = vmatpush1.msra.mxu0 0.0
        %1138 = vmatprep.subr.mxu0 0.0
        %1139 = vmatpush1.msra.mxu0 0.0
        %1140 = vmatprep.subr.mxu0 0.0
        %1141 = vmatpush1.msra.mxu0 0.0
        %1142 = vmatprep.subr.mxu0 0.0
        %1143 = vmatpush1.msra.mxu0 0.0
        %1144 = vmatprep.subr.mxu0 0.0
        %1145 = vmatpush1.msra.mxu0 0.0
        %1146 = vmatprep.mubr.f32.mxu0 0.0
        %v1147 = vand.u32 %v310, 4294901760
        %1148 = vmatmul.mubr.f32.gmra.mrb[0].mxu0 %v1147
        %v1149 = vpop.f32.mrb[0].mxu0
        %v1150 = vadd.f32 %v1039, %v1149
        %v1151 = vpop.f32.mrb[0].mxu0
        %1152 = vdwg.mxu0
        %1153 = vmatprep.subr.mxu0 0.0
        %v1154 = vand.u32 %v260, 4294901760
        %v1155 = vsub.f32 %v260, %v1154
        %1156 = vmatpush1.msra.mxu0 %v1155
        %1157 = vmatprep.subr.mxu0 0.0
        %v1158 = vand.u32 %v263, 4294901760
        %v1159 = vsub.f32 %v263, %v1158
        %1160 = vmatpush1.msra.mxu0 %v1159
        %1161 = vmatprep.subr.mxu0 0.0
        %v1162 = vand.u32 %v266, 4294901760
        %v1163 = vsub.f32 %v266, %v1162
        %1164 = vmatpush1.msra.mxu0 %v1163
        %1165 = vmatprep.subr.mxu0 0.0
        %v1166 = vand.u32 %v269, 4294901760
        %v1167 = vsub.f32 %v269, %v1166
        %1168 = vmatpush1.msra.mxu0 %v1167
        %1169 = vmatprep.subr.mxu0 0.0
        %v1170 = vand.u32 %v272, 4294901760
        %v1171 = vsub.f32 %v272, %v1170
        %1172 = vmatpush1.msra.mxu0 %v1171
        %1173 = vmatprep.subr.mxu0 0.0
        %v1174 = vand.u32 %v275, 4294901760
        %v1175 = vsub.f32 %v275, %v1174
        %1176 = vmatpush1.msra.mxu0 %v1175
        %1177 = vmatprep.subr.mxu0 0.0
        %v1178 = vand.u32 %v278, 4294901760
        %v1179 = vsub.f32 %v278, %v1178
        %1180 = vmatpush1.msra.mxu0 %v1179
        %1181 = vmatprep.subr.mxu0 0.0
        %v1182 = vand.u32 %v281, 4294901760
        %v1183 = vsub.f32 %v281, %v1182
        %1184 = vmatpush1.msra.mxu0 %v1183
        %1185 = vmatprep.subr.mxu0 0.0
        %1186 = vmatpush1.msra.mxu0 0.0
        %1187 = vmatprep.subr.mxu0 0.0
        %1188 = vmatpush1.msra.mxu0 0.0
        %1189 = vmatprep.subr.mxu0 0.0
        %1190 = vmatpush1.msra.mxu0 0.0
        %1191 = vmatprep.subr.mxu0 0.0
        %1192 = vmatpush1.msra.mxu0 0.0
        %1193 = vmatprep.subr.mxu0 0.0
        %1194 = vmatpush1.msra.mxu0 0.0
        %1195 = vmatprep.subr.mxu0 0.0
        %1196 = vmatpush1.msra.mxu0 0.0
        %1197 = vmatprep.subr.mxu0 0.0
        %1198 = vmatpush1.msra.mxu0 0.0
        %1199 = vmatprep.subr.mxu0 0.0
        %1200 = vmatpush1.msra.mxu0 0.0
        %1201 = vmatprep.subr.mxu0 0.0
        %1202 = vmatpush1.msra.mxu0 0.0
        %1203 = vmatprep.subr.mxu0 0.0
        %1204 = vmatpush1.msra.mxu0 0.0
        %1205 = vmatprep.subr.mxu0 0.0
        %1206 = vmatpush1.msra.mxu0 0.0
        %1207 = vmatprep.subr.mxu0 0.0
        %1208 = vmatpush1.msra.mxu0 0.0
        %1209 = vmatprep.subr.mxu0 0.0
        %1210 = vmatpush1.msra.mxu0 0.0
        %1211 = vmatprep.subr.mxu0 0.0
        %1212 = vmatpush1.msra.mxu0 0.0
        %1213 = vmatprep.subr.mxu0 0.0
        %1214 = vmatpush1.msra.mxu0 0.0
        %1215 = vmatprep.subr.mxu0 0.0
        %1216 = vmatpush1.msra.mxu0 0.0
        %1217 = vmatprep.subr.mxu0 0.0
        %1218 = vmatpush1.msra.mxu0 0.0
        %1219 = vmatprep.subr.mxu0 0.0
        %1220 = vmatpush1.msra.mxu0 0.0
        %1221 = vmatprep.subr.mxu0 0.0
        %1222 = vmatpush1.msra.mxu0 0.0
        %1223 = vmatprep.subr.mxu0 0.0
        %1224 = vmatpush1.msra.mxu0 0.0
        %1225 = vmatprep.subr.mxu0 0.0
        %1226 = vmatpush1.msra.mxu0 0.0
        %1227 = vmatprep.subr.mxu0 0.0
        %1228 = vmatpush1.msra.mxu0 0.0
        %1229 = vmatprep.subr.mxu0 0.0
        %1230 = vmatpush1.msra.mxu0 0.0
        %1231 = vmatprep.subr.mxu0 0.0
        %1232 = vmatpush1.msra.mxu0 0.0
        %1233 = vmatprep.mubr.f32.mxu0 0.0
        %v1234 = vand.u32 %v310, 4294901760
        %v1235 = vsub.f32 %v310, %v1234
        %1236 = vmatmul.mubr.f32.gmra.mrb[0].mxu0 %v1235
        %v1237 = vpop.f32.mrb[0].mxu0
        %v1238 = vadd.f32 %v1150, %v1237
        %v1239 = vpop.f32.mrb[0].mxu0
        %1240 = vdwg.mxu0
        %1241 = vmatprep.subr.mxu0 0.0
        %v1242 = vand.u32 %v260, 4294901760
        %1243 = vmatpush1.msra.mxu0 %v1242
        %1244 = vmatprep.subr.mxu0 0.0
        %v1245 = vand.u32 %v263, 4294901760
        %1246 = vmatpush1.msra.mxu0 %v1245
        %1247 = vmatprep.subr.mxu0 0.0
        %v1248 = vand.u32 %v266, 4294901760
        %1249 = vmatpush1.msra.mxu0 %v1248
        %1250 = vmatprep.subr.mxu0 0.0
        %v1251 = vand.u32 %v269, 4294901760
        %1252 = vmatpush1.msra.mxu0 %v1251
        %1253 = vmatprep.subr.mxu0 0.0
        %v1254 = vand.u32 %v272, 4294901760
        %1255 = vmatpush1.msra.mxu0 %v1254
        %1256 = vmatprep.subr.mxu0 0.0
        %v1257 = vand.u32 %v275, 4294901760
        %1258 = vmatpush1.msra.mxu0 %v1257
        %1259 = vmatprep.subr.mxu0 0.0
        %v1260 = vand.u32 %v278, 4294901760
        %1261 = vmatpush1.msra.mxu0 %v1260
        %1262 = vmatprep.subr.mxu0 0.0
        %v1263 = vand.u32 %v281, 4294901760
        %1264 = vmatpush1.msra.mxu0 %v1263
        %1265 = vmatprep.subr.mxu0 0.0
        %1266 = vmatpush1.msra.mxu0 0.0
        %1267 = vmatprep.subr.mxu0 0.0
        %1268 = vmatpush1.msra.mxu0 0.0
        %1269 = vmatprep.subr.mxu0 0.0
        %1270 = vmatpush1.msra.mxu0 0.0
        %1271 = vmatprep.subr.mxu0 0.0
        %1272 = vmatpush1.msra.mxu0 0.0
        %1273 = vmatprep.subr.mxu0 0.0
        %1274 = vmatpush1.msra.mxu0 0.0
        %1275 = vmatprep.subr.mxu0 0.0
        %1276 = vmatpush1.msra.mxu0 0.0
        %1277 = vmatprep.subr.mxu0 0.0
        %1278 = vmatpush1.msra.mxu0 0.0
        %1279 = vmatprep.subr.mxu0 0.0
        %1280 = vmatpush1.msra.mxu0 0.0
        %1281 = vmatprep.subr.mxu0 0.0
        %1282 = vmatpush1.msra.mxu0 0.0
        %1283 = vmatprep.subr.mxu0 0.0
        %1284 = vmatpush1.msra.mxu0 0.0
        %1285 = vmatprep.subr.mxu0 0.0
        %1286 = vmatpush1.msra.mxu0 0.0
        %1287 = vmatprep.subr.mxu0 0.0
        %1288 = vmatpush1.msra.mxu0 0.0
        %1289 = vmatprep.subr.mxu0 0.0
        %1290 = vmatpush1.msra.mxu0 0.0
        %1291 = vmatprep.subr.mxu0 0.0
        %1292 = vmatpush1.msra.mxu0 0.0
        %1293 = vmatprep.subr.mxu0 0.0
        %1294 = vmatpush1.msra.mxu0 0.0
        %1295 = vmatprep.subr.mxu0 0.0
        %1296 = vmatpush1.msra.mxu0 0.0
        %1297 = vmatprep.subr.mxu0 0.0
        %1298 = vmatpush1.msra.mxu0 0.0
        %1299 = vmatprep.subr.mxu0 0.0
        %1300 = vmatpush1.msra.mxu0 0.0
        %1301 = vmatprep.subr.mxu0 0.0
        %1302 = vmatpush1.msra.mxu0 0.0
        %1303 = vmatprep.subr.mxu0 0.0
        %1304 = vmatpush1.msra.mxu0 0.0
        %1305 = vmatprep.subr.mxu0 0.0
        %1306 = vmatpush1.msra.mxu0 0.0
        %1307 = vmatprep.subr.mxu0 0.0
        %1308 = vmatpush1.msra.mxu0 0.0
        %1309 = vmatprep.subr.mxu0 0.0
        %1310 = vmatpush1.msra.mxu0 0.0
        %1311 = vmatprep.subr.mxu0 0.0
        %1312 = vmatpush1.msra.mxu0 0.0
        %1313 = vmatprep.mubr.f32.mxu0 0.0
        %v1314 = vand.u32 %v310, 4294901760
        %v1315 = vsub.f32 %v310, %v1314
        %v1316 = vand.u32 %v1315, 4294901760
        %1317 = vmatmul.mubr.f32.gmra.mrb[0].mxu0 %v1316
        %v1318 = vpop.f32.mrb[0].mxu0
        %v1319 = vadd.f32 %v1238, %v1318
        %v1320 = vpop.f32.mrb[0].mxu0
        %1321 = vdwg.mxu0
        %1322 = vmatprep.subr.mxu0 0.0
        %v1323 = vand.u32 %v260, 4294901760
        %v1324 = vsub.f32 %v260, %v1323
        %v1325 = vand.u32 %v1324, 4294901760
        %1326 = vmatpush1.msra.mxu0 %v1325
        %1327 = vmatprep.subr.mxu0 0.0
        %v1328 = vand.u32 %v263, 4294901760
        %v1329 = vsub.f32 %v263, %v1328
        %v1330 = vand.u32 %v1329, 4294901760
        %1331 = vmatpush1.msra.mxu0 %v1330
        %1332 = vmatprep.subr.mxu0 0.0
        %v1333 = vand.u32 %v266, 4294901760
        %v1334 = vsub.f32 %v266, %v1333
        %v1335 = vand.u32 %v1334, 4294901760
        %1336 = vmatpush1.msra.mxu0 %v1335
        %1337 = vmatprep.subr.mxu0 0.0
        %v1338 = vand.u32 %v269, 4294901760
        %v1339 = vsub.f32 %v269, %v1338
        %v1340 = vand.u32 %v1339, 4294901760
        %1341 = vmatpush1.msra.mxu0 %v1340
        %1342 = vmatprep.subr.mxu0 0.0
        %v1343 = vand.u32 %v272, 4294901760
        %v1344 = vsub.f32 %v272, %v1343
        %v1345 = vand.u32 %v1344, 4294901760
        %1346 = vmatpush1.msra.mxu0 %v1345
        %1347 = vmatprep.subr.mxu0 0.0
        %v1348 = vand.u32 %v275, 4294901760
        %v1349 = vsub.f32 %v275, %v1348
        %v1350 = vand.u32 %v1349, 4294901760
        %1351 = vmatpush1.msra.mxu0 %v1350
        %1352 = vmatprep.subr.mxu0 0.0
        %v1353 = vand.u32 %v278, 4294901760
        %v1354 = vsub.f32 %v278, %v1353
        %v1355 = vand.u32 %v1354, 4294901760
        %1356 = vmatpush1.msra.mxu0 %v1355
        %1357 = vmatprep.subr.mxu0 0.0
        %v1358 = vand.u32 %v281, 4294901760
        %v1359 = vsub.f32 %v281, %v1358
        %v1360 = vand.u32 %v1359, 4294901760
        %1361 = vmatpush1.msra.mxu0 %v1360
        %1362 = vmatprep.subr.mxu0 0.0
        %1363 = vmatpush1.msra.mxu0 0.0
        %1364 = vmatprep.subr.mxu0 0.0
        %1365 = vmatpush1.msra.mxu0 0.0
        %1366 = vmatprep.subr.mxu0 0.0
        %1367 = vmatpush1.msra.mxu0 0.0
        %1368 = vmatprep.subr.mxu0 0.0
        %1369 = vmatpush1.msra.mxu0 0.0
        %1370 = vmatprep.subr.mxu0 0.0
        %1371 = vmatpush1.msra.mxu0 0.0
        %1372 = vmatprep.subr.mxu0 0.0
        %1373 = vmatpush1.msra.mxu0 0.0
        %1374 = vmatprep.subr.mxu0 0.0
        %1375 = vmatpush1.msra.mxu0 0.0
        %1376 = vmatprep.subr.mxu0 0.0
        %1377 = vmatpush1.msra.mxu0 0.0
        %1378 = vmatprep.subr.mxu0 0.0
        %1379 = vmatpush1.msra.mxu0 0.0
        %1380 = vmatprep.subr.mxu0 0.0
        %1381 = vmatpush1.msra.mxu0 0.0
        %1382 = vmatprep.subr.mxu0 0.0
        %1383 = vmatpush1.msra.mxu0 0.0
        %1384 = vmatprep.subr.mxu0 0.0
        %1385 = vmatpush1.msra.mxu0 0.0
        %1386 = vmatprep.subr.mxu0 0.0
        %1387 = vmatpush1.msra.mxu0 0.0
        %1388 = vmatprep.subr.mxu0 0.0
        %1389 = vmatpush1.msra.mxu0 0.0
        %1390 = vmatprep.subr.mxu0 0.0
        %1391 = vmatpush1.msra.mxu0 0.0
        %1392 = vmatprep.subr.mxu0 0.0
        %1393 = vmatpush1.msra.mxu0 0.0
        %1394 = vmatprep.subr.mxu0 0.0
        %1395 = vmatpush1.msra.mxu0 0.0
        %1396 = vmatprep.subr.mxu0 0.0
        %1397 = vmatpush1.msra.mxu0 0.0
        %1398 = vmatprep.subr.mxu0 0.0
        %1399 = vmatpush1.msra.mxu0 0.0
        %1400 = vmatprep.subr.mxu0 0.0
        %1401 = vmatpush1.msra.mxu0 0.0
        %1402 = vmatprep.subr.mxu0 0.0
        %1403 = vmatpush1.msra.mxu0 0.0
        %1404 = vmatprep.subr.mxu0 0.0
        %1405 = vmatpush1.msra.mxu0 0.0
        %1406 = vmatprep.subr.mxu0 0.0
        %1407 = vmatpush1.msra.mxu0 0.0
        %1408 = vmatprep.subr.mxu0 0.0
        %1409 = vmatpush1.msra.mxu0 0.0
        %1410 = vmatprep.mubr.f32.mxu0 0.0
        %v1411 = vand.u32 %v310, 4294901760
        %1412 = vmatmul.mubr.f32.gmra.mrb[0].mxu0 %v1411
        %v1413 = vpop.f32.mrb[0].mxu0
        %v1414 = vadd.f32 %v1319, %v1413
        %v1415 = vpop.f32.mrb[0].mxu0
        %1416 = vdwg.mxu0
        %1417 = vmatprep.subr.mxu0 0.0
        %v1418 = vand.u32 %v260, 4294901760
        %1419 = vmatpush1.msra.mxu0 %v1418
        %1420 = vmatprep.subr.mxu0 0.0
        %v1421 = vand.u32 %v263, 4294901760
        %1422 = vmatpush1.msra.mxu0 %v1421
        %1423 = vmatprep.subr.mxu0 0.0
        %v1424 = vand.u32 %v266, 4294901760
        %1425 = vmatpush1.msra.mxu0 %v1424
        %1426 = vmatprep.subr.mxu0 0.0
        %v1427 = vand.u32 %v269, 4294901760
        %1428 = vmatpush1.msra.mxu0 %v1427
        %1429 = vmatprep.subr.mxu0 0.0
        %v1430 = vand.u32 %v272, 4294901760
        %1431 = vmatpush1.msra.mxu0 %v1430
        %1432 = vmatprep.subr.mxu0 0.0
        %v1433 = vand.u32 %v275, 4294901760
        %1434 = vmatpush1.msra.mxu0 %v1433
        %1435 = vmatprep.subr.mxu0 0.0
        %v1436 = vand.u32 %v278, 4294901760
        %1437 = vmatpush1.msra.mxu0 %v1436
        %1438 = vmatprep.subr.mxu0 0.0
        %v1439 = vand.u32 %v281, 4294901760
        %1440 = vmatpush1.msra.mxu0 %v1439
        %1441 = vmatprep.subr.mxu0 0.0
        %1442 = vmatpush1.msra.mxu0 0.0
        %1443 = vmatprep.subr.mxu0 0.0
        %1444 = vmatpush1.msra.mxu0 0.0
        %1445 = vmatprep.subr.mxu0 0.0
        %1446 = vmatpush1.msra.mxu0 0.0
        %1447 = vmatprep.subr.mxu0 0.0
        %1448 = vmatpush1.msra.mxu0 0.0
        %1449 = vmatprep.subr.mxu0 0.0
        %1450 = vmatpush1.msra.mxu0 0.0
        %1451 = vmatprep.subr.mxu0 0.0
        %1452 = vmatpush1.msra.mxu0 0.0
        %1453 = vmatprep.subr.mxu0 0.0
        %1454 = vmatpush1.msra.mxu0 0.0
        %1455 = vmatprep.subr.mxu0 0.0
        %1456 = vmatpush1.msra.mxu0 0.0
        %1457 = vmatprep.subr.mxu0 0.0
        %1458 = vmatpush1.msra.mxu0 0.0
        %1459 = vmatprep.subr.mxu0 0.0
        %1460 = vmatpush1.msra.mxu0 0.0
        %1461 = vmatprep.subr.mxu0 0.0
        %1462 = vmatpush1.msra.mxu0 0.0
        %1463 = vmatprep.subr.mxu0 0.0
        %1464 = vmatpush1.msra.mxu0 0.0
        %1465 = vmatprep.subr.mxu0 0.0
        %1466 = vmatpush1.msra.mxu0 0.0
        %1467 = vmatprep.subr.mxu0 0.0
        %1468 = vmatpush1.msra.mxu0 0.0
        %1469 = vmatprep.subr.mxu0 0.0
        %1470 = vmatpush1.msra.mxu0 0.0
        %1471 = vmatprep.subr.mxu0 0.0
        %1472 = vmatpush1.msra.mxu0 0.0
        %1473 = vmatprep.subr.mxu0 0.0
        %1474 = vmatpush1.msra.mxu0 0.0
        %1475 = vmatprep.subr.mxu0 0.0
        %1476 = vmatpush1.msra.mxu0 0.0
        %1477 = vmatprep.subr.mxu0 0.0
        %1478 = vmatpush1.msra.mxu0 0.0
        %1479 = vmatprep.subr.mxu0 0.0
        %1480 = vmatpush1.msra.mxu0 0.0
        %1481 = vmatprep.subr.mxu0 0.0
        %1482 = vmatpush1.msra.mxu0 0.0
        %1483 = vmatprep.subr.mxu0 0.0
        %1484 = vmatpush1.msra.mxu0 0.0
        %1485 = vmatprep.subr.mxu0 0.0
        %1486 = vmatpush1.msra.mxu0 0.0
        %1487 = vmatprep.subr.mxu0 0.0
        %1488 = vmatpush1.msra.mxu0 0.0
        %1489 = vmatprep.mubr.f32.mxu0 0.0
        %v1490 = vand.u32 %v310, 4294901760
        %1491 = vmatmul.mubr.f32.gmra.mrb[0].mxu0 %v1490
        %v1492 = vpop.f32.mrb[0].mxu0
        %v1493 = vadd.f32 %v1414, %v1492
        %v1494 = vpop.f32.mrb[0].mxu0
        %1495 = vdwg.mxu0
        %v1496 = vand.u32 %v283, 4294901760
        %1497 = vmatprep.subr.mxu0 %v1496
        %v1498 = vand.u32 %v282, 4294901760
        %1499 = vmatpush1.msra.mxu0 %v1498
        %v1500 = vand.u32 %v286, 4294901760
        %1501 = vmatprep.subr.mxu0 %v1500
        %v1502 = vand.u32 %v285, 4294901760
        %1503 = vmatpush1.msra.mxu0 %v1502
        %v1504 = vand.u32 %v289, 4294901760
        %1505 = vmatprep.subr.mxu0 %v1504
        %v1506 = vand.u32 %v288, 4294901760
        %1507 = vmatpush1.msra.mxu0 %v1506
        %v1508 = vand.u32 %v292, 4294901760
        %1509 = vmatprep.subr.mxu0 %v1508
        %v1510 = vand.u32 %v291, 4294901760
        %1511 = vmatpush1.msra.mxu0 %v1510
        %v1512 = vand.u32 %v295, 4294901760
        %1513 = vmatprep.subr.mxu0 %v1512
        %v1514 = vand.u32 %v294, 4294901760
        %1515 = vmatpush1.msra.mxu0 %v1514
        %v1516 = vand.u32 %v298, 4294901760
        %1517 = vmatprep.subr.mxu0 %v1516
        %v1518 = vand.u32 %v297, 4294901760
        %1519 = vmatpush1.msra.mxu0 %v1518
        %v1520 = vand.u32 %v301, 4294901760
        %1521 = vmatprep.subr.mxu0 %v1520
        %v1522 = vand.u32 %v300, 4294901760
        %1523 = vmatpush1.msra.mxu0 %v1522
        %v1524 = vand.u32 %v304, 4294901760
        %1525 = vmatprep.subr.mxu0 %v1524
        %v1526 = vand.u32 %v303, 4294901760
        %1527 = vmatpush1.msra.mxu0 %v1526
        %1528 = vmatprep.subr.mxu0 0.0
        %1529 = vmatpush1.msra.mxu0 0.0
        %1530 = vmatprep.subr.mxu0 0.0
        %1531 = vmatpush1.msra.mxu0 0.0
        %1532 = vmatprep.subr.mxu0 0.0
        %1533 = vmatpush1.msra.mxu0 0.0
        %1534 = vmatprep.subr.mxu0 0.0
        %1535 = vmatpush1.msra.mxu0 0.0
        %1536 = vmatprep.subr.mxu0 0.0
        %1537 = vmatpush1.msra.mxu0 0.0
        %1538 = vmatprep.subr.mxu0 0.0
        %1539 = vmatpush1.msra.mxu0 0.0
        %1540 = vmatprep.subr.mxu0 0.0
        %1541 = vmatpush1.msra.mxu0 0.0
        %1542 = vmatprep.subr.mxu0 0.0
        %1543 = vmatpush1.msra.mxu0 0.0
        %1544 = vmatprep.subr.mxu0 0.0
        %1545 = vmatpush1.msra.mxu0 0.0
        %1546 = vmatprep.subr.mxu0 0.0
        %1547 = vmatpush1.msra.mxu0 0.0
        %1548 = vmatprep.subr.mxu0 0.0
        %1549 = vmatpush1.msra.mxu0 0.0
        %1550 = vmatprep.subr.mxu0 0.0
        %1551 = vmatpush1.msra.mxu0 0.0
        %1552 = vmatprep.subr.mxu0 0.0
        %1553 = vmatpush1.msra.mxu0 0.0
        %1554 = vmatprep.subr.mxu0 0.0
        %1555 = vmatpush1.msra.mxu0 0.0
        %1556 = vmatprep.subr.mxu0 0.0
        %1557 = vmatpush1.msra.mxu0 0.0
        %1558 = vmatprep.subr.mxu0 0.0
        %1559 = vmatpush1.msra.mxu0 0.0
        %1560 = vmatprep.subr.mxu0 0.0
        %1561 = vmatpush1.msra.mxu0 0.0
        %1562 = vmatprep.subr.mxu0 0.0
        %1563 = vmatpush1.msra.mxu0 0.0
        %1564 = vmatprep.subr.mxu0 0.0
        %1565 = vmatpush1.msra.mxu0 0.0
        %1566 = vmatprep.subr.mxu0 0.0
        %1567 = vmatpush1.msra.mxu0 0.0
        %1568 = vmatprep.subr.mxu0 0.0
        %1569 = vmatpush1.msra.mxu0 0.0
        %1570 = vmatprep.subr.mxu0 0.0
        %1571 = vmatpush1.msra.mxu0 0.0
        %1572 = vmatprep.subr.mxu0 0.0
        %1573 = vmatpush1.msra.mxu0 0.0
        %1574 = vmatprep.subr.mxu0 0.0
        %1575 = vmatpush1.msra.mxu0 0.0
        %1576 = vmatprep.mubr.f32.mxu0 0.0
        %v1577 = vand.u32 %v310, 4294901760
        %v1578 = vsub.f32 %v310, %v1577
        %v1579 = vand.u32 %v1578, 4294901760
        %v1580 = vsub.f32 %v1578, %v1579
        %v1581 = vand.u32 %v1580, 4294901760
        %1582 = vmatmul.mubr.f32.gmra.mrb[0].mxu0 %v1581
        %v1583 = vpop.f32.mrb[0].mxu0
        %v1584 = vadd.f32 0.0, %v1583
        %v1585 = vpop.f32.mrb[0].mxu0
        %v1586 = vadd.f32 0.0, %v1585
        %1587 = vdwg.mxu0
        %v1588 = vand.u32 %v283, 4294901760
        %v1589 = vsub.f32 %v283, %v1588
        %v1590 = vand.u32 %v1589, 4294901760
        %v1591 = vsub.f32 %v1589, %v1590
        %v1592 = vand.u32 %v1591, 4294901760
        %1593 = vmatprep.subr.mxu0 %v1592
        %v1594 = vand.u32 %v282, 4294901760
        %v1595 = vsub.f32 %v282, %v1594
        %v1596 = vand.u32 %v1595, 4294901760
        %v1597 = vsub.f32 %v1595, %v1596
        %v1598 = vand.u32 %v1597, 4294901760
        %1599 = vmatpush1.msra.mxu0 %v1598
        %v1600 = vand.u32 %v286, 4294901760
        %v1601 = vsub.f32 %v286, %v1600
        %v1602 = vand.u32 %v1601, 4294901760
        %v1603 = vsub.f32 %v1601, %v1602
        %v1604 = vand.u32 %v1603, 4294901760
        %1605 = vmatprep.subr.mxu0 %v1604
        %v1606 = vand.u32 %v285, 4294901760
        %v1607 = vsub.f32 %v285, %v1606
        %v1608 = vand.u32 %v1607, 4294901760
        %v1609 = vsub.f32 %v1607, %v1608
        %v1610 = vand.u32 %v1609, 4294901760
        %1611 = vmatpush1.msra.mxu0 %v1610
        %v1612 = vand.u32 %v289, 4294901760
        %v1613 = vsub.f32 %v289, %v1612
        %v1614 = vand.u32 %v1613, 4294901760
        %v1615 = vsub.f32 %v1613, %v1614
        %v1616 = vand.u32 %v1615, 4294901760
        %1617 = vmatprep.subr.mxu0 %v1616
        %v1618 = vand.u32 %v288, 4294901760
        %v1619 = vsub.f32 %v288, %v1618
        %v1620 = vand.u32 %v1619, 4294901760
        %v1621 = vsub.f32 %v1619, %v1620
        %v1622 = vand.u32 %v1621, 4294901760
        %1623 = vmatpush1.msra.mxu0 %v1622
        %v1624 = vand.u32 %v292, 4294901760
        %v1625 = vsub.f32 %v292, %v1624
        %v1626 = vand.u32 %v1625, 4294901760
        %v1627 = vsub.f32 %v1625, %v1626
        %v1628 = vand.u32 %v1627, 4294901760
        %1629 = vmatprep.subr.mxu0 %v1628
        %v1630 = vand.u32 %v291, 4294901760
        %v1631 = vsub.f32 %v291, %v1630
        %v1632 = vand.u32 %v1631, 4294901760
        %v1633 = vsub.f32 %v1631, %v1632
        %v1634 = vand.u32 %v1633, 4294901760
        %1635 = vmatpush1.msra.mxu0 %v1634
        %v1636 = vand.u32 %v295, 4294901760
        %v1637 = vsub.f32 %v295, %v1636
        %v1638 = vand.u32 %v1637, 4294901760
        %v1639 = vsub.f32 %v1637, %v1638
        %v1640 = vand.u32 %v1639, 4294901760
        %1641 = vmatprep.subr.mxu0 %v1640
        %v1642 = vand.u32 %v294, 4294901760
        %v1643 = vsub.f32 %v294, %v1642
        %v1644 = vand.u32 %v1643, 4294901760
        %v1645 = vsub.f32 %v1643, %v1644
        %v1646 = vand.u32 %v1645, 4294901760
        %1647 = vmatpush1.msra.mxu0 %v1646
        %v1648 = vand.u32 %v298, 4294901760
        %v1649 = vsub.f32 %v298, %v1648
        %v1650 = vand.u32 %v1649, 4294901760
        %v1651 = vsub.f32 %v1649, %v1650
        %v1652 = vand.u32 %v1651, 4294901760
        %1653 = vmatprep.subr.mxu0 %v1652
        %v1654 = vand.u32 %v297, 4294901760
        %v1655 = vsub.f32 %v297, %v1654
        %v1656 = vand.u32 %v1655, 4294901760
        %v1657 = vsub.f32 %v1655, %v1656
        %v1658 = vand.u32 %v1657, 4294901760
        %1659 = vmatpush1.msra.mxu0 %v1658
        %v1660 = vand.u32 %v301, 4294901760
        %v1661 = vsub.f32 %v301, %v1660
        %v1662 = vand.u32 %v1661, 4294901760
        %v1663 = vsub.f32 %v1661, %v1662
        %v1664 = vand.u32 %v1663, 4294901760
        %1665 = vmatprep.subr.mxu0 %v1664
        %v1666 = vand.u32 %v300, 4294901760
        %v1667 = vsub.f32 %v300, %v1666
        %v1668 = vand.u32 %v1667, 4294901760
        %v1669 = vsub.f32 %v1667, %v1668
        %v1670 = vand.u32 %v1669, 4294901760
        %1671 = vmatpush1.msra.mxu0 %v1670
        %v1672 = vand.u32 %v304, 4294901760
        %v1673 = vsub.f32 %v304, %v1672
        %v1674 = vand.u32 %v1673, 4294901760
        %v1675 = vsub.f32 %v1673, %v1674
        %v1676 = vand.u32 %v1675, 4294901760
        %1677 = vmatprep.subr.mxu0 %v1676
        %v1678 = vand.u32 %v303, 4294901760
        %v1679 = vsub.f32 %v303, %v1678
        %v1680 = vand.u32 %v1679, 4294901760
        %v1681 = vsub.f32 %v1679, %v1680
        %v1682 = vand.u32 %v1681, 4294901760
        %1683 = vmatpush1.msra.mxu0 %v1682
        %1684 = vmatprep.subr.mxu0 0.0
        %1685 = vmatpush1.msra.mxu0 0.0
        %1686 = vmatprep.subr.mxu0 0.0
        %1687 = vmatpush1.msra.mxu0 0.0
        %1688 = vmatprep.subr.mxu0 0.0
        %1689 = vmatpush1.msra.mxu0 0.0
        %1690 = vmatprep.subr.mxu0 0.0
        %1691 = vmatpush1.msra.mxu0 0.0
        %1692 = vmatprep.subr.mxu0 0.0
        %1693 = vmatpush1.msra.mxu0 0.0
        %1694 = vmatprep.subr.mxu0 0.0
        %1695 = vmatpush1.msra.mxu0 0.0
        %1696 = vmatprep.subr.mxu0 0.0
        %1697 = vmatpush1.msra.mxu0 0.0
        %1698 = vmatprep.subr.mxu0 0.0
        %1699 = vmatpush1.msra.mxu0 0.0
        %1700 = vmatprep.subr.mxu0 0.0
        %1701 = vmatpush1.msra.mxu0 0.0
        %1702 = vmatprep.subr.mxu0 0.0
        %1703 = vmatpush1.msra.mxu0 0.0
        %1704 = vmatprep.subr.mxu0 0.0
        %1705 = vmatpush1.msra.mxu0 0.0
        %1706 = vmatprep.subr.mxu0 0.0
        %1707 = vmatpush1.msra.mxu0 0.0
        %1708 = vmatprep.subr.mxu0 0.0
        %1709 = vmatpush1.msra.mxu0 0.0
        %1710 = vmatprep.subr.mxu0 0.0
        %1711 = vmatpush1.msra.mxu0 0.0
        %1712 = vmatprep.subr.mxu0 0.0
        %1713 = vmatpush1.msra.mxu0 0.0
        %1714 = vmatprep.subr.mxu0 0.0
        %1715 = vmatpush1.msra.mxu0 0.0
        %1716 = vmatprep.subr.mxu0 0.0
        %1717 = vmatpush1.msra.mxu0 0.0
        %1718 = vmatprep.subr.mxu0 0.0
        %1719 = vmatpush1.msra.mxu0 0.0
        %1720 = vmatprep.subr.mxu0 0.0
        %1721 = vmatpush1.msra.mxu0 0.0
        %1722 = vmatprep.subr.mxu0 0.0
        %1723 = vmatpush1.msra.mxu0 0.0
        %1724 = vmatprep.subr.mxu0 0.0
        %1725 = vmatpush1.msra.mxu0 0.0
        %1726 = vmatprep.subr.mxu0 0.0
        %1727 = vmatpush1.msra.mxu0 0.0
        %1728 = vmatprep.subr.mxu0 0.0
        %1729 = vmatpush1.msra.mxu0 0.0
        %1730 = vmatprep.subr.mxu0 0.0
        %1731 = vmatpush1.msra.mxu0 0.0
        %1732 = vmatprep.mubr.f32.mxu0 0.0
        %v1733 = vand.u32 %v310, 4294901760
        %1734 = vmatmul.mubr.f32.gmra.mrb[0].mxu0 %v1733
        %v1735 = vpop.f32.mrb[0].mxu0
        %v1736 = vadd.f32 %v1584, %v1735
        %v1737 = vpop.f32.mrb[0].mxu0
        %v1738 = vadd.f32 %v1586, %v1737
        %1739 = vdwg.mxu0
        %v1740 = vand.u32 %v283, 4294901760
        %v1741 = vsub.f32 %v283, %v1740
        %1742 = vmatprep.subr.mxu0 %v1741
        %v1743 = vand.u32 %v282, 4294901760
        %v1744 = vsub.f32 %v282, %v1743
        %1745 = vmatpush1.msra.mxu0 %v1744
        %v1746 = vand.u32 %v286, 4294901760
        %v1747 = vsub.f32 %v286, %v1746
        %1748 = vmatprep.subr.mxu0 %v1747
        %v1749 = vand.u32 %v285, 4294901760
        %v1750 = vsub.f32 %v285, %v1749
        %1751 = vmatpush1.msra.mxu0 %v1750
        %v1752 = vand.u32 %v289, 4294901760
        %v1753 = vsub.f32 %v289, %v1752
        %1754 = vmatprep.subr.mxu0 %v1753
        %v1755 = vand.u32 %v288, 4294901760
        %v1756 = vsub.f32 %v288, %v1755
        %1757 = vmatpush1.msra.mxu0 %v1756
        %v1758 = vand.u32 %v292, 4294901760
        %v1759 = vsub.f32 %v292, %v1758
        %1760 = vmatprep.subr.mxu0 %v1759
        %v1761 = vand.u32 %v291, 4294901760
        %v1762 = vsub.f32 %v291, %v1761
        %1763 = vmatpush1.msra.mxu0 %v1762
        %v1764 = vand.u32 %v295, 4294901760
        %v1765 = vsub.f32 %v295, %v1764
        %1766 = vmatprep.subr.mxu0 %v1765
        %v1767 = vand.u32 %v294, 4294901760
        %v1768 = vsub.f32 %v294, %v1767
        %1769 = vmatpush1.msra.mxu0 %v1768
        %v1770 = vand.u32 %v298, 4294901760
        %v1771 = vsub.f32 %v298, %v1770
        %1772 = vmatprep.subr.mxu0 %v1771
        %v1773 = vand.u32 %v297, 4294901760
        %v1774 = vsub.f32 %v297, %v1773
        %1775 = vmatpush1.msra.mxu0 %v1774
        %v1776 = vand.u32 %v301, 4294901760
        %v1777 = vsub.f32 %v301, %v1776
        %1778 = vmatprep.subr.mxu0 %v1777
        %v1779 = vand.u32 %v300, 4294901760
        %v1780 = vsub.f32 %v300, %v1779
        %1781 = vmatpush1.msra.mxu0 %v1780
        %v1782 = vand.u32 %v304, 4294901760
        %v1783 = vsub.f32 %v304, %v1782
        %1784 = vmatprep.subr.mxu0 %v1783
        %v1785 = vand.u32 %v303, 4294901760
        %v1786 = vsub.f32 %v303, %v1785
        %1787 = vmatpush1.msra.mxu0 %v1786
        %1788 = vmatprep.subr.mxu0 0.0
        %1789 = vmatpush1.msra.mxu0 0.0
        %1790 = vmatprep.subr.mxu0 0.0
        %1791 = vmatpush1.msra.mxu0 0.0
        %1792 = vmatprep.subr.mxu0 0.0
        %1793 = vmatpush1.msra.mxu0 0.0
        %1794 = vmatprep.subr.mxu0 0.0
        %1795 = vmatpush1.msra.mxu0 0.0
        %1796 = vmatprep.subr.mxu0 0.0
        %1797 = vmatpush1.msra.mxu0 0.0
        %1798 = vmatprep.subr.mxu0 0.0
        %1799 = vmatpush1.msra.mxu0 0.0
        %1800 = vmatprep.subr.mxu0 0.0
        %1801 = vmatpush1.msra.mxu0 0.0
        %1802 = vmatprep.subr.mxu0 0.0
        %1803 = vmatpush1.msra.mxu0 0.0
        %1804 = vmatprep.subr.mxu0 0.0
        %1805 = vmatpush1.msra.mxu0 0.0
        %1806 = vmatprep.subr.mxu0 0.0
        %1807 = vmatpush1.msra.mxu0 0.0
        %1808 = vmatprep.subr.mxu0 0.0
        %1809 = vmatpush1.msra.mxu0 0.0
        %1810 = vmatprep.subr.mxu0 0.0
        %1811 = vmatpush1.msra.mxu0 0.0
        %1812 = vmatprep.subr.mxu0 0.0
        %1813 = vmatpush1.msra.mxu0 0.0
        %1814 = vmatprep.subr.mxu0 0.0
        %1815 = vmatpush1.msra.mxu0 0.0
        %1816 = vmatprep.subr.mxu0 0.0
        %1817 = vmatpush1.msra.mxu0 0.0
        %1818 = vmatprep.subr.mxu0 0.0
        %1819 = vmatpush1.msra.mxu0 0.0
        %1820 = vmatprep.subr.mxu0 0.0
        %1821 = vmatpush1.msra.mxu0 0.0
        %1822 = vmatprep.subr.mxu0 0.0
        %1823 = vmatpush1.msra.mxu0 0.0
        %1824 = vmatprep.subr.mxu0 0.0
        %1825 = vmatpush1.msra.mxu0 0.0
        %1826 = vmatprep.subr.mxu0 0.0
        %1827 = vmatpush1.msra.mxu0 0.0
        %1828 = vmatprep.subr.mxu0 0.0
        %1829 = vmatpush1.msra.mxu0 0.0
        %1830 = vmatprep.subr.mxu0 0.0
        %1831 = vmatpush1.msra.mxu0 0.0
        %1832 = vmatprep.subr.mxu0 0.0
        %1833 = vmatpush1.msra.mxu0 0.0
        %1834 = vmatprep.subr.mxu0 0.0
        %1835 = vmatpush1.msra.mxu0 0.0
        %1836 = vmatprep.mubr.f32.mxu0 0.0
        %v1837 = vand.u32 %v310, 4294901760
        %v1838 = vsub.f32 %v310, %v1837
        %1839 = vmatmul.mubr.f32.gmra.mrb[0].mxu0 %v1838
        %v1840 = vpop.f32.mrb[0].mxu0
        %v1841 = vadd.f32 %v1736, %v1840
        %v1842 = vpop.f32.mrb[0].mxu0
        %v1843 = vadd.f32 %v1738, %v1842
        %1844 = vdwg.mxu0
        %v1845 = vand.u32 %v283, 4294901760
        %1846 = vmatprep.subr.mxu0 %v1845
        %v1847 = vand.u32 %v282, 4294901760
        %1848 = vmatpush1.msra.mxu0 %v1847
        %v1849 = vand.u32 %v286, 4294901760
        %1850 = vmatprep.subr.mxu0 %v1849
        %v1851 = vand.u32 %v285, 4294901760
        %1852 = vmatpush1.msra.mxu0 %v1851
        %v1853 = vand.u32 %v289, 4294901760
        %1854 = vmatprep.subr.mxu0 %v1853
        %v1855 = vand.u32 %v288, 4294901760
        %1856 = vmatpush1.msra.mxu0 %v1855
        %v1857 = vand.u32 %v292, 4294901760
        %1858 = vmatprep.subr.mxu0 %v1857
        %v1859 = vand.u32 %v291, 4294901760
        %1860 = vmatpush1.msra.mxu0 %v1859
        %v1861 = vand.u32 %v295, 4294901760
        %1862 = vmatprep.subr.mxu0 %v1861
        %v1863 = vand.u32 %v294, 4294901760
        %1864 = vmatpush1.msra.mxu0 %v1863
        %v1865 = vand.u32 %v298, 4294901760
        %1866 = vmatprep.subr.mxu0 %v1865
        %v1867 = vand.u32 %v297, 4294901760
        %1868 = vmatpush1.msra.mxu0 %v1867
        %v1869 = vand.u32 %v301, 4294901760
        %1870 = vmatprep.subr.mxu0 %v1869
        %v1871 = vand.u32 %v300, 4294901760
        %1872 = vmatpush1.msra.mxu0 %v1871
        %v1873 = vand.u32 %v304, 4294901760
        %1874 = vmatprep.subr.mxu0 %v1873
        %v1875 = vand.u32 %v303, 4294901760
        %1876 = vmatpush1.msra.mxu0 %v1875
        %1877 = vmatprep.subr.mxu0 0.0
        %1878 = vmatpush1.msra.mxu0 0.0
        %1879 = vmatprep.subr.mxu0 0.0
        %1880 = vmatpush1.msra.mxu0 0.0
        %1881 = vmatprep.subr.mxu0 0.0
        %1882 = vmatpush1.msra.mxu0 0.0
        %1883 = vmatprep.subr.mxu0 0.0
        %1884 = vmatpush1.msra.mxu0 0.0
        %1885 = vmatprep.subr.mxu0 0.0
        %1886 = vmatpush1.msra.mxu0 0.0
        %1887 = vmatprep.subr.mxu0 0.0
        %1888 = vmatpush1.msra.mxu0 0.0
        %1889 = vmatprep.subr.mxu0 0.0
        %1890 = vmatpush1.msra.mxu0 0.0
        %1891 = vmatprep.subr.mxu0 0.0
        %1892 = vmatpush1.msra.mxu0 0.0
        %1893 = vmatprep.subr.mxu0 0.0
        %1894 = vmatpush1.msra.mxu0 0.0
        %1895 = vmatprep.subr.mxu0 0.0
        %1896 = vmatpush1.msra.mxu0 0.0
        %1897 = vmatprep.subr.mxu0 0.0
        %1898 = vmatpush1.msra.mxu0 0.0
        %1899 = vmatprep.subr.mxu0 0.0
        %1900 = vmatpush1.msra.mxu0 0.0
        %1901 = vmatprep.subr.mxu0 0.0
        %1902 = vmatpush1.msra.mxu0 0.0
        %1903 = vmatprep.subr.mxu0 0.0
        %1904 = vmatpush1.msra.mxu0 0.0
        %1905 = vmatprep.subr.mxu0 0.0
        %1906 = vmatpush1.msra.mxu0 0.0
        %1907 = vmatprep.subr.mxu0 0.0
        %1908 = vmatpush1.msra.mxu0 0.0
        %1909 = vmatprep.subr.mxu0 0.0
        %1910 = vmatpush1.msra.mxu0 0.0
        %1911 = vmatprep.subr.mxu0 0.0
        %1912 = vmatpush1.msra.mxu0 0.0
        %1913 = vmatprep.subr.mxu0 0.0
        %1914 = vmatpush1.msra.mxu0 0.0
        %1915 = vmatprep.subr.mxu0 0.0
        %1916 = vmatpush1.msra.mxu0 0.0
        %1917 = vmatprep.subr.mxu0 0.0
        %1918 = vmatpush1.msra.mxu0 0.0
        %1919 = vmatprep.subr.mxu0 0.0
        %1920 = vmatpush1.msra.mxu0 0.0
        %1921 = vmatprep.subr.mxu0 0.0
        %1922 = vmatpush1.msra.mxu0 0.0
        %1923 = vmatprep.subr.mxu0 0.0
        %1924 = vmatpush1.msra.mxu0 0.0
        %1925 = vmatprep.mubr.f32.mxu0 0.0
        %v1926 = vand.u32 %v310, 4294901760
        %v1927 = vsub.f32 %v310, %v1926
        %v1928 = vand.u32 %v1927, 4294901760
        %1929 = vmatmul.mubr.f32.gmra.mrb[0].mxu0 %v1928
        %v1930 = vpop.f32.mrb[0].mxu0
        %v1931 = vadd.f32 %v1841, %v1930
        %v1932 = vpop.f32.mrb[0].mxu0
        %v1933 = vadd.f32 %v1843, %v1932
        %1934 = vdwg.mxu0
        %v1935 = vand.u32 %v283, 4294901760
        %v1936 = vsub.f32 %v283, %v1935
        %v1937 = vand.u32 %v1936, 4294901760
        %1938 = vmatprep.subr.mxu0 %v1937
        %v1939 = vand.u32 %v282, 4294901760
        %v1940 = vsub.f32 %v282, %v1939
        %v1941 = vand.u32 %v1940, 4294901760
        %1942 = vmatpush1.msra.mxu0 %v1941
        %v1943 = vand.u32 %v286, 4294901760
        %v1944 = vsub.f32 %v286, %v1943
        %v1945 = vand.u32 %v1944, 4294901760
        %1946 = vmatprep.subr.mxu0 %v1945
        %v1947 = vand.u32 %v285, 4294901760
        %v1948 = vsub.f32 %v285, %v1947
        %v1949 = vand.u32 %v1948, 4294901760
        %1950 = vmatpush1.msra.mxu0 %v1949
        %v1951 = vand.u32 %v289, 4294901760
        %v1952 = vsub.f32 %v289, %v1951
        %v1953 = vand.u32 %v1952, 4294901760
        %1954 = vmatprep.subr.mxu0 %v1953
        %v1955 = vand.u32 %v288, 4294901760
        %v1956 = vsub.f32 %v288, %v1955
        %v1957 = vand.u32 %v1956, 4294901760
        %1958 = vmatpush1.msra.mxu0 %v1957
        %v1959 = vand.u32 %v292, 4294901760
        %v1960 = vsub.f32 %v292, %v1959
        %v1961 = vand.u32 %v1960, 4294901760
        %1962 = vmatprep.subr.mxu0 %v1961
        %v1963 = vand.u32 %v291, 4294901760
        %v1964 = vsub.f32 %v291, %v1963
        %v1965 = vand.u32 %v1964, 4294901760
        %1966 = vmatpush1.msra.mxu0 %v1965
        %v1967 = vand.u32 %v295, 4294901760
        %v1968 = vsub.f32 %v295, %v1967
        %v1969 = vand.u32 %v1968, 4294901760
        %1970 = vmatprep.subr.mxu0 %v1969
        %v1971 = vand.u32 %v294, 4294901760
        %v1972 = vsub.f32 %v294, %v1971
        %v1973 = vand.u32 %v1972, 4294901760
        %1974 = vmatpush1.msra.mxu0 %v1973
        %v1975 = vand.u32 %v298, 4294901760
        %v1976 = vsub.f32 %v298, %v1975
        %v1977 = vand.u32 %v1976, 4294901760
        %1978 = vmatprep.subr.mxu0 %v1977
        %v1979 = vand.u32 %v297, 4294901760
        %v1980 = vsub.f32 %v297, %v1979
        %v1981 = vand.u32 %v1980, 4294901760
        %1982 = vmatpush1.msra.mxu0 %v1981
        %v1983 = vand.u32 %v301, 4294901760
        %v1984 = vsub.f32 %v301, %v1983
        %v1985 = vand.u32 %v1984, 4294901760
        %1986 = vmatprep.subr.mxu0 %v1985
        %v1987 = vand.u32 %v300, 4294901760
        %v1988 = vsub.f32 %v300, %v1987
        %v1989 = vand.u32 %v1988, 4294901760
        %1990 = vmatpush1.msra.mxu0 %v1989
        %v1991 = vand.u32 %v304, 4294901760
        %v1992 = vsub.f32 %v304, %v1991
        %v1993 = vand.u32 %v1992, 4294901760
        %1994 = vmatprep.subr.mxu0 %v1993
        %v1995 = vand.u32 %v303, 4294901760
        %v1996 = vsub.f32 %v303, %v1995
        %v1997 = vand.u32 %v1996, 4294901760
        %1998 = vmatpush1.msra.mxu0 %v1997
        %1999 = vmatprep.subr.mxu0 0.0
        %2000 = vmatpush1.msra.mxu0 0.0
        %2001 = vmatprep.subr.mxu0 0.0
        %2002 = vmatpush1.msra.mxu0 0.0
        %2003 = vmatprep.subr.mxu0 0.0
        %2004 = vmatpush1.msra.mxu0 0.0
        %2005 = vmatprep.subr.mxu0 0.0
        %2006 = vmatpush1.msra.mxu0 0.0
        %2007 = vmatprep.subr.mxu0 0.0
        %2008 = vmatpush1.msra.mxu0 0.0
        %2009 = vmatprep.subr.mxu0 0.0
        %2010 = vmatpush1.msra.mxu0 0.0
        %2011 = vmatprep.subr.mxu0 0.0
        %2012 = vmatpush1.msra.mxu0 0.0
        %2013 = vmatprep.subr.mxu0 0.0
        %2014 = vmatpush1.msra.mxu0 0.0
        %2015 = vmatprep.subr.mxu0 0.0
        %2016 = vmatpush1.msra.mxu0 0.0
        %2017 = vmatprep.subr.mxu0 0.0
        %2018 = vmatpush1.msra.mxu0 0.0
        %2019 = vmatprep.subr.mxu0 0.0
        %2020 = vmatpush1.msra.mxu0 0.0
        %2021 = vmatprep.subr.mxu0 0.0
        %2022 = vmatpush1.msra.mxu0 0.0
        %2023 = vmatprep.subr.mxu0 0.0
        %2024 = vmatpush1.msra.mxu0 0.0
        %2025 = vmatprep.subr.mxu0 0.0
        %2026 = vmatpush1.msra.mxu0 0.0
        %2027 = vmatprep.subr.mxu0 0.0
        %2028 = vmatpush1.msra.mxu0 0.0
        %2029 = vmatprep.subr.mxu0 0.0
        %2030 = vmatpush1.msra.mxu0 0.0
        %2031 = vmatprep.subr.mxu0 0.0
        %2032 = vmatpush1.msra.mxu0 0.0
        %2033 = vmatprep.subr.mxu0 0.0
        %2034 = vmatpush1.msra.mxu0 0.0
        %2035 = vmatprep.subr.mxu0 0.0
        %2036 = vmatpush1.msra.mxu0 0.0
        %2037 = vmatprep.subr.mxu0 0.0
        %2038 = vmatpush1.msra.mxu0 0.0
        %2039 = vmatprep.subr.mxu0 0.0
        %2040 = vmatpush1.msra.mxu0 0.0
        %2041 = vmatprep.subr.mxu0 0.0
        %2042 = vmatpush1.msra.mxu0 0.0
        %2043 = vmatprep.subr.mxu0 0.0
        %2044 = vmatpush1.msra.mxu0 0.0
        %2045 = vmatprep.subr.mxu0 0.0
        %2046 = vmatpush1.msra.mxu0 0.0
        %2047 = vmatprep.mubr.f32.mxu0 0.0
        %v2048 = vand.u32 %v310, 4294901760
        %2049 = vmatmul.mubr.f32.gmra.mrb[0].mxu0 %v2048
        %v2050 = vpop.f32.mrb[0].mxu0
        %v2051 = vadd.f32 %v1931, %v2050
        %v2052 = vpop.f32.mrb[0].mxu0
        %v2053 = vadd.f32 %v1933, %v2052
        %2054 = vdwg.mxu0
        %v2055 = vand.u32 %v283, 4294901760
        %2056 = vmatprep.subr.mxu0 %v2055
        %v2057 = vand.u32 %v282, 4294901760
        %2058 = vmatpush1.msra.mxu0 %v2057
        %v2059 = vand.u32 %v286, 4294901760
        %2060 = vmatprep.subr.mxu0 %v2059
        %v2061 = vand.u32 %v285, 4294901760
        %2062 = vmatpush1.msra.mxu0 %v2061
        %v2063 = vand.u32 %v289, 4294901760
        %2064 = vmatprep.subr.mxu0 %v2063
        %v2065 = vand.u32 %v288, 4294901760
        %2066 = vmatpush1.msra.mxu0 %v2065
        %v2067 = vand.u32 %v292, 4294901760
        %2068 = vmatprep.subr.mxu0 %v2067
        %v2069 = vand.u32 %v291, 4294901760
        %2070 = vmatpush1.msra.mxu0 %v2069
        %v2071 = vand.u32 %v295, 4294901760
        %2072 = vmatprep.subr.mxu0 %v2071
        %v2073 = vand.u32 %v294, 4294901760
        %2074 = vmatpush1.msra.mxu0 %v2073
        %v2075 = vand.u32 %v298, 4294901760
        %2076 = vmatprep.subr.mxu0 %v2075
        %v2077 = vand.u32 %v297, 4294901760
        %2078 = vmatpush1.msra.mxu0 %v2077
        %v2079 = vand.u32 %v301, 4294901760
        %2080 = vmatprep.subr.mxu0 %v2079
        %v2081 = vand.u32 %v300, 4294901760
        %2082 = vmatpush1.msra.mxu0 %v2081
        %v2083 = vand.u32 %v304, 4294901760
        %2084 = vmatprep.subr.mxu0 %v2083
        %v2085 = vand.u32 %v303, 4294901760
        %2086 = vmatpush1.msra.mxu0 %v2085
        %2087 = vmatprep.subr.mxu0 0.0
        %2088 = vmatpush1.msra.mxu0 0.0
        %2089 = vmatprep.subr.mxu0 0.0
        %2090 = vmatpush1.msra.mxu0 0.0
        %2091 = vmatprep.subr.mxu0 0.0
        %2092 = vmatpush1.msra.mxu0 0.0
        %2093 = vmatprep.subr.mxu0 0.0
        %2094 = vmatpush1.msra.mxu0 0.0
        %2095 = vmatprep.subr.mxu0 0.0
        %2096 = vmatpush1.msra.mxu0 0.0
        %2097 = vmatprep.subr.mxu0 0.0
        %2098 = vmatpush1.msra.mxu0 0.0
        %2099 = vmatprep.subr.mxu0 0.0
        %2100 = vmatpush1.msra.mxu0 0.0
        %2101 = vmatprep.subr.mxu0 0.0
        %2102 = vmatpush1.msra.mxu0 0.0
        %2103 = vmatprep.subr.mxu0 0.0
        %2104 = vmatpush1.msra.mxu0 0.0
        %2105 = vmatprep.subr.mxu0 0.0
        %2106 = vmatpush1.msra.mxu0 0.0
        %2107 = vmatprep.subr.mxu0 0.0
        %2108 = vmatpush1.msra.mxu0 0.0
        %2109 = vmatprep.subr.mxu0 0.0
        %2110 = vmatpush1.msra.mxu0 0.0
        %2111 = vmatprep.subr.mxu0 0.0
        %2112 = vmatpush1.msra.mxu0 0.0
        %2113 = vmatprep.subr.mxu0 0.0
        %2114 = vmatpush1.msra.mxu0 0.0
        %2115 = vmatprep.subr.mxu0 0.0
        %2116 = vmatpush1.msra.mxu0 0.0
        %2117 = vmatprep.subr.mxu0 0.0
        %2118 = vmatpush1.msra.mxu0 0.0
        %2119 = vmatprep.subr.mxu0 0.0
        %2120 = vmatpush1.msra.mxu0 0.0
        %2121 = vmatprep.subr.mxu0 0.0
        %2122 = vmatpush1.msra.mxu0 0.0
        %2123 = vmatprep.subr.mxu0 0.0
        %2124 = vmatpush1.msra.mxu0 0.0
        %2125 = vmatprep.subr.mxu0 0.0
        %2126 = vmatpush1.msra.mxu0 0.0
        %2127 = vmatprep.subr.mxu0 0.0
        %2128 = vmatpush1.msra.mxu0 0.0
        %2129 = vmatprep.subr.mxu0 0.0
        %2130 = vmatpush1.msra.mxu0 0.0
        %2131 = vmatprep.subr.mxu0 0.0
        %2132 = vmatpush1.msra.mxu0 0.0
        %2133 = vmatprep.subr.mxu0 0.0
        %2134 = vmatpush1.msra.mxu0 0.0
        %2135 = vmatprep.mubr.f32.mxu0 0.0
        %v2136 = vand.u32 %v310, 4294901760
        %2137 = vmatmul.mubr.f32.gmra.mrb[0].mxu0 %v2136
        %v2138 = vpop.f32.mrb[0].mxu0
        %v2139 = vadd.f32 %v2051, %v2138
        %v2140 = vpop.f32.mrb[0].mxu0
        %v2141 = vadd.f32 %v2053, %v2140
        %2142 = vdwg.mxu0
        %2143 = vmatprep.subr.mxu0 0.0
        %v2144 = vand.u32 %v284, 4294901760
        %2145 = vmatpush1.msra.mxu0 %v2144
        %2146 = vmatprep.subr.mxu0 0.0
        %v2147 = vand.u32 %v287, 4294901760
        %2148 = vmatpush1.msra.mxu0 %v2147
        %2149 = vmatprep.subr.mxu0 0.0
        %v2150 = vand.u32 %v290, 4294901760
        %2151 = vmatpush1.msra.mxu0 %v2150
        %2152 = vmatprep.subr.mxu0 0.0
        %v2153 = vand.u32 %v293, 4294901760
        %2154 = vmatpush1.msra.mxu0 %v2153
        %2155 = vmatprep.subr.mxu0 0.0
        %v2156 = vand.u32 %v296, 4294901760
        %2157 = vmatpush1.msra.mxu0 %v2156
        %2158 = vmatprep.subr.mxu0 0.0
        %v2159 = vand.u32 %v299, 4294901760
        %2160 = vmatpush1.msra.mxu0 %v2159
        %2161 = vmatprep.subr.mxu0 0.0
        %v2162 = vand.u32 %v302, 4294901760
        %2163 = vmatpush1.msra.mxu0 %v2162
        %2164 = vmatprep.subr.mxu0 0.0
        %v2165 = vand.u32 %v305, 4294901760
        %2166 = vmatpush1.msra.mxu0 %v2165
        %2167 = vmatprep.subr.mxu0 0.0
        %2168 = vmatpush1.msra.mxu0 0.0
        %2169 = vmatprep.subr.mxu0 0.0
        %2170 = vmatpush1.msra.mxu0 0.0
        %2171 = vmatprep.subr.mxu0 0.0
        %2172 = vmatpush1.msra.mxu0 0.0
        %2173 = vmatprep.subr.mxu0 0.0
        %2174 = vmatpush1.msra.mxu0 0.0
        %2175 = vmatprep.subr.mxu0 0.0
        %2176 = vmatpush1.msra.mxu0 0.0
        %2177 = vmatprep.subr.mxu0 0.0
        %2178 = vmatpush1.msra.mxu0 0.0
        %2179 = vmatprep.subr.mxu0 0.0
        %2180 = vmatpush1.msra.mxu0 0.0
        %2181 = vmatprep.subr.mxu0 0.0
        %2182 = vmatpush1.msra.mxu0 0.0
        %2183 = vmatprep.subr.mxu0 0.0
        %2184 = vmatpush1.msra.mxu0 0.0
        %2185 = vmatprep.subr.mxu0 0.0
        %2186 = vmatpush1.msra.mxu0 0.0
        %2187 = vmatprep.subr.mxu0 0.0
        %2188 = vmatpush1.msra.mxu0 0.0
        %2189 = vmatprep.subr.mxu0 0.0
        %2190 = vmatpush1.msra.mxu0 0.0
        %2191 = vmatprep.subr.mxu0 0.0
        %2192 = vmatpush1.msra.mxu0 0.0
        %2193 = vmatprep.subr.mxu0 0.0
        %2194 = vmatpush1.msra.mxu0 0.0
        %2195 = vmatprep.subr.mxu0 0.0
        %2196 = vmatpush1.msra.mxu0 0.0
        %2197 = vmatprep.subr.mxu0 0.0
        %2198 = vmatpush1.msra.mxu0 0.0
        %2199 = vmatprep.subr.mxu0 0.0
        %2200 = vmatpush1.msra.mxu0 0.0
        %2201 = vmatprep.subr.mxu0 0.0
        %2202 = vmatpush1.msra.mxu0 0.0
        %2203 = vmatprep.subr.mxu0 0.0
        %2204 = vmatpush1.msra.mxu0 0.0
        %2205 = vmatprep.subr.mxu0 0.0
        %2206 = vmatpush1.msra.mxu0 0.0
        %2207 = vmatprep.subr.mxu0 0.0
        %2208 = vmatpush1.msra.mxu0 0.0
        %2209 = vmatprep.subr.mxu0 0.0
        %2210 = vmatpush1.msra.mxu0 0.0
        %2211 = vmatprep.subr.mxu0 0.0
        %2212 = vmatpush1.msra.mxu0 0.0
        %2213 = vmatprep.subr.mxu0 0.0
        %2214 = vmatpush1.msra.mxu0 0.0
        %2215 = vmatprep.mubr.f32.mxu0 0.0
        %v2216 = vand.u32 %v310, 4294901760
        %v2217 = vsub.f32 %v310, %v2216
        %v2218 = vand.u32 %v2217, 4294901760
        %v2219 = vsub.f32 %v2217, %v2218
        %v2220 = vand.u32 %v2219, 4294901760
        %2221 = vmatmul.mubr.f32.gmra.mrb[0].mxu0 %v2220
        %v2222 = vpop.f32.mrb[0].mxu0
        %v2223 = vadd.f32 0.0, %v2222
        %v2224 = vpop.f32.mrb[0].mxu0
        %2225 = vdwg.mxu0
        %2226 = vmatprep.subr.mxu0 0.0
        %v2227 = vand.u32 %v284, 4294901760
        %v2228 = vsub.f32 %v284, %v2227
        %v2229 = vand.u32 %v2228, 4294901760
        %v2230 = vsub.f32 %v2228, %v2229
        %v2231 = vand.u32 %v2230, 4294901760
        %2232 = vmatpush1.msra.mxu0 %v2231
        %2233 = vmatprep.subr.mxu0 0.0
        %v2234 = vand.u32 %v287, 4294901760
        %v2235 = vsub.f32 %v287, %v2234
        %v2236 = vand.u32 %v2235, 4294901760
        %v2237 = vsub.f32 %v2235, %v2236
        %v2238 = vand.u32 %v2237, 4294901760
        %2239 = vmatpush1.msra.mxu0 %v2238
        %2240 = vmatprep.subr.mxu0 0.0
        %v2241 = vand.u32 %v290, 4294901760
        %v2242 = vsub.f32 %v290, %v2241
        %v2243 = vand.u32 %v2242, 4294901760
        %v2244 = vsub.f32 %v2242, %v2243
        %v2245 = vand.u32 %v2244, 4294901760
        %2246 = vmatpush1.msra.mxu0 %v2245
        %2247 = vmatprep.subr.mxu0 0.0
        %v2248 = vand.u32 %v293, 4294901760
        %v2249 = vsub.f32 %v293, %v2248
        %v2250 = vand.u32 %v2249, 4294901760
        %v2251 = vsub.f32 %v2249, %v2250
        %v2252 = vand.u32 %v2251, 4294901760
        %2253 = vmatpush1.msra.mxu0 %v2252
        %2254 = vmatprep.subr.mxu0 0.0
        %v2255 = vand.u32 %v296, 4294901760
        %v2256 = vsub.f32 %v296, %v2255
        %v2257 = vand.u32 %v2256, 4294901760
        %v2258 = vsub.f32 %v2256, %v2257
        %v2259 = vand.u32 %v2258, 4294901760
        %2260 = vmatpush1.msra.mxu0 %v2259
        %2261 = vmatprep.subr.mxu0 0.0
        %v2262 = vand.u32 %v299, 4294901760
        %v2263 = vsub.f32 %v299, %v2262
        %v2264 = vand.u32 %v2263, 4294901760
        %v2265 = vsub.f32 %v2263, %v2264
        %v2266 = vand.u32 %v2265, 4294901760
        %2267 = vmatpush1.msra.mxu0 %v2266
        %2268 = vmatprep.subr.mxu0 0.0
        %v2269 = vand.u32 %v302, 4294901760
        %v2270 = vsub.f32 %v302, %v2269
        %v2271 = vand.u32 %v2270, 4294901760
        %v2272 = vsub.f32 %v2270, %v2271
        %v2273 = vand.u32 %v2272, 4294901760
        %2274 = vmatpush1.msra.mxu0 %v2273
        %2275 = vmatprep.subr.mxu0 0.0
        %v2276 = vand.u32 %v305, 4294901760
        %v2277 = vsub.f32 %v305, %v2276
        %v2278 = vand.u32 %v2277, 4294901760
        %v2279 = vsub.f32 %v2277, %v2278
        %v2280 = vand.u32 %v2279, 4294901760
        %2281 = vmatpush1.msra.mxu0 %v2280
        %2282 = vmatprep.subr.mxu0 0.0
        %2283 = vmatpush1.msra.mxu0 0.0
        %2284 = vmatprep.subr.mxu0 0.0
        %2285 = vmatpush1.msra.mxu0 0.0
        %2286 = vmatprep.subr.mxu0 0.0
        %2287 = vmatpush1.msra.mxu0 0.0
        %2288 = vmatprep.subr.mxu0 0.0
        %2289 = vmatpush1.msra.mxu0 0.0
        %2290 = vmatprep.subr.mxu0 0.0
        %2291 = vmatpush1.msra.mxu0 0.0
        %2292 = vmatprep.subr.mxu0 0.0
        %2293 = vmatpush1.msra.mxu0 0.0
        %2294 = vmatprep.subr.mxu0 0.0
        %2295 = vmatpush1.msra.mxu0 0.0
        %2296 = vmatprep.subr.mxu0 0.0
        %2297 = vmatpush1.msra.mxu0 0.0
        %2298 = vmatprep.subr.mxu0 0.0
        %2299 = vmatpush1.msra.mxu0 0.0
        %2300 = vmatprep.subr.mxu0 0.0
        %2301 = vmatpush1.msra.mxu0 0.0
        %2302 = vmatprep.subr.mxu0 0.0
        %2303 = vmatpush1.msra.mxu0 0.0
        %2304 = vmatprep.subr.mxu0 0.0
        %2305 = vmatpush1.msra.mxu0 0.0
        %2306 = vmatprep.subr.mxu0 0.0
        %2307 = vmatpush1.msra.mxu0 0.0
        %2308 = vmatprep.subr.mxu0 0.0
        %2309 = vmatpush1.msra.mxu0 0.0
        %2310 = vmatprep.subr.mxu0 0.0
        %2311 = vmatpush1.msra.mxu0 0.0
        %2312 = vmatprep.subr.mxu0 0.0
        %2313 = vmatpush1.msra.mxu0 0.0
        %2314 = vmatprep.subr.mxu0 0.0
        %2315 = vmatpush1.msra.mxu0 0.0
        %2316 = vmatprep.subr.mxu0 0.0
        %2317 = vmatpush1.msra.mxu0 0.0
        %2318 = vmatprep.subr.mxu0 0.0
        %2319 = vmatpush1.msra.mxu0 0.0
        %2320 = vmatprep.subr.mxu0 0.0
        %2321 = vmatpush1.msra.mxu0 0.0
        %2322 = vmatprep.subr.mxu0 0.0
        %2323 = vmatpush1.msra.mxu0 0.0
        %2324 = vmatprep.subr.mxu0 0.0
        %2325 = vmatpush1.msra.mxu0 0.0
        %2326 = vmatprep.subr.mxu0 0.0
        %2327 = vmatpush1.msra.mxu0 0.0
        %2328 = vmatprep.subr.mxu0 0.0
        %2329 = vmatpush1.msra.mxu0 0.0
        %2330 = vmatprep.mubr.f32.mxu0 0.0
        %v2331 = vand.u32 %v310, 4294901760
        %2332 = vmatmul.mubr.f32.gmra.mrb[0].mxu0 %v2331
        %v2333 = vpop.f32.mrb[0].mxu0
        %v2334 = vadd.f32 %v2223, %v2333
        %v2335 = vpop.f32.mrb[0].mxu0
        %2336 = vdwg.mxu0
        %2337 = vmatprep.subr.mxu0 0.0
        %v2338 = vand.u32 %v284, 4294901760
        %v2339 = vsub.f32 %v284, %v2338
        %2340 = vmatpush1.msra.mxu0 %v2339
        %2341 = vmatprep.subr.mxu0 0.0
        %v2342 = vand.u32 %v287, 4294901760
        %v2343 = vsub.f32 %v287, %v2342
        %2344 = vmatpush1.msra.mxu0 %v2343
        %2345 = vmatprep.subr.mxu0 0.0
        %v2346 = vand.u32 %v290, 4294901760
        %v2347 = vsub.f32 %v290, %v2346
        %2348 = vmatpush1.msra.mxu0 %v2347
        %2349 = vmatprep.subr.mxu0 0.0
        %v2350 = vand.u32 %v293, 4294901760
        %v2351 = vsub.f32 %v293, %v2350
        %2352 = vmatpush1.msra.mxu0 %v2351
        %2353 = vmatprep.subr.mxu0 0.0
        %v2354 = vand.u32 %v296, 4294901760
        %v2355 = vsub.f32 %v296, %v2354
        %2356 = vmatpush1.msra.mxu0 %v2355
        %2357 = vmatprep.subr.mxu0 0.0
        %v2358 = vand.u32 %v299, 4294901760
        %v2359 = vsub.f32 %v299, %v2358
        %2360 = vmatpush1.msra.mxu0 %v2359
        %2361 = vmatprep.subr.mxu0 0.0
        %v2362 = vand.u32 %v302, 4294901760
        %v2363 = vsub.f32 %v302, %v2362
        %2364 = vmatpush1.msra.mxu0 %v2363
        %2365 = vmatprep.subr.mxu0 0.0
        %v2366 = vand.u32 %v305, 4294901760
        %v2367 = vsub.f32 %v305, %v2366
        %2368 = vmatpush1.msra.mxu0 %v2367
        %2369 = vmatprep.subr.mxu0 0.0
        %2370 = vmatpush1.msra.mxu0 0.0
        %2371 = vmatprep.subr.mxu0 0.0
        %2372 = vmatpush1.msra.mxu0 0.0
        %2373 = vmatprep.subr.mxu0 0.0
        %2374 = vmatpush1.msra.mxu0 0.0
        %2375 = vmatprep.subr.mxu0 0.0
        %2376 = vmatpush1.msra.mxu0 0.0
        %2377 = vmatprep.subr.mxu0 0.0
        %2378 = vmatpush1.msra.mxu0 0.0
        %2379 = vmatprep.subr.mxu0 0.0
        %2380 = vmatpush1.msra.mxu0 0.0
        %2381 = vmatprep.subr.mxu0 0.0
        %2382 = vmatpush1.msra.mxu0 0.0
        %2383 = vmatprep.subr.mxu0 0.0
        %2384 = vmatpush1.msra.mxu0 0.0
        %2385 = vmatprep.subr.mxu0 0.0
        %2386 = vmatpush1.msra.mxu0 0.0
        %2387 = vmatprep.subr.mxu0 0.0
        %2388 = vmatpush1.msra.mxu0 0.0
        %2389 = vmatprep.subr.mxu0 0.0
        %2390 = vmatpush1.msra.mxu0 0.0
        %2391 = vmatprep.subr.mxu0 0.0
        %2392 = vmatpush1.msra.mxu0 0.0
        %2393 = vmatprep.subr.mxu0 0.0
        %2394 = vmatpush1.msra.mxu0 0.0
        %2395 = vmatprep.subr.mxu0 0.0
        %2396 = vmatpush1.msra.mxu0 0.0
        %2397 = vmatprep.subr.mxu0 0.0
        %2398 = vmatpush1.msra.mxu0 0.0
        %2399 = vmatprep.subr.mxu0 0.0
        %2400 = vmatpush1.msra.mxu0 0.0
        %2401 = vmatprep.subr.mxu0 0.0
        %2402 = vmatpush1.msra.mxu0 0.0
        %2403 = vmatprep.subr.mxu0 0.0
        %2404 = vmatpush1.msra.mxu0 0.0
        %2405 = vmatprep.subr.mxu0 0.0
        %2406 = vmatpush1.msra.mxu0 0.0
        %2407 = vmatprep.subr.mxu0 0.0
        %2408 = vmatpush1.msra.mxu0 0.0
        %2409 = vmatprep.subr.mxu0 0.0
        %2410 = vmatpush1.msra.mxu0 0.0
        %2411 = vmatprep.subr.mxu0 0.0
        %2412 = vmatpush1.msra.mxu0 0.0
        %2413 = vmatprep.subr.mxu0 0.0
        %2414 = vmatpush1.msra.mxu0 0.0
        %2415 = vmatprep.subr.mxu0 0.0
        %2416 = vmatpush1.msra.mxu0 0.0
        %2417 = vmatprep.mubr.f32.mxu0 0.0
        %v2418 = vand.u32 %v310, 4294901760
        %v2419 = vsub.f32 %v310, %v2418
        %2420 = vmatmul.mubr.f32.gmra.mrb[0].mxu0 %v2419
        %v2421 = vpop.f32.mrb[0].mxu0
        %v2422 = vadd.f32 %v2334, %v2421
        %v2423 = vpop.f32.mrb[0].mxu0
        %2424 = vdwg.mxu0
        %2425 = vmatprep.subr.mxu0 0.0
        %v2426 = vand.u32 %v284, 4294901760
        %2427 = vmatpush1.msra.mxu0 %v2426
        %2428 = vmatprep.subr.mxu0 0.0
        %v2429 = vand.u32 %v287, 4294901760
        %2430 = vmatpush1.msra.mxu0 %v2429
        %2431 = vmatprep.subr.mxu0 0.0
        %v2432 = vand.u32 %v290, 4294901760
        %2433 = vmatpush1.msra.mxu0 %v2432
        %2434 = vmatprep.subr.mxu0 0.0
        %v2435 = vand.u32 %v293, 4294901760
        %2436 = vmatpush1.msra.mxu0 %v2435
        %2437 = vmatprep.subr.mxu0 0.0
        %v2438 = vand.u32 %v296, 4294901760
        %2439 = vmatpush1.msra.mxu0 %v2438
        %2440 = vmatprep.subr.mxu0 0.0
        %v2441 = vand.u32 %v299, 4294901760
        %2442 = vmatpush1.msra.mxu0 %v2441
        %2443 = vmatprep.subr.mxu0 0.0
        %v2444 = vand.u32 %v302, 4294901760
        %2445 = vmatpush1.msra.mxu0 %v2444
        %2446 = vmatprep.subr.mxu0 0.0
        %v2447 = vand.u32 %v305, 4294901760
        %2448 = vmatpush1.msra.mxu0 %v2447
        %2449 = vmatprep.subr.mxu0 0.0
        %2450 = vmatpush1.msra.mxu0 0.0
        %2451 = vmatprep.subr.mxu0 0.0
        %2452 = vmatpush1.msra.mxu0 0.0
        %2453 = vmatprep.subr.mxu0 0.0
        %2454 = vmatpush1.msra.mxu0 0.0
        %2455 = vmatprep.subr.mxu0 0.0
        %2456 = vmatpush1.msra.mxu0 0.0
        %2457 = vmatprep.subr.mxu0 0.0
        %2458 = vmatpush1.msra.mxu0 0.0
        %2459 = vmatprep.subr.mxu0 0.0
        %2460 = vmatpush1.msra.mxu0 0.0
        %2461 = vmatprep.subr.mxu0 0.0
        %2462 = vmatpush1.msra.mxu0 0.0
        %2463 = vmatprep.subr.mxu0 0.0
        %2464 = vmatpush1.msra.mxu0 0.0
        %2465 = vmatprep.subr.mxu0 0.0
        %2466 = vmatpush1.msra.mxu0 0.0
        %2467 = vmatprep.subr.mxu0 0.0
        %2468 = vmatpush1.msra.mxu0 0.0
        %2469 = vmatprep.subr.mxu0 0.0
        %2470 = vmatpush1.msra.mxu0 0.0
        %2471 = vmatprep.subr.mxu0 0.0
        %2472 = vmatpush1.msra.mxu0 0.0
        %2473 = vmatprep.subr.mxu0 0.0
        %2474 = vmatpush1.msra.mxu0 0.0
        %2475 = vmatprep.subr.mxu0 0.0
        %2476 = vmatpush1.msra.mxu0 0.0
        %2477 = vmatprep.subr.mxu0 0.0
        %2478 = vmatpush1.msra.mxu0 0.0
        %2479 = vmatprep.subr.mxu0 0.0
        %2480 = vmatpush1.msra.mxu0 0.0
        %2481 = vmatprep.subr.mxu0 0.0
        %2482 = vmatpush1.msra.mxu0 0.0
        %2483 = vmatprep.subr.mxu0 0.0
        %2484 = vmatpush1.msra.mxu0 0.0
        %2485 = vmatprep.subr.mxu0 0.0
        %2486 = vmatpush1.msra.mxu0 0.0
        %2487 = vmatprep.subr.mxu0 0.0
        %2488 = vmatpush1.msra.mxu0 0.0
        %2489 = vmatprep.subr.mxu0 0.0
        %2490 = vmatpush1.msra.mxu0 0.0
        %2491 = vmatprep.subr.mxu0 0.0
        %2492 = vmatpush1.msra.mxu0 0.0
        %2493 = vmatprep.subr.mxu0 0.0
        %2494 = vmatpush1.msra.mxu0 0.0
        %2495 = vmatprep.subr.mxu0 0.0
        %2496 = vmatpush1.msra.mxu0 0.0
        %2497 = vmatprep.mubr.f32.mxu0 0.0
        %v2498 = vand.u32 %v310, 4294901760
        %v2499 = vsub.f32 %v310, %v2498
        %v2500 = vand.u32 %v2499, 4294901760
        %2501 = vmatmul.mubr.f32.gmra.mrb[0].mxu0 %v2500
        %v2502 = vpop.f32.mrb[0].mxu0
        %v2503 = vadd.f32 %v2422, %v2502
        %v2504 = vpop.f32.mrb[0].mxu0
        %2505 = vdwg.mxu0
        %2506 = vmatprep.subr.mxu0 0.0
        %v2507 = vand.u32 %v284, 4294901760
        %v2508 = vsub.f32 %v284, %v2507
        %v2509 = vand.u32 %v2508, 4294901760
        %2510 = vmatpush1.msra.mxu0 %v2509
        %2511 = vmatprep.subr.mxu0 0.0
        %v2512 = vand.u32 %v287, 4294901760
        %v2513 = vsub.f32 %v287, %v2512
        %v2514 = vand.u32 %v2513, 4294901760
        %2515 = vmatpush1.msra.mxu0 %v2514
        %2516 = vmatprep.subr.mxu0 0.0
        %v2517 = vand.u32 %v290, 4294901760
        %v2518 = vsub.f32 %v290, %v2517
        %v2519 = vand.u32 %v2518, 4294901760
        %2520 = vmatpush1.msra.mxu0 %v2519
        %2521 = vmatprep.subr.mxu0 0.0
        %v2522 = vand.u32 %v293, 4294901760
        %v2523 = vsub.f32 %v293, %v2522
        %v2524 = vand.u32 %v2523, 4294901760
        %2525 = vmatpush1.msra.mxu0 %v2524
        %2526 = vmatprep.subr.mxu0 0.0
        %v2527 = vand.u32 %v296, 4294901760
        %v2528 = vsub.f32 %v296, %v2527
        %v2529 = vand.u32 %v2528, 4294901760
        %2530 = vmatpush1.msra.mxu0 %v2529
        %2531 = vmatprep.subr.mxu0 0.0
        %v2532 = vand.u32 %v299, 4294901760
        %v2533 = vsub.f32 %v299, %v2532
        %v2534 = vand.u32 %v2533, 4294901760
        %2535 = vmatpush1.msra.mxu0 %v2534
        %2536 = vmatprep.subr.mxu0 0.0
        %v2537 = vand.u32 %v302, 4294901760
        %v2538 = vsub.f32 %v302, %v2537
        %v2539 = vand.u32 %v2538, 4294901760
        %2540 = vmatpush1.msra.mxu0 %v2539
        %2541 = vmatprep.subr.mxu0 0.0
        %v2542 = vand.u32 %v305, 4294901760
        %v2543 = vsub.f32 %v305, %v2542
        %v2544 = vand.u32 %v2543, 4294901760
        %2545 = vmatpush1.msra.mxu0 %v2544
        %2546 = vmatprep.subr.mxu0 0.0
        %2547 = vmatpush1.msra.mxu0 0.0
        %2548 = vmatprep.subr.mxu0 0.0
        %2549 = vmatpush1.msra.mxu0 0.0
        %2550 = vmatprep.subr.mxu0 0.0
        %2551 = vmatpush1.msra.mxu0 0.0
        %2552 = vmatprep.subr.mxu0 0.0
        %2553 = vmatpush1.msra.mxu0 0.0
        %2554 = vmatprep.subr.mxu0 0.0
        %2555 = vmatpush1.msra.mxu0 0.0
        %2556 = vmatprep.subr.mxu0 0.0
        %2557 = vmatpush1.msra.mxu0 0.0
        %2558 = vmatprep.subr.mxu0 0.0
        %2559 = vmatpush1.msra.mxu0 0.0
        %2560 = vmatprep.subr.mxu0 0.0
        %2561 = vmatpush1.msra.mxu0 0.0
        %2562 = vmatprep.subr.mxu0 0.0
        %2563 = vmatpush1.msra.mxu0 0.0
        %2564 = vmatprep.subr.mxu0 0.0
        %2565 = vmatpush1.msra.mxu0 0.0
        %2566 = vmatprep.subr.mxu0 0.0
        %2567 = vmatpush1.msra.mxu0 0.0
        %2568 = vmatprep.subr.mxu0 0.0
        %2569 = vmatpush1.msra.mxu0 0.0
        %2570 = vmatprep.subr.mxu0 0.0
        %2571 = vmatpush1.msra.mxu0 0.0
        %2572 = vmatprep.subr.mxu0 0.0
        %2573 = vmatpush1.msra.mxu0 0.0
        %2574 = vmatprep.subr.mxu0 0.0
        %2575 = vmatpush1.msra.mxu0 0.0
        %2576 = vmatprep.subr.mxu0 0.0
        %2577 = vmatpush1.msra.mxu0 0.0
        %2578 = vmatprep.subr.mxu0 0.0
        %2579 = vmatpush1.msra.mxu0 0.0
        %2580 = vmatprep.subr.mxu0 0.0
        %2581 = vmatpush1.msra.mxu0 0.0
        %2582 = vmatprep.subr.mxu0 0.0
        %2583 = vmatpush1.msra.mxu0 0.0
        %2584 = vmatprep.subr.mxu0 0.0
        %2585 = vmatpush1.msra.mxu0 0.0
        %2586 = vmatprep.subr.mxu0 0.0
        %2587 = vmatpush1.msra.mxu0 0.0
        %2588 = vmatprep.subr.mxu0 0.0
        %2589 = vmatpush1.msra.mxu0 0.0
        %2590 = vmatprep.subr.mxu0 0.0
        %2591 = vmatpush1.msra.mxu0 0.0
        %2592 = vmatprep.subr.mxu0 0.0
        %2593 = vmatpush1.msra.mxu0 0.0
        %2594 = vmatprep.mubr.f32.mxu0 0.0
        %v2595 = vand.u32 %v310, 4294901760
        %2596 = vmatmul.mubr.f32.gmra.mrb[0].mxu0 %v2595
        %v2597 = vpop.f32.mrb[0].mxu0
        %v2598 = vadd.f32 %v2503, %v2597
        %v2599 = vpop.f32.mrb[0].mxu0
        %2600 = vdwg.mxu0
        %2601 = vmatprep.subr.mxu0 0.0
        %v2602 = vand.u32 %v284, 4294901760
        %2603 = vmatpush1.msra.mxu0 %v2602
        %2604 = vmatprep.subr.mxu0 0.0
        %v2605 = vand.u32 %v287, 4294901760
        %2606 = vmatpush1.msra.mxu0 %v2605
        %2607 = vmatprep.subr.mxu0 0.0
        %v2608 = vand.u32 %v290, 4294901760
        %2609 = vmatpush1.msra.mxu0 %v2608
        %2610 = vmatprep.subr.mxu0 0.0
        %v2611 = vand.u32 %v293, 4294901760
        %2612 = vmatpush1.msra.mxu0 %v2611
        %2613 = vmatprep.subr.mxu0 0.0
        %v2614 = vand.u32 %v296, 4294901760
        %2615 = vmatpush1.msra.mxu0 %v2614
        %2616 = vmatprep.subr.mxu0 0.0
        %v2617 = vand.u32 %v299, 4294901760
        %2618 = vmatpush1.msra.mxu0 %v2617
        %2619 = vmatprep.subr.mxu0 0.0
        %v2620 = vand.u32 %v302, 4294901760
        %2621 = vmatpush1.msra.mxu0 %v2620
        %2622 = vmatprep.subr.mxu0 0.0
        %v2623 = vand.u32 %v305, 4294901760
        %2624 = vmatpush1.msra.mxu0 %v2623
        %2625 = vmatprep.subr.mxu0 0.0
        %2626 = vmatpush1.msra.mxu0 0.0
        %2627 = vmatprep.subr.mxu0 0.0
        %2628 = vmatpush1.msra.mxu0 0.0
        %2629 = vmatprep.subr.mxu0 0.0
        %2630 = vmatpush1.msra.mxu0 0.0
        %2631 = vmatprep.subr.mxu0 0.0
        %2632 = vmatpush1.msra.mxu0 0.0
        %2633 = vmatprep.subr.mxu0 0.0
        %2634 = vmatpush1.msra.mxu0 0.0
        %2635 = vmatprep.subr.mxu0 0.0
        %2636 = vmatpush1.msra.mxu0 0.0
        %2637 = vmatprep.subr.mxu0 0.0
        %2638 = vmatpush1.msra.mxu0 0.0
        %2639 = vmatprep.subr.mxu0 0.0
        %2640 = vmatpush1.msra.mxu0 0.0
        %2641 = vmatprep.subr.mxu0 0.0
        %2642 = vmatpush1.msra.mxu0 0.0
        %2643 = vmatprep.subr.mxu0 0.0
        %2644 = vmatpush1.msra.mxu0 0.0
        %2645 = vmatprep.subr.mxu0 0.0
        %2646 = vmatpush1.msra.mxu0 0.0
        %2647 = vmatprep.subr.mxu0 0.0
        %2648 = vmatpush1.msra.mxu0 0.0
        %2649 = vmatprep.subr.mxu0 0.0
        %2650 = vmatpush1.msra.mxu0 0.0
        %2651 = vmatprep.subr.mxu0 0.0
        %2652 = vmatpush1.msra.mxu0 0.0
        %2653 = vmatprep.subr.mxu0 0.0
        %2654 = vmatpush1.msra.mxu0 0.0
        %2655 = vmatprep.subr.mxu0 0.0
        %2656 = vmatpush1.msra.mxu0 0.0
        %2657 = vmatprep.subr.mxu0 0.0
        %2658 = vmatpush1.msra.mxu0 0.0
        %2659 = vmatprep.subr.mxu0 0.0
        %2660 = vmatpush1.msra.mxu0 0.0
        %2661 = vmatprep.subr.mxu0 0.0
        %2662 = vmatpush1.msra.mxu0 0.0
        %2663 = vmatprep.subr.mxu0 0.0
        %2664 = vmatpush1.msra.mxu0 0.0
        %2665 = vmatprep.subr.mxu0 0.0
        %2666 = vmatpush1.msra.mxu0 0.0
        %2667 = vmatprep.subr.mxu0 0.0
        %2668 = vmatpush1.msra.mxu0 0.0
        %2669 = vmatprep.subr.mxu0 0.0
        %2670 = vmatpush1.msra.mxu0 0.0
        %2671 = vmatprep.subr.mxu0 0.0
        %2672 = vmatpush1.msra.mxu0 0.0
        %2673 = vmatprep.mubr.f32.mxu0 0.0
        %v2674 = vand.u32 %v310, 4294901760
        %2675 = vmatmul.mubr.f32.gmra.mrb[0].mxu0 %v2674
        %v2676 = vpop.f32.mrb[0].mxu0
        %v2677 = vadd.f32 %v2598, %v2676
        %v2678 = vpop.f32.mrb[0].mxu0
        %2679 = vdwg.mxu0
        %v2680 = vmul.f32 %v258, %v258
        %v2681 = vmul.f32 %v259, %v259
        %v2682 = vmul.f32 %v260, %v260
        %v2683 = vmul.f32 %v261, %v261
        %v2684 = vmul.f32 %v262, %v262
        %v2685 = vmul.f32 %v263, %v263
        %v2686 = vmul.f32 %v264, %v264
        %v2687 = vmul.f32 %v265, %v265
        %v2688 = vmul.f32 %v266, %v266
        %v2689 = vmul.f32 %v267, %v267
        %v2690 = vmul.f32 %v268, %v268
        %v2691 = vmul.f32 %v269, %v269
        %v2692 = vmul.f32 %v270, %v270
        %v2693 = vmul.f32 %v271, %v271
        %v2694 = vmul.f32 %v272, %v272
        %v2695 = vmul.f32 %v273, %v273
        %v2696 = vmul.f32 %v274, %v274
        %v2697 = vmul.f32 %v275, %v275
        %v2698 = vmul.f32 %v276, %v276
        %v2699 = vmul.f32 %v277, %v277
        %v2700 = vmul.f32 %v278, %v278
        %v2701 = vmul.f32 %v279, %v279
        %v2702 = vmul.f32 %v280, %v280
        %v2703 = vmul.f32 %v281, %v281
        %v2705 = vsel %vm308, %v307, 0
        %v2707 = vand.u32 %v2681, 4294901760
        %2708 = vmatprep.subr.mxu0 %v2707
        %v2709 = vand.u32 %v2680, 4294901760
        %2710 = vmatpush1.msra.mxu0 %v2709
        %v2711 = vand.u32 %v2684, 4294901760
        %2712 = vmatprep.subr.mxu0 %v2711
        %v2713 = vand.u32 %v2683, 4294901760
        %2714 = vmatpush1.msra.mxu0 %v2713
        %v2715 = vand.u32 %v2687, 4294901760
        %2716 = vmatprep.subr.mxu0 %v2715
        %v2717 = vand.u32 %v2686, 4294901760
        %2718 = vmatpush1.msra.mxu0 %v2717
        %v2719 = vand.u32 %v2690, 4294901760
        %2720 = vmatprep.subr.mxu0 %v2719
        %v2721 = vand.u32 %v2689, 4294901760
        %2722 = vmatpush1.msra.mxu0 %v2721
        %v2723 = vand.u32 %v2693, 4294901760
        %2724 = vmatprep.subr.mxu0 %v2723
        %v2725 = vand.u32 %v2692, 4294901760
        %2726 = vmatpush1.msra.mxu0 %v2725
        %v2727 = vand.u32 %v2696, 4294901760
        %2728 = vmatprep.subr.mxu0 %v2727
        %v2729 = vand.u32 %v2695, 4294901760
        %2730 = vmatpush1.msra.mxu0 %v2729
        %v2731 = vand.u32 %v2699, 4294901760
        %2732 = vmatprep.subr.mxu0 %v2731
        %v2733 = vand.u32 %v2698, 4294901760
        %2734 = vmatpush1.msra.mxu0 %v2733
        %v2735 = vand.u32 %v2702, 4294901760
        %2736 = vmatprep.subr.mxu0 %v2735
        %v2737 = vand.u32 %v2701, 4294901760
        %2738 = vmatpush1.msra.mxu0 %v2737
        %2739 = vmatprep.subr.mxu0 0.0
        %2740 = vmatpush1.msra.mxu0 0.0
        %2741 = vmatprep.subr.mxu0 0.0
        %2742 = vmatpush1.msra.mxu0 0.0
        %2743 = vmatprep.subr.mxu0 0.0
        %2744 = vmatpush1.msra.mxu0 0.0
        %2745 = vmatprep.subr.mxu0 0.0
        %2746 = vmatpush1.msra.mxu0 0.0
        %2747 = vmatprep.subr.mxu0 0.0
        %2748 = vmatpush1.msra.mxu0 0.0
        %2749 = vmatprep.subr.mxu0 0.0
        %2750 = vmatpush1.msra.mxu0 0.0
        %2751 = vmatprep.subr.mxu0 0.0
        %2752 = vmatpush1.msra.mxu0 0.0
        %2753 = vmatprep.subr.mxu0 0.0
        %2754 = vmatpush1.msra.mxu0 0.0
        %2755 = vmatprep.subr.mxu0 0.0
        %2756 = vmatpush1.msra.mxu0 0.0
        %2757 = vmatprep.subr.mxu0 0.0
        %2758 = vmatpush1.msra.mxu0 0.0
        %2759 = vmatprep.subr.mxu0 0.0
        %2760 = vmatpush1.msra.mxu0 0.0
        %2761 = vmatprep.subr.mxu0 0.0
        %2762 = vmatpush1.msra.mxu0 0.0
        %2763 = vmatprep.subr.mxu0 0.0
        %2764 = vmatpush1.msra.mxu0 0.0
        %2765 = vmatprep.subr.mxu0 0.0
        %2766 = vmatpush1.msra.mxu0 0.0
        %2767 = vmatprep.subr.mxu0 0.0
        %2768 = vmatpush1.msra.mxu0 0.0
        %2769 = vmatprep.subr.mxu0 0.0
        %2770 = vmatpush1.msra.mxu0 0.0
        %2771 = vmatprep.subr.mxu0 0.0
        %2772 = vmatpush1.msra.mxu0 0.0
        %2773 = vmatprep.subr.mxu0 0.0
        %2774 = vmatpush1.msra.mxu0 0.0
        %2775 = vmatprep.subr.mxu0 0.0
        %2776 = vmatpush1.msra.mxu0 0.0
        %2777 = vmatprep.subr.mxu0 0.0
        %2778 = vmatpush1.msra.mxu0 0.0
        %2779 = vmatprep.subr.mxu0 0.0
        %2780 = vmatpush1.msra.mxu0 0.0
        %2781 = vmatprep.subr.mxu0 0.0
        %2782 = vmatpush1.msra.mxu0 0.0
        %2783 = vmatprep.subr.mxu0 0.0
        %2784 = vmatpush1.msra.mxu0 0.0
        %2785 = vmatprep.subr.mxu0 0.0
        %2786 = vmatpush1.msra.mxu0 0.0
        %2787 = vmatprep.mubr.f32.mxu0 0.0
        %v2788 = vand.u32 %v2705, 4294901760
        %v2789 = vsub.f32 %v2705, %v2788
        %v2790 = vand.u32 %v2789, 4294901760
        %v2791 = vsub.f32 %v2789, %v2790
        %v2792 = vand.u32 %v2791, 4294901760
        %2793 = vmatmul.mubr.f32.gmra.mrb[0].mxu0 %v2792
        %v2794 = vpop.f32.mrb[0].mxu0
        %v2795 = vadd.f32 0.0, %v2794
        %v2796 = vpop.f32.mrb[0].mxu0
        %v2797 = vadd.f32 0.0, %v2796
        %2798 = vdwg.mxu0
        %v2799 = vand.u32 %v2681, 4294901760
        %v2800 = vsub.f32 %v2681, %v2799
        %v2801 = vand.u32 %v2800, 4294901760
        %v2802 = vsub.f32 %v2800, %v2801
        %v2803 = vand.u32 %v2802, 4294901760
        %2804 = vmatprep.subr.mxu0 %v2803
        %v2805 = vand.u32 %v2680, 4294901760
        %v2806 = vsub.f32 %v2680, %v2805
        %v2807 = vand.u32 %v2806, 4294901760
        %v2808 = vsub.f32 %v2806, %v2807
        %v2809 = vand.u32 %v2808, 4294901760
        %2810 = vmatpush1.msra.mxu0 %v2809
        %v2811 = vand.u32 %v2684, 4294901760
        %v2812 = vsub.f32 %v2684, %v2811
        %v2813 = vand.u32 %v2812, 4294901760
        %v2814 = vsub.f32 %v2812, %v2813
        %v2815 = vand.u32 %v2814, 4294901760
        %2816 = vmatprep.subr.mxu0 %v2815
        %v2817 = vand.u32 %v2683, 4294901760
        %v2818 = vsub.f32 %v2683, %v2817
        %v2819 = vand.u32 %v2818, 4294901760
        %v2820 = vsub.f32 %v2818, %v2819
        %v2821 = vand.u32 %v2820, 4294901760
        %2822 = vmatpush1.msra.mxu0 %v2821
        %v2823 = vand.u32 %v2687, 4294901760
        %v2824 = vsub.f32 %v2687, %v2823
        %v2825 = vand.u32 %v2824, 4294901760
        %v2826 = vsub.f32 %v2824, %v2825
        %v2827 = vand.u32 %v2826, 4294901760
        %2828 = vmatprep.subr.mxu0 %v2827
        %v2829 = vand.u32 %v2686, 4294901760
        %v2830 = vsub.f32 %v2686, %v2829
        %v2831 = vand.u32 %v2830, 4294901760
        %v2832 = vsub.f32 %v2830, %v2831
        %v2833 = vand.u32 %v2832, 4294901760
        %2834 = vmatpush1.msra.mxu0 %v2833
        %v2835 = vand.u32 %v2690, 4294901760
        %v2836 = vsub.f32 %v2690, %v2835
        %v2837 = vand.u32 %v2836, 4294901760
        %v2838 = vsub.f32 %v2836, %v2837
        %v2839 = vand.u32 %v2838, 4294901760
        %2840 = vmatprep.subr.mxu0 %v2839
        %v2841 = vand.u32 %v2689, 4294901760
        %v2842 = vsub.f32 %v2689, %v2841
        %v2843 = vand.u32 %v2842, 4294901760
        %v2844 = vsub.f32 %v2842, %v2843
        %v2845 = vand.u32 %v2844, 4294901760
        %2846 = vmatpush1.msra.mxu0 %v2845
        %v2847 = vand.u32 %v2693, 4294901760
        %v2848 = vsub.f32 %v2693, %v2847
        %v2849 = vand.u32 %v2848, 4294901760
        %v2850 = vsub.f32 %v2848, %v2849
        %v2851 = vand.u32 %v2850, 4294901760
        %2852 = vmatprep.subr.mxu0 %v2851
        %v2853 = vand.u32 %v2692, 4294901760
        %v2854 = vsub.f32 %v2692, %v2853
        %v2855 = vand.u32 %v2854, 4294901760
        %v2856 = vsub.f32 %v2854, %v2855
        %v2857 = vand.u32 %v2856, 4294901760
        %2858 = vmatpush1.msra.mxu0 %v2857
        %v2859 = vand.u32 %v2696, 4294901760
        %v2860 = vsub.f32 %v2696, %v2859
        %v2861 = vand.u32 %v2860, 4294901760
        %v2862 = vsub.f32 %v2860, %v2861
        %v2863 = vand.u32 %v2862, 4294901760
        %2864 = vmatprep.subr.mxu0 %v2863
        %v2865 = vand.u32 %v2695, 4294901760
        %v2866 = vsub.f32 %v2695, %v2865
        %v2867 = vand.u32 %v2866, 4294901760
        %v2868 = vsub.f32 %v2866, %v2867
        %v2869 = vand.u32 %v2868, 4294901760
        %2870 = vmatpush1.msra.mxu0 %v2869
        %v2871 = vand.u32 %v2699, 4294901760
        %v2872 = vsub.f32 %v2699, %v2871
        %v2873 = vand.u32 %v2872, 4294901760
        %v2874 = vsub.f32 %v2872, %v2873
        %v2875 = vand.u32 %v2874, 4294901760
        %2876 = vmatprep.subr.mxu0 %v2875
        %v2877 = vand.u32 %v2698, 4294901760
        %v2878 = vsub.f32 %v2698, %v2877
        %v2879 = vand.u32 %v2878, 4294901760
        %v2880 = vsub.f32 %v2878, %v2879
        %v2881 = vand.u32 %v2880, 4294901760
        %2882 = vmatpush1.msra.mxu0 %v2881
        %v2883 = vand.u32 %v2702, 4294901760
        %v2884 = vsub.f32 %v2702, %v2883
        %v2885 = vand.u32 %v2884, 4294901760
        %v2886 = vsub.f32 %v2884, %v2885
        %v2887 = vand.u32 %v2886, 4294901760
        %2888 = vmatprep.subr.mxu0 %v2887
        %v2889 = vand.u32 %v2701, 4294901760
        %v2890 = vsub.f32 %v2701, %v2889
        %v2891 = vand.u32 %v2890, 4294901760
        %v2892 = vsub.f32 %v2890, %v2891
        %v2893 = vand.u32 %v2892, 4294901760
        %2894 = vmatpush1.msra.mxu0 %v2893
        %2895 = vmatprep.subr.mxu0 0.0
        %2896 = vmatpush1.msra.mxu0 0.0
        %2897 = vmatprep.subr.mxu0 0.0
        %2898 = vmatpush1.msra.mxu0 0.0
        %2899 = vmatprep.subr.mxu0 0.0
        %2900 = vmatpush1.msra.mxu0 0.0
        %2901 = vmatprep.subr.mxu0 0.0
        %2902 = vmatpush1.msra.mxu0 0.0
        %2903 = vmatprep.subr.mxu0 0.0
        %2904 = vmatpush1.msra.mxu0 0.0
        %2905 = vmatprep.subr.mxu0 0.0
        %2906 = vmatpush1.msra.mxu0 0.0
        %2907 = vmatprep.subr.mxu0 0.0
        %2908 = vmatpush1.msra.mxu0 0.0
        %2909 = vmatprep.subr.mxu0 0.0
        %2910 = vmatpush1.msra.mxu0 0.0
        %2911 = vmatprep.subr.mxu0 0.0
        %2912 = vmatpush1.msra.mxu0 0.0
        %2913 = vmatprep.subr.mxu0 0.0
        %2914 = vmatpush1.msra.mxu0 0.0
        %2915 = vmatprep.subr.mxu0 0.0
        %2916 = vmatpush1.msra.mxu0 0.0
        %2917 = vmatprep.subr.mxu0 0.0
        %2918 = vmatpush1.msra.mxu0 0.0
        %2919 = vmatprep.subr.mxu0 0.0
        %2920 = vmatpush1.msra.mxu0 0.0
        %2921 = vmatprep.subr.mxu0 0.0
        %2922 = vmatpush1.msra.mxu0 0.0
        %2923 = vmatprep.subr.mxu0 0.0
        %2924 = vmatpush1.msra.mxu0 0.0
        %2925 = vmatprep.subr.mxu0 0.0
        %2926 = vmatpush1.msra.mxu0 0.0
        %2927 = vmatprep.subr.mxu0 0.0
        %2928 = vmatpush1.msra.mxu0 0.0
        %2929 = vmatprep.subr.mxu0 0.0
        %2930 = vmatpush1.msra.mxu0 0.0
        %2931 = vmatprep.subr.mxu0 0.0
        %2932 = vmatpush1.msra.mxu0 0.0
        %2933 = vmatprep.subr.mxu0 0.0
        %2934 = vmatpush1.msra.mxu0 0.0
        %2935 = vmatprep.subr.mxu0 0.0
        %2936 = vmatpush1.msra.mxu0 0.0
        %2937 = vmatprep.subr.mxu0 0.0
        %2938 = vmatpush1.msra.mxu0 0.0
        %2939 = vmatprep.subr.mxu0 0.0
        %2940 = vmatpush1.msra.mxu0 0.0
        %2941 = vmatprep.subr.mxu0 0.0
        %2942 = vmatpush1.msra.mxu0 0.0
        %2943 = vmatprep.mubr.f32.mxu0 0.0
        %v2944 = vand.u32 %v2705, 4294901760
        %2945 = vmatmul.mubr.f32.gmra.mrb[0].mxu0 %v2944
        %v2946 = vpop.f32.mrb[0].mxu0
        %v2947 = vadd.f32 %v2795, %v2946
        %v2948 = vpop.f32.mrb[0].mxu0
        %v2949 = vadd.f32 %v2797, %v2948
        %2950 = vdwg.mxu0
        %v2951 = vand.u32 %v2681, 4294901760
        %v2952 = vsub.f32 %v2681, %v2951
        %2953 = vmatprep.subr.mxu0 %v2952
        %v2954 = vand.u32 %v2680, 4294901760
        %v2955 = vsub.f32 %v2680, %v2954
        %2956 = vmatpush1.msra.mxu0 %v2955
        %v2957 = vand.u32 %v2684, 4294901760
        %v2958 = vsub.f32 %v2684, %v2957
        %2959 = vmatprep.subr.mxu0 %v2958
        %v2960 = vand.u32 %v2683, 4294901760
        %v2961 = vsub.f32 %v2683, %v2960
        %2962 = vmatpush1.msra.mxu0 %v2961
        %v2963 = vand.u32 %v2687, 4294901760
        %v2964 = vsub.f32 %v2687, %v2963
        %2965 = vmatprep.subr.mxu0 %v2964
        %v2966 = vand.u32 %v2686, 4294901760
        %v2967 = vsub.f32 %v2686, %v2966
        %2968 = vmatpush1.msra.mxu0 %v2967
        %v2969 = vand.u32 %v2690, 4294901760
        %v2970 = vsub.f32 %v2690, %v2969
        %2971 = vmatprep.subr.mxu0 %v2970
        %v2972 = vand.u32 %v2689, 4294901760
        %v2973 = vsub.f32 %v2689, %v2972
        %2974 = vmatpush1.msra.mxu0 %v2973
        %v2975 = vand.u32 %v2693, 4294901760
        %v2976 = vsub.f32 %v2693, %v2975
        %2977 = vmatprep.subr.mxu0 %v2976
        %v2978 = vand.u32 %v2692, 4294901760
        %v2979 = vsub.f32 %v2692, %v2978
        %2980 = vmatpush1.msra.mxu0 %v2979
        %v2981 = vand.u32 %v2696, 4294901760
        %v2982 = vsub.f32 %v2696, %v2981
        %2983 = vmatprep.subr.mxu0 %v2982
        %v2984 = vand.u32 %v2695, 4294901760
        %v2985 = vsub.f32 %v2695, %v2984
        %2986 = vmatpush1.msra.mxu0 %v2985
        %v2987 = vand.u32 %v2699, 4294901760
        %v2988 = vsub.f32 %v2699, %v2987
        %2989 = vmatprep.subr.mxu0 %v2988
        %v2990 = vand.u32 %v2698, 4294901760
        %v2991 = vsub.f32 %v2698, %v2990
        %2992 = vmatpush1.msra.mxu0 %v2991
        %v2993 = vand.u32 %v2702, 4294901760
        %v2994 = vsub.f32 %v2702, %v2993
        %2995 = vmatprep.subr.mxu0 %v2994
        %v2996 = vand.u32 %v2701, 4294901760
        %v2997 = vsub.f32 %v2701, %v2996
        %2998 = vmatpush1.msra.mxu0 %v2997
        %2999 = vmatprep.subr.mxu0 0.0
        %3000 = vmatpush1.msra.mxu0 0.0
        %3001 = vmatprep.subr.mxu0 0.0
        %3002 = vmatpush1.msra.mxu0 0.0
        %3003 = vmatprep.subr.mxu0 0.0
        %3004 = vmatpush1.msra.mxu0 0.0
        %3005 = vmatprep.subr.mxu0 0.0
        %3006 = vmatpush1.msra.mxu0 0.0
        %3007 = vmatprep.subr.mxu0 0.0
        %3008 = vmatpush1.msra.mxu0 0.0
        %3009 = vmatprep.subr.mxu0 0.0
        %3010 = vmatpush1.msra.mxu0 0.0
        %3011 = vmatprep.subr.mxu0 0.0
        %3012 = vmatpush1.msra.mxu0 0.0
        %3013 = vmatprep.subr.mxu0 0.0
        %3014 = vmatpush1.msra.mxu0 0.0
        %3015 = vmatprep.subr.mxu0 0.0
        %3016 = vmatpush1.msra.mxu0 0.0
        %3017 = vmatprep.subr.mxu0 0.0
        %3018 = vmatpush1.msra.mxu0 0.0
        %3019 = vmatprep.subr.mxu0 0.0
        %3020 = vmatpush1.msra.mxu0 0.0
        %3021 = vmatprep.subr.mxu0 0.0
        %3022 = vmatpush1.msra.mxu0 0.0
        %3023 = vmatprep.subr.mxu0 0.0
        %3024 = vmatpush1.msra.mxu0 0.0
        %3025 = vmatprep.subr.mxu0 0.0
        %3026 = vmatpush1.msra.mxu0 0.0
        %3027 = vmatprep.subr.mxu0 0.0
        %3028 = vmatpush1.msra.mxu0 0.0
        %3029 = vmatprep.subr.mxu0 0.0
        %3030 = vmatpush1.msra.mxu0 0.0
        %3031 = vmatprep.subr.mxu0 0.0
        %3032 = vmatpush1.msra.mxu0 0.0
        %3033 = vmatprep.subr.mxu0 0.0
        %3034 = vmatpush1.msra.mxu0 0.0
        %3035 = vmatprep.subr.mxu0 0.0
        %3036 = vmatpush1.msra.mxu0 0.0
        %3037 = vmatprep.subr.mxu0 0.0
        %3038 = vmatpush1.msra.mxu0 0.0
        %3039 = vmatprep.subr.mxu0 0.0
        %3040 = vmatpush1.msra.mxu0 0.0
        %3041 = vmatprep.subr.mxu0 0.0
        %3042 = vmatpush1.msra.mxu0 0.0
        %3043 = vmatprep.subr.mxu0 0.0
        %3044 = vmatpush1.msra.mxu0 0.0
        %3045 = vmatprep.subr.mxu0 0.0
        %3046 = vmatpush1.msra.mxu0 0.0
        %3047 = vmatprep.mubr.f32.mxu0 0.0
        %v3048 = vand.u32 %v2705, 4294901760
        %v3049 = vsub.f32 %v2705, %v3048
        %3050 = vmatmul.mubr.f32.gmra.mrb[0].mxu0 %v3049
        %v3051 = vpop.f32.mrb[0].mxu0
        %v3052 = vadd.f32 %v2947, %v3051
        %v3053 = vpop.f32.mrb[0].mxu0
        %v3054 = vadd.f32 %v2949, %v3053
        %3055 = vdwg.mxu0
        %v3056 = vand.u32 %v2681, 4294901760
        %3057 = vmatprep.subr.mxu0 %v3056
        %v3058 = vand.u32 %v2680, 4294901760
        %3059 = vmatpush1.msra.mxu0 %v3058
        %v3060 = vand.u32 %v2684, 4294901760
        %3061 = vmatprep.subr.mxu0 %v3060
        %v3062 = vand.u32 %v2683, 4294901760
        %3063 = vmatpush1.msra.mxu0 %v3062
        %v3064 = vand.u32 %v2687, 4294901760
        %3065 = vmatprep.subr.mxu0 %v3064
        %v3066 = vand.u32 %v2686, 4294901760
        %3067 = vmatpush1.msra.mxu0 %v3066
        %v3068 = vand.u32 %v2690, 4294901760
        %3069 = vmatprep.subr.mxu0 %v3068
        %v3070 = vand.u32 %v2689, 4294901760
        %3071 = vmatpush1.msra.mxu0 %v3070
        %v3072 = vand.u32 %v2693, 4294901760
        %3073 = vmatprep.subr.mxu0 %v3072
        %v3074 = vand.u32 %v2692, 4294901760
        %3075 = vmatpush1.msra.mxu0 %v3074
        %v3076 = vand.u32 %v2696, 4294901760
        %3077 = vmatprep.subr.mxu0 %v3076
        %v3078 = vand.u32 %v2695, 4294901760
        %3079 = vmatpush1.msra.mxu0 %v3078
        %v3080 = vand.u32 %v2699, 4294901760
        %3081 = vmatprep.subr.mxu0 %v3080
        %v3082 = vand.u32 %v2698, 4294901760
        %3083 = vmatpush1.msra.mxu0 %v3082
        %v3084 = vand.u32 %v2702, 4294901760
        %3085 = vmatprep.subr.mxu0 %v3084
        %v3086 = vand.u32 %v2701, 4294901760
        %3087 = vmatpush1.msra.mxu0 %v3086
        %3088 = vmatprep.subr.mxu0 0.0
        %3089 = vmatpush1.msra.mxu0 0.0
        %3090 = vmatprep.subr.mxu0 0.0
        %3091 = vmatpush1.msra.mxu0 0.0
        %3092 = vmatprep.subr.mxu0 0.0
        %3093 = vmatpush1.msra.mxu0 0.0
        %3094 = vmatprep.subr.mxu0 0.0
        %3095 = vmatpush1.msra.mxu0 0.0
        %3096 = vmatprep.subr.mxu0 0.0
        %3097 = vmatpush1.msra.mxu0 0.0
        %3098 = vmatprep.subr.mxu0 0.0
        %3099 = vmatpush1.msra.mxu0 0.0
        %3100 = vmatprep.subr.mxu0 0.0
        %3101 = vmatpush1.msra.mxu0 0.0
        %3102 = vmatprep.subr.mxu0 0.0
        %3103 = vmatpush1.msra.mxu0 0.0
        %3104 = vmatprep.subr.mxu0 0.0
        %3105 = vmatpush1.msra.mxu0 0.0
        %3106 = vmatprep.subr.mxu0 0.0
        %3107 = vmatpush1.msra.mxu0 0.0
        %3108 = vmatprep.subr.mxu0 0.0
        %3109 = vmatpush1.msra.mxu0 0.0
        %3110 = vmatprep.subr.mxu0 0.0
        %3111 = vmatpush1.msra.mxu0 0.0
        %3112 = vmatprep.subr.mxu0 0.0
        %3113 = vmatpush1.msra.mxu0 0.0
        %3114 = vmatprep.subr.mxu0 0.0
        %3115 = vmatpush1.msra.mxu0 0.0
        %3116 = vmatprep.subr.mxu0 0.0
        %3117 = vmatpush1.msra.mxu0 0.0
        %3118 = vmatprep.subr.mxu0 0.0
        %3119 = vmatpush1.msra.mxu0 0.0
        %3120 = vmatprep.subr.mxu0 0.0
        %3121 = vmatpush1.msra.mxu0 0.0
        %3122 = vmatprep.subr.mxu0 0.0
        %3123 = vmatpush1.msra.mxu0 0.0
        %3124 = vmatprep.subr.mxu0 0.0
        %3125 = vmatpush1.msra.mxu0 0.0
        %3126 = vmatprep.subr.mxu0 0.0
        %3127 = vmatpush1.msra.mxu0 0.0
        %3128 = vmatprep.subr.mxu0 0.0
        %3129 = vmatpush1.msra.mxu0 0.0
        %3130 = vmatprep.subr.mxu0 0.0
        %3131 = vmatpush1.msra.mxu0 0.0
        %3132 = vmatprep.subr.mxu0 0.0
        %3133 = vmatpush1.msra.mxu0 0.0
        %3134 = vmatprep.subr.mxu0 0.0
        %3135 = vmatpush1.msra.mxu0 0.0
        %3136 = vmatprep.mubr.f32.mxu0 0.0
        %v3137 = vand.u32 %v2705, 4294901760
        %v3138 = vsub.f32 %v2705, %v3137
        %v3139 = vand.u32 %v3138, 4294901760
        %3140 = vmatmul.mubr.f32.gmra.mrb[0].mxu0 %v3139
        %v3141 = vpop.f32.mrb[0].mxu0
        %v3142 = vadd.f32 %v3052, %v3141
        %v3143 = vpop.f32.mrb[0].mxu0
        %v3144 = vadd.f32 %v3054, %v3143
        %3145 = vdwg.mxu0
        %v3146 = vand.u32 %v2681, 4294901760
        %v3147 = vsub.f32 %v2681, %v3146
        %v3148 = vand.u32 %v3147, 4294901760
        %3149 = vmatprep.subr.mxu0 %v3148
        %v3150 = vand.u32 %v2680, 4294901760
        %v3151 = vsub.f32 %v2680, %v3150
        %v3152 = vand.u32 %v3151, 4294901760
        %3153 = vmatpush1.msra.mxu0 %v3152
        %v3154 = vand.u32 %v2684, 4294901760
        %v3155 = vsub.f32 %v2684, %v3154
        %v3156 = vand.u32 %v3155, 4294901760
        %3157 = vmatprep.subr.mxu0 %v3156
        %v3158 = vand.u32 %v2683, 4294901760
        %v3159 = vsub.f32 %v2683, %v3158
        %v3160 = vand.u32 %v3159, 4294901760
        %3161 = vmatpush1.msra.mxu0 %v3160
        %v3162 = vand.u32 %v2687, 4294901760
        %v3163 = vsub.f32 %v2687, %v3162
        %v3164 = vand.u32 %v3163, 4294901760
        %3165 = vmatprep.subr.mxu0 %v3164
        %v3166 = vand.u32 %v2686, 4294901760
        %v3167 = vsub.f32 %v2686, %v3166
        %v3168 = vand.u32 %v3167, 4294901760
        %3169 = vmatpush1.msra.mxu0 %v3168
        %v3170 = vand.u32 %v2690, 4294901760
        %v3171 = vsub.f32 %v2690, %v3170
        %v3172 = vand.u32 %v3171, 4294901760
        %3173 = vmatprep.subr.mxu0 %v3172
        %v3174 = vand.u32 %v2689, 4294901760
        %v3175 = vsub.f32 %v2689, %v3174
        %v3176 = vand.u32 %v3175, 4294901760
        %3177 = vmatpush1.msra.mxu0 %v3176
        %v3178 = vand.u32 %v2693, 4294901760
        %v3179 = vsub.f32 %v2693, %v3178
        %v3180 = vand.u32 %v3179, 4294901760
        %3181 = vmatprep.subr.mxu0 %v3180
        %v3182 = vand.u32 %v2692, 4294901760
        %v3183 = vsub.f32 %v2692, %v3182
        %v3184 = vand.u32 %v3183, 4294901760
        %3185 = vmatpush1.msra.mxu0 %v3184
        %v3186 = vand.u32 %v2696, 4294901760
        %v3187 = vsub.f32 %v2696, %v3186
        %v3188 = vand.u32 %v3187, 4294901760
        %3189 = vmatprep.subr.mxu0 %v3188
        %v3190 = vand.u32 %v2695, 4294901760
        %v3191 = vsub.f32 %v2695, %v3190
        %v3192 = vand.u32 %v3191, 4294901760
        %3193 = vmatpush1.msra.mxu0 %v3192
        %v3194 = vand.u32 %v2699, 4294901760
        %v3195 = vsub.f32 %v2699, %v3194
        %v3196 = vand.u32 %v3195, 4294901760
        %3197 = vmatprep.subr.mxu0 %v3196
        %v3198 = vand.u32 %v2698, 4294901760
        %v3199 = vsub.f32 %v2698, %v3198
        %v3200 = vand.u32 %v3199, 4294901760
        %3201 = vmatpush1.msra.mxu0 %v3200
        %v3202 = vand.u32 %v2702, 4294901760
        %v3203 = vsub.f32 %v2702, %v3202
        %v3204 = vand.u32 %v3203, 4294901760
        %3205 = vmatprep.subr.mxu0 %v3204
        %v3206 = vand.u32 %v2701, 4294901760
        %v3207 = vsub.f32 %v2701, %v3206
        %v3208 = vand.u32 %v3207, 4294901760
        %3209 = vmatpush1.msra.mxu0 %v3208
        %3210 = vmatprep.subr.mxu0 0.0
        %3211 = vmatpush1.msra.mxu0 0.0
        %3212 = vmatprep.subr.mxu0 0.0
        %3213 = vmatpush1.msra.mxu0 0.0
        %3214 = vmatprep.subr.mxu0 0.0
        %3215 = vmatpush1.msra.mxu0 0.0
        %3216 = vmatprep.subr.mxu0 0.0
        %3217 = vmatpush1.msra.mxu0 0.0
        %3218 = vmatprep.subr.mxu0 0.0
        %3219 = vmatpush1.msra.mxu0 0.0
        %3220 = vmatprep.subr.mxu0 0.0
        %3221 = vmatpush1.msra.mxu0 0.0
        %3222 = vmatprep.subr.mxu0 0.0
        %3223 = vmatpush1.msra.mxu0 0.0
        %3224 = vmatprep.subr.mxu0 0.0
        %3225 = vmatpush1.msra.mxu0 0.0
        %3226 = vmatprep.subr.mxu0 0.0
        %3227 = vmatpush1.msra.mxu0 0.0
        %3228 = vmatprep.subr.mxu0 0.0
        %3229 = vmatpush1.msra.mxu0 0.0
        %3230 = vmatprep.subr.mxu0 0.0
        %3231 = vmatpush1.msra.mxu0 0.0
        %3232 = vmatprep.subr.mxu0 0.0
        %3233 = vmatpush1.msra.mxu0 0.0
        %3234 = vmatprep.subr.mxu0 0.0
        %3235 = vmatpush1.msra.mxu0 0.0
        %3236 = vmatprep.subr.mxu0 0.0
        %3237 = vmatpush1.msra.mxu0 0.0
        %3238 = vmatprep.subr.mxu0 0.0
        %3239 = vmatpush1.msra.mxu0 0.0
        %3240 = vmatprep.subr.mxu0 0.0
        %3241 = vmatpush1.msra.mxu0 0.0
        %3242 = vmatprep.subr.mxu0 0.0
        %3243 = vmatpush1.msra.mxu0 0.0
        %3244 = vmatprep.subr.mxu0 0.0
        %3245 = vmatpush1.msra.mxu0 0.0
        %3246 = vmatprep.subr.mxu0 0.0
        %3247 = vmatpush1.msra.mxu0 0.0
        %3248 = vmatprep.subr.mxu0 0.0
        %3249 = vmatpush1.msra.mxu0 0.0
        %3250 = vmatprep.subr.mxu0 0.0
        %3251 = vmatpush1.msra.mxu0 0.0
        %3252 = vmatprep.subr.mxu0 0.0
        %3253 = vmatpush1.msra.mxu0 0.0
        %3254 = vmatprep.subr.mxu0 0.0
        %3255 = vmatpush1.msra.mxu0 0.0
        %3256 = vmatprep.subr.mxu0 0.0
        %3257 = vmatpush1.msra.mxu0 0.0
        %3258 = vmatprep.mubr.f32.mxu0 0.0
        %v3259 = vand.u32 %v2705, 4294901760
        %3260 = vmatmul.mubr.f32.gmra.mrb[0].mxu0 %v3259
        %v3261 = vpop.f32.mrb[0].mxu0
        %v3262 = vadd.f32 %v3142, %v3261
        %v3263 = vpop.f32.mrb[0].mxu0
        %v3264 = vadd.f32 %v3144, %v3263
        %3265 = vdwg.mxu0
        %v3266 = vand.u32 %v2681, 4294901760
        %3267 = vmatprep.subr.mxu0 %v3266
        %v3268 = vand.u32 %v2680, 4294901760
        %3269 = vmatpush1.msra.mxu0 %v3268
        %v3270 = vand.u32 %v2684, 4294901760
        %3271 = vmatprep.subr.mxu0 %v3270
        %v3272 = vand.u32 %v2683, 4294901760
        %3273 = vmatpush1.msra.mxu0 %v3272
        %v3274 = vand.u32 %v2687, 4294901760
        %3275 = vmatprep.subr.mxu0 %v3274
        %v3276 = vand.u32 %v2686, 4294901760
        %3277 = vmatpush1.msra.mxu0 %v3276
        %v3278 = vand.u32 %v2690, 4294901760
        %3279 = vmatprep.subr.mxu0 %v3278
        %v3280 = vand.u32 %v2689, 4294901760
        %3281 = vmatpush1.msra.mxu0 %v3280
        %v3282 = vand.u32 %v2693, 4294901760
        %3283 = vmatprep.subr.mxu0 %v3282
        %v3284 = vand.u32 %v2692, 4294901760
        %3285 = vmatpush1.msra.mxu0 %v3284
        %v3286 = vand.u32 %v2696, 4294901760
        %3287 = vmatprep.subr.mxu0 %v3286
        %v3288 = vand.u32 %v2695, 4294901760
        %3289 = vmatpush1.msra.mxu0 %v3288
        %v3290 = vand.u32 %v2699, 4294901760
        %3291 = vmatprep.subr.mxu0 %v3290
        %v3292 = vand.u32 %v2698, 4294901760
        %3293 = vmatpush1.msra.mxu0 %v3292
        %v3294 = vand.u32 %v2702, 4294901760
        %3295 = vmatprep.subr.mxu0 %v3294
        %v3296 = vand.u32 %v2701, 4294901760
        %3297 = vmatpush1.msra.mxu0 %v3296
        %3298 = vmatprep.subr.mxu0 0.0
        %3299 = vmatpush1.msra.mxu0 0.0
        %3300 = vmatprep.subr.mxu0 0.0
        %3301 = vmatpush1.msra.mxu0 0.0
        %3302 = vmatprep.subr.mxu0 0.0
        %3303 = vmatpush1.msra.mxu0 0.0
        %3304 = vmatprep.subr.mxu0 0.0
        %3305 = vmatpush1.msra.mxu0 0.0
        %3306 = vmatprep.subr.mxu0 0.0
        %3307 = vmatpush1.msra.mxu0 0.0
        %3308 = vmatprep.subr.mxu0 0.0
        %3309 = vmatpush1.msra.mxu0 0.0
        %3310 = vmatprep.subr.mxu0 0.0
        %3311 = vmatpush1.msra.mxu0 0.0
        %3312 = vmatprep.subr.mxu0 0.0
        %3313 = vmatpush1.msra.mxu0 0.0
        %3314 = vmatprep.subr.mxu0 0.0
        %3315 = vmatpush1.msra.mxu0 0.0
        %3316 = vmatprep.subr.mxu0 0.0
        %3317 = vmatpush1.msra.mxu0 0.0
        %3318 = vmatprep.subr.mxu0 0.0
        %3319 = vmatpush1.msra.mxu0 0.0
        %3320 = vmatprep.subr.mxu0 0.0
        %3321 = vmatpush1.msra.mxu0 0.0
        %3322 = vmatprep.subr.mxu0 0.0
        %3323 = vmatpush1.msra.mxu0 0.0
        %3324 = vmatprep.subr.mxu0 0.0
        %3325 = vmatpush1.msra.mxu0 0.0
        %3326 = vmatprep.subr.mxu0 0.0
        %3327 = vmatpush1.msra.mxu0 0.0
        %3328 = vmatprep.subr.mxu0 0.0
        %3329 = vmatpush1.msra.mxu0 0.0
        %3330 = vmatprep.subr.mxu0 0.0
        %3331 = vmatpush1.msra.mxu0 0.0
        %3332 = vmatprep.subr.mxu0 0.0
        %3333 = vmatpush1.msra.mxu0 0.0
        %3334 = vmatprep.subr.mxu0 0.0
        %3335 = vmatpush1.msra.mxu0 0.0
        %3336 = vmatprep.subr.mxu0 0.0
        %3337 = vmatpush1.msra.mxu0 0.0
        %3338 = vmatprep.subr.mxu0 0.0
        %3339 = vmatpush1.msra.mxu0 0.0
        %3340 = vmatprep.subr.mxu0 0.0
        %3341 = vmatpush1.msra.mxu0 0.0
        %3342 = vmatprep.subr.mxu0 0.0
        %3343 = vmatpush1.msra.mxu0 0.0
        %3344 = vmatprep.subr.mxu0 0.0
        %3345 = vmatpush1.msra.mxu0 0.0
        %3346 = vmatprep.mubr.f32.mxu0 0.0
        %v3347 = vand.u32 %v2705, 4294901760
        %3348 = vmatmul.mubr.f32.gmra.mrb[0].mxu0 %v3347
        %v3349 = vpop.f32.mrb[0].mxu0
        %v3350 = vadd.f32 %v3262, %v3349
        %v3351 = vpop.f32.mrb[0].mxu0
        %v3352 = vadd.f32 %v3264, %v3351
        %3353 = vdwg.mxu0
        %3354 = vmatprep.subr.mxu0 0.0
        %v3355 = vand.u32 %v2682, 4294901760
        %3356 = vmatpush1.msra.mxu0 %v3355
        %3357 = vmatprep.subr.mxu0 0.0
        %v3358 = vand.u32 %v2685, 4294901760
        %3359 = vmatpush1.msra.mxu0 %v3358
        %3360 = vmatprep.subr.mxu0 0.0
        %v3361 = vand.u32 %v2688, 4294901760
        %3362 = vmatpush1.msra.mxu0 %v3361
        %3363 = vmatprep.subr.mxu0 0.0
        %v3364 = vand.u32 %v2691, 4294901760
        %3365 = vmatpush1.msra.mxu0 %v3364
        %3366 = vmatprep.subr.mxu0 0.0
        %v3367 = vand.u32 %v2694, 4294901760
        %3368 = vmatpush1.msra.mxu0 %v3367
        %3369 = vmatprep.subr.mxu0 0.0
        %v3370 = vand.u32 %v2697, 4294901760
        %3371 = vmatpush1.msra.mxu0 %v3370
        %3372 = vmatprep.subr.mxu0 0.0
        %v3373 = vand.u32 %v2700, 4294901760
        %3374 = vmatpush1.msra.mxu0 %v3373
        %3375 = vmatprep.subr.mxu0 0.0
        %v3376 = vand.u32 %v2703, 4294901760
        %3377 = vmatpush1.msra.mxu0 %v3376
        %3378 = vmatprep.subr.mxu0 0.0
        %3379 = vmatpush1.msra.mxu0 0.0
        %3380 = vmatprep.subr.mxu0 0.0
        %3381 = vmatpush1.msra.mxu0 0.0
        %3382 = vmatprep.subr.mxu0 0.0
        %3383 = vmatpush1.msra.mxu0 0.0
        %3384 = vmatprep.subr.mxu0 0.0
        %3385 = vmatpush1.msra.mxu0 0.0
        %3386 = vmatprep.subr.mxu0 0.0
        %3387 = vmatpush1.msra.mxu0 0.0
        %3388 = vmatprep.subr.mxu0 0.0
        %3389 = vmatpush1.msra.mxu0 0.0
        %3390 = vmatprep.subr.mxu0 0.0
        %3391 = vmatpush1.msra.mxu0 0.0
        %3392 = vmatprep.subr.mxu0 0.0
        %3393 = vmatpush1.msra.mxu0 0.0
        %3394 = vmatprep.subr.mxu0 0.0
        %3395 = vmatpush1.msra.mxu0 0.0
        %3396 = vmatprep.subr.mxu0 0.0
        %3397 = vmatpush1.msra.mxu0 0.0
        %3398 = vmatprep.subr.mxu0 0.0
        %3399 = vmatpush1.msra.mxu0 0.0
        %3400 = vmatprep.subr.mxu0 0.0
        %3401 = vmatpush1.msra.mxu0 0.0
        %3402 = vmatprep.subr.mxu0 0.0
        %3403 = vmatpush1.msra.mxu0 0.0
        %3404 = vmatprep.subr.mxu0 0.0
        %3405 = vmatpush1.msra.mxu0 0.0
        %3406 = vmatprep.subr.mxu0 0.0
        %3407 = vmatpush1.msra.mxu0 0.0
        %3408 = vmatprep.subr.mxu0 0.0
        %3409 = vmatpush1.msra.mxu0 0.0
        %3410 = vmatprep.subr.mxu0 0.0
        %3411 = vmatpush1.msra.mxu0 0.0
        %3412 = vmatprep.subr.mxu0 0.0
        %3413 = vmatpush1.msra.mxu0 0.0
        %3414 = vmatprep.subr.mxu0 0.0
        %3415 = vmatpush1.msra.mxu0 0.0
        %3416 = vmatprep.subr.mxu0 0.0
        %3417 = vmatpush1.msra.mxu0 0.0
        %3418 = vmatprep.subr.mxu0 0.0
        %3419 = vmatpush1.msra.mxu0 0.0
        %3420 = vmatprep.subr.mxu0 0.0
        %3421 = vmatpush1.msra.mxu0 0.0
        %3422 = vmatprep.subr.mxu0 0.0
        %3423 = vmatpush1.msra.mxu0 0.0
        %3424 = vmatprep.subr.mxu0 0.0
        %3425 = vmatpush1.msra.mxu0 0.0
        %3426 = vmatprep.mubr.f32.mxu0 0.0
        %v3427 = vand.u32 %v2705, 4294901760
        %v3428 = vsub.f32 %v2705, %v3427
        %v3429 = vand.u32 %v3428, 4294901760
        %v3430 = vsub.f32 %v3428, %v3429
        %v3431 = vand.u32 %v3430, 4294901760
        %3432 = vmatmul.mubr.f32.gmra.mrb[0].mxu0 %v3431
        %v3433 = vpop.f32.mrb[0].mxu0
        %v3434 = vadd.f32 0.0, %v3433
        %v3435 = vpop.f32.mrb[0].mxu0
        %3436 = vdwg.mxu0
        %3437 = vmatprep.subr.mxu0 0.0
        %v3438 = vand.u32 %v2682, 4294901760
        %v3439 = vsub.f32 %v2682, %v3438
        %v3440 = vand.u32 %v3439, 4294901760
        %v3441 = vsub.f32 %v3439, %v3440
        %v3442 = vand.u32 %v3441, 4294901760
        %3443 = vmatpush1.msra.mxu0 %v3442
        %3444 = vmatprep.subr.mxu0 0.0
        %v3445 = vand.u32 %v2685, 4294901760
        %v3446 = vsub.f32 %v2685, %v3445
        %v3447 = vand.u32 %v3446, 4294901760
        %v3448 = vsub.f32 %v3446, %v3447
        %v3449 = vand.u32 %v3448, 4294901760
        %3450 = vmatpush1.msra.mxu0 %v3449
        %3451 = vmatprep.subr.mxu0 0.0
        %v3452 = vand.u32 %v2688, 4294901760
        %v3453 = vsub.f32 %v2688, %v3452
        %v3454 = vand.u32 %v3453, 4294901760
        %v3455 = vsub.f32 %v3453, %v3454
        %v3456 = vand.u32 %v3455, 4294901760
        %3457 = vmatpush1.msra.mxu0 %v3456
        %3458 = vmatprep.subr.mxu0 0.0
        %v3459 = vand.u32 %v2691, 4294901760
        %v3460 = vsub.f32 %v2691, %v3459
        %v3461 = vand.u32 %v3460, 4294901760
        %v3462 = vsub.f32 %v3460, %v3461
        %v3463 = vand.u32 %v3462, 4294901760
        %3464 = vmatpush1.msra.mxu0 %v3463
        %3465 = vmatprep.subr.mxu0 0.0
        %v3466 = vand.u32 %v2694, 4294901760
        %v3467 = vsub.f32 %v2694, %v3466
        %v3468 = vand.u32 %v3467, 4294901760
        %v3469 = vsub.f32 %v3467, %v3468
        %v3470 = vand.u32 %v3469, 4294901760
        %3471 = vmatpush1.msra.mxu0 %v3470
        %3472 = vmatprep.subr.mxu0 0.0
        %v3473 = vand.u32 %v2697, 4294901760
        %v3474 = vsub.f32 %v2697, %v3473
        %v3475 = vand.u32 %v3474, 4294901760
        %v3476 = vsub.f32 %v3474, %v3475
        %v3477 = vand.u32 %v3476, 4294901760
        %3478 = vmatpush1.msra.mxu0 %v3477
        %3479 = vmatprep.subr.mxu0 0.0
        %v3480 = vand.u32 %v2700, 4294901760
        %v3481 = vsub.f32 %v2700, %v3480
        %v3482 = vand.u32 %v3481, 4294901760
        %v3483 = vsub.f32 %v3481, %v3482
        %v3484 = vand.u32 %v3483, 4294901760
        %3485 = vmatpush1.msra.mxu0 %v3484
        %3486 = vmatprep.subr.mxu0 0.0
        %v3487 = vand.u32 %v2703, 4294901760
        %v3488 = vsub.f32 %v2703, %v3487
        %v3489 = vand.u32 %v3488, 4294901760
        %v3490 = vsub.f32 %v3488, %v3489
        %v3491 = vand.u32 %v3490, 4294901760
        %3492 = vmatpush1.msra.mxu0 %v3491
        %3493 = vmatprep.subr.mxu0 0.0
        %3494 = vmatpush1.msra.mxu0 0.0
        %3495 = vmatprep.subr.mxu0 0.0
        %3496 = vmatpush1.msra.mxu0 0.0
        %3497 = vmatprep.subr.mxu0 0.0
        %3498 = vmatpush1.msra.mxu0 0.0
        %3499 = vmatprep.subr.mxu0 0.0
        %3500 = vmatpush1.msra.mxu0 0.0
        %3501 = vmatprep.subr.mxu0 0.0
        %3502 = vmatpush1.msra.mxu0 0.0
        %3503 = vmatprep.subr.mxu0 0.0
        %3504 = vmatpush1.msra.mxu0 0.0
        %3505 = vmatprep.subr.mxu0 0.0
        %3506 = vmatpush1.msra.mxu0 0.0
        %3507 = vmatprep.subr.mxu0 0.0
        %3508 = vmatpush1.msra.mxu0 0.0
        %3509 = vmatprep.subr.mxu0 0.0
        %3510 = vmatpush1.msra.mxu0 0.0
        %3511 = vmatprep.subr.mxu0 0.0
        %3512 = vmatpush1.msra.mxu0 0.0
        %3513 = vmatprep.subr.mxu0 0.0
        %3514 = vmatpush1.msra.mxu0 0.0
        %3515 = vmatprep.subr.mxu0 0.0
        %3516 = vmatpush1.msra.mxu0 0.0
        %3517 = vmatprep.subr.mxu0 0.0
        %3518 = vmatpush1.msra.mxu0 0.0
        %3519 = vmatprep.subr.mxu0 0.0
        %3520 = vmatpush1.msra.mxu0 0.0
        %3521 = vmatprep.subr.mxu0 0.0
        %3522 = vmatpush1.msra.mxu0 0.0
        %3523 = vmatprep.subr.mxu0 0.0
        %3524 = vmatpush1.msra.mxu0 0.0
        %3525 = vmatprep.subr.mxu0 0.0
        %3526 = vmatpush1.msra.mxu0 0.0
        %3527 = vmatprep.subr.mxu0 0.0
        %3528 = vmatpush1.msra.mxu0 0.0
        %3529 = vmatprep.subr.mxu0 0.0
        %3530 = vmatpush1.msra.mxu0 0.0
        %3531 = vmatprep.subr.mxu0 0.0
        %3532 = vmatpush1.msra.mxu0 0.0
        %3533 = vmatprep.subr.mxu0 0.0
        %3534 = vmatpush1.msra.mxu0 0.0
        %3535 = vmatprep.subr.mxu0 0.0
        %3536 = vmatpush1.msra.mxu0 0.0
        %3537 = vmatprep.subr.mxu0 0.0
        %3538 = vmatpush1.msra.mxu0 0.0
        %3539 = vmatprep.subr.mxu0 0.0
        %3540 = vmatpush1.msra.mxu0 0.0
        %3541 = vmatprep.mubr.f32.mxu0 0.0
        %v3542 = vand.u32 %v2705, 4294901760
        %3543 = vmatmul.mubr.f32.gmra.mrb[0].mxu0 %v3542
        %v3544 = vpop.f32.mrb[0].mxu0
        %v3545 = vadd.f32 %v3434, %v3544
        %v3546 = vpop.f32.mrb[0].mxu0
        %3547 = vdwg.mxu0
        %3548 = vmatprep.subr.mxu0 0.0
        %v3549 = vand.u32 %v2682, 4294901760
        %v3550 = vsub.f32 %v2682, %v3549
        %3551 = vmatpush1.msra.mxu0 %v3550
        %3552 = vmatprep.subr.mxu0 0.0
        %v3553 = vand.u32 %v2685, 4294901760
        %v3554 = vsub.f32 %v2685, %v3553
        %3555 = vmatpush1.msra.mxu0 %v3554
        %3556 = vmatprep.subr.mxu0 0.0
        %v3557 = vand.u32 %v2688, 4294901760
        %v3558 = vsub.f32 %v2688, %v3557
        %3559 = vmatpush1.msra.mxu0 %v3558
        %3560 = vmatprep.subr.mxu0 0.0
        %v3561 = vand.u32 %v2691, 4294901760
        %v3562 = vsub.f32 %v2691, %v3561
        %3563 = vmatpush1.msra.mxu0 %v3562
        %3564 = vmatprep.subr.mxu0 0.0
        %v3565 = vand.u32 %v2694, 4294901760
        %v3566 = vsub.f32 %v2694, %v3565
        %3567 = vmatpush1.msra.mxu0 %v3566
        %3568 = vmatprep.subr.mxu0 0.0
        %v3569 = vand.u32 %v2697, 4294901760
        %v3570 = vsub.f32 %v2697, %v3569
        %3571 = vmatpush1.msra.mxu0 %v3570
        %3572 = vmatprep.subr.mxu0 0.0
        %v3573 = vand.u32 %v2700, 4294901760
        %v3574 = vsub.f32 %v2700, %v3573
        %3575 = vmatpush1.msra.mxu0 %v3574
        %3576 = vmatprep.subr.mxu0 0.0
        %v3577 = vand.u32 %v2703, 4294901760
        %v3578 = vsub.f32 %v2703, %v3577
        %3579 = vmatpush1.msra.mxu0 %v3578
        %3580 = vmatprep.subr.mxu0 0.0
        %3581 = vmatpush1.msra.mxu0 0.0
        %3582 = vmatprep.subr.mxu0 0.0
        %3583 = vmatpush1.msra.mxu0 0.0
        %3584 = vmatprep.subr.mxu0 0.0
        %3585 = vmatpush1.msra.mxu0 0.0
        %3586 = vmatprep.subr.mxu0 0.0
        %3587 = vmatpush1.msra.mxu0 0.0
        %3588 = vmatprep.subr.mxu0 0.0
        %3589 = vmatpush1.msra.mxu0 0.0
        %3590 = vmatprep.subr.mxu0 0.0
        %3591 = vmatpush1.msra.mxu0 0.0
        %3592 = vmatprep.subr.mxu0 0.0
        %3593 = vmatpush1.msra.mxu0 0.0
        %3594 = vmatprep.subr.mxu0 0.0
        %3595 = vmatpush1.msra.mxu0 0.0
        %3596 = vmatprep.subr.mxu0 0.0
        %3597 = vmatpush1.msra.mxu0 0.0
        %3598 = vmatprep.subr.mxu0 0.0
        %3599 = vmatpush1.msra.mxu0 0.0
        %3600 = vmatprep.subr.mxu0 0.0
        %3601 = vmatpush1.msra.mxu0 0.0
        %3602 = vmatprep.subr.mxu0 0.0
        %3603 = vmatpush1.msra.mxu0 0.0
        %3604 = vmatprep.subr.mxu0 0.0
        %3605 = vmatpush1.msra.mxu0 0.0
        %3606 = vmatprep.subr.mxu0 0.0
        %3607 = vmatpush1.msra.mxu0 0.0
        %3608 = vmatprep.subr.mxu0 0.0
        %3609 = vmatpush1.msra.mxu0 0.0
        %3610 = vmatprep.subr.mxu0 0.0
        %3611 = vmatpush1.msra.mxu0 0.0
        %3612 = vmatprep.subr.mxu0 0.0
        %3613 = vmatpush1.msra.mxu0 0.0
        %3614 = vmatprep.subr.mxu0 0.0
        %3615 = vmatpush1.msra.mxu0 0.0
        %3616 = vmatprep.subr.mxu0 0.0
        %3617 = vmatpush1.msra.mxu0 0.0
        %3618 = vmatprep.subr.mxu0 0.0
        %3619 = vmatpush1.msra.mxu0 0.0
        %3620 = vmatprep.subr.mxu0 0.0
        %3621 = vmatpush1.msra.mxu0 0.0
        %3622 = vmatprep.subr.mxu0 0.0
        %3623 = vmatpush1.msra.mxu0 0.0
        %3624 = vmatprep.subr.mxu0 0.0
        %3625 = vmatpush1.msra.mxu0 0.0
        %3626 = vmatprep.subr.mxu0 0.0
        %3627 = vmatpush1.msra.mxu0 0.0
        %3628 = vmatprep.mubr.f32.mxu0 0.0
        %v3629 = vand.u32 %v2705, 4294901760
        %v3630 = vsub.f32 %v2705, %v3629
        %3631 = vmatmul.mubr.f32.gmra.mrb[0].mxu0 %v3630
        %v3632 = vpop.f32.mrb[0].mxu0
        %v3633 = vadd.f32 %v3545, %v3632
        %v3634 = vpop.f32.mrb[0].mxu0
        %3635 = vdwg.mxu0
        %3636 = vmatprep.subr.mxu0 0.0
        %v3637 = vand.u32 %v2682, 4294901760
        %3638 = vmatpush1.msra.mxu0 %v3637
        %3639 = vmatprep.subr.mxu0 0.0
        %v3640 = vand.u32 %v2685, 4294901760
        %3641 = vmatpush1.msra.mxu0 %v3640
        %3642 = vmatprep.subr.mxu0 0.0
        %v3643 = vand.u32 %v2688, 4294901760
        %3644 = vmatpush1.msra.mxu0 %v3643
        %3645 = vmatprep.subr.mxu0 0.0
        %v3646 = vand.u32 %v2691, 4294901760
        %3647 = vmatpush1.msra.mxu0 %v3646
        %3648 = vmatprep.subr.mxu0 0.0
        %v3649 = vand.u32 %v2694, 4294901760
        %3650 = vmatpush1.msra.mxu0 %v3649
        %3651 = vmatprep.subr.mxu0 0.0
        %v3652 = vand.u32 %v2697, 4294901760
        %3653 = vmatpush1.msra.mxu0 %v3652
        %3654 = vmatprep.subr.mxu0 0.0
        %v3655 = vand.u32 %v2700, 4294901760
        %3656 = vmatpush1.msra.mxu0 %v3655
        %3657 = vmatprep.subr.mxu0 0.0
        %v3658 = vand.u32 %v2703, 4294901760
        %3659 = vmatpush1.msra.mxu0 %v3658
        %3660 = vmatprep.subr.mxu0 0.0
        %3661 = vmatpush1.msra.mxu0 0.0
        %3662 = vmatprep.subr.mxu0 0.0
        %3663 = vmatpush1.msra.mxu0 0.0
        %3664 = vmatprep.subr.mxu0 0.0
        %3665 = vmatpush1.msra.mxu0 0.0
        %3666 = vmatprep.subr.mxu0 0.0
        %3667 = vmatpush1.msra.mxu0 0.0
        %3668 = vmatprep.subr.mxu0 0.0
        %3669 = vmatpush1.msra.mxu0 0.0
        %3670 = vmatprep.subr.mxu0 0.0
        %3671 = vmatpush1.msra.mxu0 0.0
        %3672 = vmatprep.subr.mxu0 0.0
        %3673 = vmatpush1.msra.mxu0 0.0
        %3674 = vmatprep.subr.mxu0 0.0
        %3675 = vmatpush1.msra.mxu0 0.0
        %3676 = vmatprep.subr.mxu0 0.0
        %3677 = vmatpush1.msra.mxu0 0.0
        %3678 = vmatprep.subr.mxu0 0.0
        %3679 = vmatpush1.msra.mxu0 0.0
        %3680 = vmatprep.subr.mxu0 0.0
        %3681 = vmatpush1.msra.mxu0 0.0
        %3682 = vmatprep.subr.mxu0 0.0
        %3683 = vmatpush1.msra.mxu0 0.0
        %3684 = vmatprep.subr.mxu0 0.0
        %3685 = vmatpush1.msra.mxu0 0.0
        %3686 = vmatprep.subr.mxu0 0.0
        %3687 = vmatpush1.msra.mxu0 0.0
        %3688 = vmatprep.subr.mxu0 0.0
        %3689 = vmatpush1.msra.mxu0 0.0
        %3690 = vmatprep.subr.mxu0 0.0
        %3691 = vmatpush1.msra.mxu0 0.0
        %3692 = vmatprep.subr.mxu0 0.0
        %3693 = vmatpush1.msra.mxu0 0.0
        %3694 = vmatprep.subr.mxu0 0.0
        %3695 = vmatpush1.msra.mxu0 0.0
        %3696 = vmatprep.subr.mxu0 0.0
        %3697 = vmatpush1.msra.mxu0 0.0
        %3698 = vmatprep.subr.mxu0 0.0
        %3699 = vmatpush1.msra.mxu0 0.0
        %3700 = vmatprep.subr.mxu0 0.0
        %3701 = vmatpush1.msra.mxu0 0.0
        %3702 = vmatprep.subr.mxu0 0.0
        %3703 = vmatpush1.msra.mxu0 0.0
        %3704 = vmatprep.subr.mxu0 0.0
        %3705 = vmatpush1.msra.mxu0 0.0
        %3706 = vmatprep.subr.mxu0 0.0
        %3707 = vmatpush1.msra.mxu0 0.0
        %3708 = vmatprep.mubr.f32.mxu0 0.0
        %v3709 = vand.u32 %v2705, 4294901760
        %v3710 = vsub.f32 %v2705, %v3709
        %v3711 = vand.u32 %v3710, 4294901760
        %3712 = vmatmul.mubr.f32.gmra.mrb[0].mxu0 %v3711
        %v3713 = vpop.f32.mrb[0].mxu0
        %v3714 = vadd.f32 %v3633, %v3713
        %v3715 = vpop.f32.mrb[0].mxu0
        %3716 = vdwg.mxu0
        %3717 = vmatprep.subr.mxu0 0.0
        %v3718 = vand.u32 %v2682, 4294901760
        %v3719 = vsub.f32 %v2682, %v3718
        %v3720 = vand.u32 %v3719, 4294901760
        %3721 = vmatpush1.msra.mxu0 %v3720
        %3722 = vmatprep.subr.mxu0 0.0
        %v3723 = vand.u32 %v2685, 4294901760
        %v3724 = vsub.f32 %v2685, %v3723
        %v3725 = vand.u32 %v3724, 4294901760
        %3726 = vmatpush1.msra.mxu0 %v3725
        %3727 = vmatprep.subr.mxu0 0.0
        %v3728 = vand.u32 %v2688, 4294901760
        %v3729 = vsub.f32 %v2688, %v3728
        %v3730 = vand.u32 %v3729, 4294901760
        %3731 = vmatpush1.msra.mxu0 %v3730
        %3732 = vmatprep.subr.mxu0 0.0
        %v3733 = vand.u32 %v2691, 4294901760
        %v3734 = vsub.f32 %v2691, %v3733
        %v3735 = vand.u32 %v3734, 4294901760
        %3736 = vmatpush1.msra.mxu0 %v3735
        %3737 = vmatprep.subr.mxu0 0.0
        %v3738 = vand.u32 %v2694, 4294901760
        %v3739 = vsub.f32 %v2694, %v3738
        %v3740 = vand.u32 %v3739, 4294901760
        %3741 = vmatpush1.msra.mxu0 %v3740
        %3742 = vmatprep.subr.mxu0 0.0
        %v3743 = vand.u32 %v2697, 4294901760
        %v3744 = vsub.f32 %v2697, %v3743
        %v3745 = vand.u32 %v3744, 4294901760
        %3746 = vmatpush1.msra.mxu0 %v3745
        %3747 = vmatprep.subr.mxu0 0.0
        %v3748 = vand.u32 %v2700, 4294901760
        %v3749 = vsub.f32 %v2700, %v3748
        %v3750 = vand.u32 %v3749, 4294901760
        %3751 = vmatpush1.msra.mxu0 %v3750
        %3752 = vmatprep.subr.mxu0 0.0
        %v3753 = vand.u32 %v2703, 4294901760
        %v3754 = vsub.f32 %v2703, %v3753
        %v3755 = vand.u32 %v3754, 4294901760
        %3756 = vmatpush1.msra.mxu0 %v3755
        %3757 = vmatprep.subr.mxu0 0.0
        %3758 = vmatpush1.msra.mxu0 0.0
        %3759 = vmatprep.subr.mxu0 0.0
        %3760 = vmatpush1.msra.mxu0 0.0
        %3761 = vmatprep.subr.mxu0 0.0
        %3762 = vmatpush1.msra.mxu0 0.0
        %3763 = vmatprep.subr.mxu0 0.0
        %3764 = vmatpush1.msra.mxu0 0.0
        %3765 = vmatprep.subr.mxu0 0.0
        %3766 = vmatpush1.msra.mxu0 0.0
        %3767 = vmatprep.subr.mxu0 0.0
        %3768 = vmatpush1.msra.mxu0 0.0
        %3769 = vmatprep.subr.mxu0 0.0
        %3770 = vmatpush1.msra.mxu0 0.0
        %3771 = vmatprep.subr.mxu0 0.0
        %3772 = vmatpush1.msra.mxu0 0.0
        %3773 = vmatprep.subr.mxu0 0.0
        %3774 = vmatpush1.msra.mxu0 0.0
        %3775 = vmatprep.subr.mxu0 0.0
        %3776 = vmatpush1.msra.mxu0 0.0
        %3777 = vmatprep.subr.mxu0 0.0
        %3778 = vmatpush1.msra.mxu0 0.0
        %3779 = vmatprep.subr.mxu0 0.0
        %3780 = vmatpush1.msra.mxu0 0.0
        %3781 = vmatprep.subr.mxu0 0.0
        %3782 = vmatpush1.msra.mxu0 0.0
        %3783 = vmatprep.subr.mxu0 0.0
        %3784 = vmatpush1.msra.mxu0 0.0
        %3785 = vmatprep.subr.mxu0 0.0
        %3786 = vmatpush1.msra.mxu0 0.0
        %3787 = vmatprep.subr.mxu0 0.0
        %3788 = vmatpush1.msra.mxu0 0.0
        %3789 = vmatprep.subr.mxu0 0.0
        %3790 = vmatpush1.msra.mxu0 0.0
        %3791 = vmatprep.subr.mxu0 0.0
        %3792 = vmatpush1.msra.mxu0 0.0
        %3793 = vmatprep.subr.mxu0 0.0
        %3794 = vmatpush1.msra.mxu0 0.0
        %3795 = vmatprep.subr.mxu0 0.0
        %3796 = vmatpush1.msra.mxu0 0.0
        %3797 = vmatprep.subr.mxu0 0.0
        %3798 = vmatpush1.msra.mxu0 0.0
        %3799 = vmatprep.subr.mxu0 0.0
        %3800 = vmatpush1.msra.mxu0 0.0
        %3801 = vmatprep.subr.mxu0 0.0
        %3802 = vmatpush1.msra.mxu0 0.0
        %3803 = vmatprep.subr.mxu0 0.0
        %3804 = vmatpush1.msra.mxu0 0.0
        %3805 = vmatprep.mubr.f32.mxu0 0.0
        %v3806 = vand.u32 %v2705, 4294901760
        %3807 = vmatmul.mubr.f32.gmra.mrb[0].mxu0 %v3806
        %v3808 = vpop.f32.mrb[0].mxu0
        %v3809 = vadd.f32 %v3714, %v3808
        %v3810 = vpop.f32.mrb[0].mxu0
        %3811 = vdwg.mxu0
        %3812 = vmatprep.subr.mxu0 0.0
        %v3813 = vand.u32 %v2682, 4294901760
        %3814 = vmatpush1.msra.mxu0 %v3813
        %3815 = vmatprep.subr.mxu0 0.0
        %v3816 = vand.u32 %v2685, 4294901760
        %3817 = vmatpush1.msra.mxu0 %v3816
        %3818 = vmatprep.subr.mxu0 0.0
        %v3819 = vand.u32 %v2688, 4294901760
        %3820 = vmatpush1.msra.mxu0 %v3819
        %3821 = vmatprep.subr.mxu0 0.0
        %v3822 = vand.u32 %v2691, 4294901760
        %3823 = vmatpush1.msra.mxu0 %v3822
        %3824 = vmatprep.subr.mxu0 0.0
        %v3825 = vand.u32 %v2694, 4294901760
        %3826 = vmatpush1.msra.mxu0 %v3825
        %3827 = vmatprep.subr.mxu0 0.0
        %v3828 = vand.u32 %v2697, 4294901760
        %3829 = vmatpush1.msra.mxu0 %v3828
        %3830 = vmatprep.subr.mxu0 0.0
        %v3831 = vand.u32 %v2700, 4294901760
        %3832 = vmatpush1.msra.mxu0 %v3831
        %3833 = vmatprep.subr.mxu0 0.0
        %v3834 = vand.u32 %v2703, 4294901760
        %3835 = vmatpush1.msra.mxu0 %v3834
        %3836 = vmatprep.subr.mxu0 0.0
        %3837 = vmatpush1.msra.mxu0 0.0
        %3838 = vmatprep.subr.mxu0 0.0
        %3839 = vmatpush1.msra.mxu0 0.0
        %3840 = vmatprep.subr.mxu0 0.0
        %3841 = vmatpush1.msra.mxu0 0.0
        %3842 = vmatprep.subr.mxu0 0.0
        %3843 = vmatpush1.msra.mxu0 0.0
        %3844 = vmatprep.subr.mxu0 0.0
        %3845 = vmatpush1.msra.mxu0 0.0
        %3846 = vmatprep.subr.mxu0 0.0
        %3847 = vmatpush1.msra.mxu0 0.0
        %3848 = vmatprep.subr.mxu0 0.0
        %3849 = vmatpush1.msra.mxu0 0.0
        %3850 = vmatprep.subr.mxu0 0.0
        %3851 = vmatpush1.msra.mxu0 0.0
        %3852 = vmatprep.subr.mxu0 0.0
        %3853 = vmatpush1.msra.mxu0 0.0
        %3854 = vmatprep.subr.mxu0 0.0
        %3855 = vmatpush1.msra.mxu0 0.0
        %3856 = vmatprep.subr.mxu0 0.0
        %3857 = vmatpush1.msra.mxu0 0.0
        %3858 = vmatprep.subr.mxu0 0.0
        %3859 = vmatpush1.msra.mxu0 0.0
        %3860 = vmatprep.subr.mxu0 0.0
        %3861 = vmatpush1.msra.mxu0 0.0
        %3862 = vmatprep.subr.mxu0 0.0
        %3863 = vmatpush1.msra.mxu0 0.0
        %3864 = vmatprep.subr.mxu0 0.0
        %3865 = vmatpush1.msra.mxu0 0.0
        %3866 = vmatprep.subr.mxu0 0.0
        %3867 = vmatpush1.msra.mxu0 0.0
        %3868 = vmatprep.subr.mxu0 0.0
        %3869 = vmatpush1.msra.mxu0 0.0
        %3870 = vmatprep.subr.mxu0 0.0
        %3871 = vmatpush1.msra.mxu0 0.0
        %3872 = vmatprep.subr.mxu0 0.0
        %3873 = vmatpush1.msra.mxu0 0.0
        %3874 = vmatprep.subr.mxu0 0.0
        %3875 = vmatpush1.msra.mxu0 0.0
        %3876 = vmatprep.subr.mxu0 0.0
        %3877 = vmatpush1.msra.mxu0 0.0
        %3878 = vmatprep.subr.mxu0 0.0
        %3879 = vmatpush1.msra.mxu0 0.0
        %3880 = vmatprep.subr.mxu0 0.0
        %3881 = vmatpush1.msra.mxu0 0.0
        %3882 = vmatprep.subr.mxu0 0.0
        %3883 = vmatpush1.msra.mxu0 0.0
        %3884 = vmatprep.mubr.f32.mxu0 0.0
        %v3885 = vand.u32 %v2705, 4294901760
        %3886 = vmatmul.mubr.f32.gmra.mrb[0].mxu0 %v3885
        %v3887 = vpop.f32.mrb[0].mxu0
        %v3888 = vadd.f32 %v3809, %v3887
        %v3889 = vpop.f32.mrb[0].mxu0
        %3890 = vdwg.mxu0
        %v3891 = vmul.f32 %v282, %v282
        %v3892 = vmul.f32 %v283, %v283
        %v3893 = vmul.f32 %v284, %v284
        %v3894 = vmul.f32 %v285, %v285
        %v3895 = vmul.f32 %v286, %v286
        %v3896 = vmul.f32 %v287, %v287
        %v3897 = vmul.f32 %v288, %v288
        %v3898 = vmul.f32 %v289, %v289
        %v3899 = vmul.f32 %v290, %v290
        %v3900 = vmul.f32 %v291, %v291
        %v3901 = vmul.f32 %v292, %v292
        %v3902 = vmul.f32 %v293, %v293
        %v3903 = vmul.f32 %v294, %v294
        %v3904 = vmul.f32 %v295, %v295
        %v3905 = vmul.f32 %v296, %v296
        %v3906 = vmul.f32 %v297, %v297
        %v3907 = vmul.f32 %v298, %v298
        %v3908 = vmul.f32 %v299, %v299
        %v3909 = vmul.f32 %v300, %v300
        %v3910 = vmul.f32 %v301, %v301
        %v3911 = vmul.f32 %v302, %v302
        %v3912 = vmul.f32 %v303, %v303
        %v3913 = vmul.f32 %v304, %v304
        %v3914 = vmul.f32 %v305, %v305
        %v3915 = vand.u32 %v3892, 4294901760
        %3916 = vmatprep.subr.mxu0 %v3915
        %v3917 = vand.u32 %v3891, 4294901760
        %3918 = vmatpush1.msra.mxu0 %v3917
        %v3919 = vand.u32 %v3895, 4294901760
        %3920 = vmatprep.subr.mxu0 %v3919
        %v3921 = vand.u32 %v3894, 4294901760
        %3922 = vmatpush1.msra.mxu0 %v3921
        %v3923 = vand.u32 %v3898, 4294901760
        %3924 = vmatprep.subr.mxu0 %v3923
        %v3925 = vand.u32 %v3897, 4294901760
        %3926 = vmatpush1.msra.mxu0 %v3925
        %v3927 = vand.u32 %v3901, 4294901760
        %3928 = vmatprep.subr.mxu0 %v3927
        %v3929 = vand.u32 %v3900, 4294901760
        %3930 = vmatpush1.msra.mxu0 %v3929
        %v3931 = vand.u32 %v3904, 4294901760
        %3932 = vmatprep.subr.mxu0 %v3931
        %v3933 = vand.u32 %v3903, 4294901760
        %3934 = vmatpush1.msra.mxu0 %v3933
        %v3935 = vand.u32 %v3907, 4294901760
        %3936 = vmatprep.subr.mxu0 %v3935
        %v3937 = vand.u32 %v3906, 4294901760
        %3938 = vmatpush1.msra.mxu0 %v3937
        %v3939 = vand.u32 %v3910, 4294901760
        %3940 = vmatprep.subr.mxu0 %v3939
        %v3941 = vand.u32 %v3909, 4294901760
        %3942 = vmatpush1.msra.mxu0 %v3941
        %v3943 = vand.u32 %v3913, 4294901760
        %3944 = vmatprep.subr.mxu0 %v3943
        %v3945 = vand.u32 %v3912, 4294901760
        %3946 = vmatpush1.msra.mxu0 %v3945
        %3947 = vmatprep.subr.mxu0 0.0
        %3948 = vmatpush1.msra.mxu0 0.0
        %3949 = vmatprep.subr.mxu0 0.0
        %3950 = vmatpush1.msra.mxu0 0.0
        %3951 = vmatprep.subr.mxu0 0.0
        %3952 = vmatpush1.msra.mxu0 0.0
        %3953 = vmatprep.subr.mxu0 0.0
        %3954 = vmatpush1.msra.mxu0 0.0
        %3955 = vmatprep.subr.mxu0 0.0
        %3956 = vmatpush1.msra.mxu0 0.0
        %3957 = vmatprep.subr.mxu0 0.0
        %3958 = vmatpush1.msra.mxu0 0.0
        %3959 = vmatprep.subr.mxu0 0.0
        %3960 = vmatpush1.msra.mxu0 0.0
        %3961 = vmatprep.subr.mxu0 0.0
        %3962 = vmatpush1.msra.mxu0 0.0
        %3963 = vmatprep.subr.mxu0 0.0
        %3964 = vmatpush1.msra.mxu0 0.0
        %3965 = vmatprep.subr.mxu0 0.0
        %3966 = vmatpush1.msra.mxu0 0.0
        %3967 = vmatprep.subr.mxu0 0.0
        %3968 = vmatpush1.msra.mxu0 0.0
        %3969 = vmatprep.subr.mxu0 0.0
        %3970 = vmatpush1.msra.mxu0 0.0
        %3971 = vmatprep.subr.mxu0 0.0
        %3972 = vmatpush1.msra.mxu0 0.0
        %3973 = vmatprep.subr.mxu0 0.0
        %3974 = vmatpush1.msra.mxu0 0.0
        %3975 = vmatprep.subr.mxu0 0.0
        %3976 = vmatpush1.msra.mxu0 0.0
        %3977 = vmatprep.subr.mxu0 0.0
        %3978 = vmatpush1.msra.mxu0 0.0
        %3979 = vmatprep.subr.mxu0 0.0
        %3980 = vmatpush1.msra.mxu0 0.0
        %3981 = vmatprep.subr.mxu0 0.0
        %3982 = vmatpush1.msra.mxu0 0.0
        %3983 = vmatprep.subr.mxu0 0.0
        %3984 = vmatpush1.msra.mxu0 0.0
        %3985 = vmatprep.subr.mxu0 0.0
        %3986 = vmatpush1.msra.mxu0 0.0
        %3987 = vmatprep.subr.mxu0 0.0
        %3988 = vmatpush1.msra.mxu0 0.0
        %3989 = vmatprep.subr.mxu0 0.0
        %3990 = vmatpush1.msra.mxu0 0.0
        %3991 = vmatprep.subr.mxu0 0.0
        %3992 = vmatpush1.msra.mxu0 0.0
        %3993 = vmatprep.subr.mxu0 0.0
        %3994 = vmatpush1.msra.mxu0 0.0
        %3995 = vmatprep.mubr.f32.mxu0 0.0
        %v3996 = vand.u32 %v2705, 4294901760
        %v3997 = vsub.f32 %v2705, %v3996
        %v3998 = vand.u32 %v3997, 4294901760
        %v3999 = vsub.f32 %v3997, %v3998
        %v4000 = vand.u32 %v3999, 4294901760
        %4001 = vmatmul.mubr.f32.gmra.mrb[0].mxu0 %v4000
        %v4002 = vpop.f32.mrb[0].mxu0
        %v4003 = vadd.f32 0.0, %v4002
        %v4004 = vpop.f32.mrb[0].mxu0
        %v4005 = vadd.f32 0.0, %v4004
        %4006 = vdwg.mxu0
        %v4007 = vand.u32 %v3892, 4294901760
        %v4008 = vsub.f32 %v3892, %v4007
        %v4009 = vand.u32 %v4008, 4294901760
        %v4010 = vsub.f32 %v4008, %v4009
        %v4011 = vand.u32 %v4010, 4294901760
        %4012 = vmatprep.subr.mxu0 %v4011
        %v4013 = vand.u32 %v3891, 4294901760
        %v4014 = vsub.f32 %v3891, %v4013
        %v4015 = vand.u32 %v4014, 4294901760
        %v4016 = vsub.f32 %v4014, %v4015
        %v4017 = vand.u32 %v4016, 4294901760
        %4018 = vmatpush1.msra.mxu0 %v4017
        %v4019 = vand.u32 %v3895, 4294901760
        %v4020 = vsub.f32 %v3895, %v4019
        %v4021 = vand.u32 %v4020, 4294901760
        %v4022 = vsub.f32 %v4020, %v4021
        %v4023 = vand.u32 %v4022, 4294901760
        %4024 = vmatprep.subr.mxu0 %v4023
        %v4025 = vand.u32 %v3894, 4294901760
        %v4026 = vsub.f32 %v3894, %v4025
        %v4027 = vand.u32 %v4026, 4294901760
        %v4028 = vsub.f32 %v4026, %v4027
        %v4029 = vand.u32 %v4028, 4294901760
        %4030 = vmatpush1.msra.mxu0 %v4029
        %v4031 = vand.u32 %v3898, 4294901760
        %v4032 = vsub.f32 %v3898, %v4031
        %v4033 = vand.u32 %v4032, 4294901760
        %v4034 = vsub.f32 %v4032, %v4033
        %v4035 = vand.u32 %v4034, 4294901760
        %4036 = vmatprep.subr.mxu0 %v4035
        %v4037 = vand.u32 %v3897, 4294901760
        %v4038 = vsub.f32 %v3897, %v4037
        %v4039 = vand.u32 %v4038, 4294901760
        %v4040 = vsub.f32 %v4038, %v4039
        %v4041 = vand.u32 %v4040, 4294901760
        %4042 = vmatpush1.msra.mxu0 %v4041
        %v4043 = vand.u32 %v3901, 4294901760
        %v4044 = vsub.f32 %v3901, %v4043
        %v4045 = vand.u32 %v4044, 4294901760
        %v4046 = vsub.f32 %v4044, %v4045
        %v4047 = vand.u32 %v4046, 4294901760
        %4048 = vmatprep.subr.mxu0 %v4047
        %v4049 = vand.u32 %v3900, 4294901760
        %v4050 = vsub.f32 %v3900, %v4049
        %v4051 = vand.u32 %v4050, 4294901760
        %v4052 = vsub.f32 %v4050, %v4051
        %v4053 = vand.u32 %v4052, 4294901760
        %4054 = vmatpush1.msra.mxu0 %v4053
        %v4055 = vand.u32 %v3904, 4294901760
        %v4056 = vsub.f32 %v3904, %v4055
        %v4057 = vand.u32 %v4056, 4294901760
        %v4058 = vsub.f32 %v4056, %v4057
        %v4059 = vand.u32 %v4058, 4294901760
        %4060 = vmatprep.subr.mxu0 %v4059
        %v4061 = vand.u32 %v3903, 4294901760
        %v4062 = vsub.f32 %v3903, %v4061
        %v4063 = vand.u32 %v4062, 4294901760
        %v4064 = vsub.f32 %v4062, %v4063
        %v4065 = vand.u32 %v4064, 4294901760
        %4066 = vmatpush1.msra.mxu0 %v4065
        %v4067 = vand.u32 %v3907, 4294901760
        %v4068 = vsub.f32 %v3907, %v4067
        %v4069 = vand.u32 %v4068, 4294901760
        %v4070 = vsub.f32 %v4068, %v4069
        %v4071 = vand.u32 %v4070, 4294901760
        %4072 = vmatprep.subr.mxu0 %v4071
        %v4073 = vand.u32 %v3906, 4294901760
        %v4074 = vsub.f32 %v3906, %v4073
        %v4075 = vand.u32 %v4074, 4294901760
        %v4076 = vsub.f32 %v4074, %v4075
        %v4077 = vand.u32 %v4076, 4294901760
        %4078 = vmatpush1.msra.mxu0 %v4077
        %v4079 = vand.u32 %v3910, 4294901760
        %v4080 = vsub.f32 %v3910, %v4079
        %v4081 = vand.u32 %v4080, 4294901760
        %v4082 = vsub.f32 %v4080, %v4081
        %v4083 = vand.u32 %v4082, 4294901760
        %4084 = vmatprep.subr.mxu0 %v4083
        %v4085 = vand.u32 %v3909, 4294901760
        %v4086 = vsub.f32 %v3909, %v4085
        %v4087 = vand.u32 %v4086, 4294901760
        %v4088 = vsub.f32 %v4086, %v4087
        %v4089 = vand.u32 %v4088, 4294901760
        %4090 = vmatpush1.msra.mxu0 %v4089
        %v4091 = vand.u32 %v3913, 4294901760
        %v4092 = vsub.f32 %v3913, %v4091
        %v4093 = vand.u32 %v4092, 4294901760
        %v4094 = vsub.f32 %v4092, %v4093
        %v4095 = vand.u32 %v4094, 4294901760
        %4096 = vmatprep.subr.mxu0 %v4095
        %v4097 = vand.u32 %v3912, 4294901760
        %v4098 = vsub.f32 %v3912, %v4097
        %v4099 = vand.u32 %v4098, 4294901760
        %v4100 = vsub.f32 %v4098, %v4099
        %v4101 = vand.u32 %v4100, 4294901760
        %4102 = vmatpush1.msra.mxu0 %v4101
        %4103 = vmatprep.subr.mxu0 0.0
        %4104 = vmatpush1.msra.mxu0 0.0
        %4105 = vmatprep.subr.mxu0 0.0
        %4106 = vmatpush1.msra.mxu0 0.0
        %4107 = vmatprep.subr.mxu0 0.0
        %4108 = vmatpush1.msra.mxu0 0.0
        %4109 = vmatprep.subr.mxu0 0.0
        %4110 = vmatpush1.msra.mxu0 0.0
        %4111 = vmatprep.subr.mxu0 0.0
        %4112 = vmatpush1.msra.mxu0 0.0
        %4113 = vmatprep.subr.mxu0 0.0
        %4114 = vmatpush1.msra.mxu0 0.0
        %4115 = vmatprep.subr.mxu0 0.0
        %4116 = vmatpush1.msra.mxu0 0.0
        %4117 = vmatprep.subr.mxu0 0.0
        %4118 = vmatpush1.msra.mxu0 0.0
        %4119 = vmatprep.subr.mxu0 0.0
        %4120 = vmatpush1.msra.mxu0 0.0
        %4121 = vmatprep.subr.mxu0 0.0
        %4122 = vmatpush1.msra.mxu0 0.0
        %4123 = vmatprep.subr.mxu0 0.0
        %4124 = vmatpush1.msra.mxu0 0.0
        %4125 = vmatprep.subr.mxu0 0.0
        %4126 = vmatpush1.msra.mxu0 0.0
        %4127 = vmatprep.subr.mxu0 0.0
        %4128 = vmatpush1.msra.mxu0 0.0
        %4129 = vmatprep.subr.mxu0 0.0
        %4130 = vmatpush1.msra.mxu0 0.0
        %4131 = vmatprep.subr.mxu0 0.0
        %4132 = vmatpush1.msra.mxu0 0.0
        %4133 = vmatprep.subr.mxu0 0.0
        %4134 = vmatpush1.msra.mxu0 0.0
        %4135 = vmatprep.subr.mxu0 0.0
        %4136 = vmatpush1.msra.mxu0 0.0
        %4137 = vmatprep.subr.mxu0 0.0
        %4138 = vmatpush1.msra.mxu0 0.0
        %4139 = vmatprep.subr.mxu0 0.0
        %4140 = vmatpush1.msra.mxu0 0.0
        %4141 = vmatprep.subr.mxu0 0.0
        %4142 = vmatpush1.msra.mxu0 0.0
        %4143 = vmatprep.subr.mxu0 0.0
        %4144 = vmatpush1.msra.mxu0 0.0
        %4145 = vmatprep.subr.mxu0 0.0
        %4146 = vmatpush1.msra.mxu0 0.0
        %4147 = vmatprep.subr.mxu0 0.0
        %4148 = vmatpush1.msra.mxu0 0.0
        %4149 = vmatprep.subr.mxu0 0.0
        %4150 = vmatpush1.msra.mxu0 0.0
        %4151 = vmatprep.mubr.f32.mxu0 0.0
        %v4152 = vand.u32 %v2705, 4294901760
        %4153 = vmatmul.mubr.f32.gmra.mrb[0].mxu0 %v4152
        %v4154 = vpop.f32.mrb[0].mxu0
        %v4155 = vadd.f32 %v4003, %v4154
        %v4156 = vpop.f32.mrb[0].mxu0
        %v4157 = vadd.f32 %v4005, %v4156
        %4158 = vdwg.mxu0
        %v4159 = vand.u32 %v3892, 4294901760
        %v4160 = vsub.f32 %v3892, %v4159
        %4161 = vmatprep.subr.mxu0 %v4160
        %v4162 = vand.u32 %v3891, 4294901760
        %v4163 = vsub.f32 %v3891, %v4162
        %4164 = vmatpush1.msra.mxu0 %v4163
        %v4165 = vand.u32 %v3895, 4294901760
        %v4166 = vsub.f32 %v3895, %v4165
        %4167 = vmatprep.subr.mxu0 %v4166
        %v4168 = vand.u32 %v3894, 4294901760
        %v4169 = vsub.f32 %v3894, %v4168
        %4170 = vmatpush1.msra.mxu0 %v4169
        %v4171 = vand.u32 %v3898, 4294901760
        %v4172 = vsub.f32 %v3898, %v4171
        %4173 = vmatprep.subr.mxu0 %v4172
        %v4174 = vand.u32 %v3897, 4294901760
        %v4175 = vsub.f32 %v3897, %v4174
        %4176 = vmatpush1.msra.mxu0 %v4175
        %v4177 = vand.u32 %v3901, 4294901760
        %v4178 = vsub.f32 %v3901, %v4177
        %4179 = vmatprep.subr.mxu0 %v4178
        %v4180 = vand.u32 %v3900, 4294901760
        %v4181 = vsub.f32 %v3900, %v4180
        %4182 = vmatpush1.msra.mxu0 %v4181
        %v4183 = vand.u32 %v3904, 4294901760
        %v4184 = vsub.f32 %v3904, %v4183
        %4185 = vmatprep.subr.mxu0 %v4184
        %v4186 = vand.u32 %v3903, 4294901760
        %v4187 = vsub.f32 %v3903, %v4186
        %4188 = vmatpush1.msra.mxu0 %v4187
        %v4189 = vand.u32 %v3907, 4294901760
        %v4190 = vsub.f32 %v3907, %v4189
        %4191 = vmatprep.subr.mxu0 %v4190
        %v4192 = vand.u32 %v3906, 4294901760
        %v4193 = vsub.f32 %v3906, %v4192
        %4194 = vmatpush1.msra.mxu0 %v4193
        %v4195 = vand.u32 %v3910, 4294901760
        %v4196 = vsub.f32 %v3910, %v4195
        %4197 = vmatprep.subr.mxu0 %v4196
        %v4198 = vand.u32 %v3909, 4294901760
        %v4199 = vsub.f32 %v3909, %v4198
        %4200 = vmatpush1.msra.mxu0 %v4199
        %v4201 = vand.u32 %v3913, 4294901760
        %v4202 = vsub.f32 %v3913, %v4201
        %4203 = vmatprep.subr.mxu0 %v4202
        %v4204 = vand.u32 %v3912, 4294901760
        %v4205 = vsub.f32 %v3912, %v4204
        %4206 = vmatpush1.msra.mxu0 %v4205
        %4207 = vmatprep.subr.mxu0 0.0
        %4208 = vmatpush1.msra.mxu0 0.0
        %4209 = vmatprep.subr.mxu0 0.0
        %4210 = vmatpush1.msra.mxu0 0.0
        %4211 = vmatprep.subr.mxu0 0.0
        %4212 = vmatpush1.msra.mxu0 0.0
        %4213 = vmatprep.subr.mxu0 0.0
        %4214 = vmatpush1.msra.mxu0 0.0
        %4215 = vmatprep.subr.mxu0 0.0
        %4216 = vmatpush1.msra.mxu0 0.0
        %4217 = vmatprep.subr.mxu0 0.0
        %4218 = vmatpush1.msra.mxu0 0.0
        %4219 = vmatprep.subr.mxu0 0.0
        %4220 = vmatpush1.msra.mxu0 0.0
        %4221 = vmatprep.subr.mxu0 0.0
        %4222 = vmatpush1.msra.mxu0 0.0
        %4223 = vmatprep.subr.mxu0 0.0
        %4224 = vmatpush1.msra.mxu0 0.0
        %4225 = vmatprep.subr.mxu0 0.0
        %4226 = vmatpush1.msra.mxu0 0.0
        %4227 = vmatprep.subr.mxu0 0.0
        %4228 = vmatpush1.msra.mxu0 0.0
        %4229 = vmatprep.subr.mxu0 0.0
        %4230 = vmatpush1.msra.mxu0 0.0
        %4231 = vmatprep.subr.mxu0 0.0
        %4232 = vmatpush1.msra.mxu0 0.0
        %4233 = vmatprep.subr.mxu0 0.0
        %4234 = vmatpush1.msra.mxu0 0.0
        %4235 = vmatprep.subr.mxu0 0.0
        %4236 = vmatpush1.msra.mxu0 0.0
        %4237 = vmatprep.subr.mxu0 0.0
        %4238 = vmatpush1.msra.mxu0 0.0
        %4239 = vmatprep.subr.mxu0 0.0
        %4240 = vmatpush1.msra.mxu0 0.0
        %4241 = vmatprep.subr.mxu0 0.0
        %4242 = vmatpush1.msra.mxu0 0.0
        %4243 = vmatprep.subr.mxu0 0.0
        %4244 = vmatpush1.msra.mxu0 0.0
        %4245 = vmatprep.subr.mxu0 0.0
        %4246 = vmatpush1.msra.mxu0 0.0
        %4247 = vmatprep.subr.mxu0 0.0
        %4248 = vmatpush1.msra.mxu0 0.0
        %4249 = vmatprep.subr.mxu0 0.0
        %4250 = vmatpush1.msra.mxu0 0.0
        %4251 = vmatprep.subr.mxu0 0.0
        %4252 = vmatpush1.msra.mxu0 0.0
        %4253 = vmatprep.subr.mxu0 0.0
        %4254 = vmatpush1.msra.mxu0 0.0
        %4255 = vmatprep.mubr.f32.mxu0 0.0
        %v4256 = vand.u32 %v2705, 4294901760
        %v4257 = vsub.f32 %v2705, %v4256
        %4258 = vmatmul.mubr.f32.gmra.mrb[0].mxu0 %v4257
        %v4259 = vpop.f32.mrb[0].mxu0
        %v4260 = vadd.f32 %v4155, %v4259
        %v4261 = vpop.f32.mrb[0].mxu0
        %v4262 = vadd.f32 %v4157, %v4261
        %4263 = vdwg.mxu0
        %v4264 = vand.u32 %v3892, 4294901760
        %4265 = vmatprep.subr.mxu0 %v4264
        %v4266 = vand.u32 %v3891, 4294901760
        %4267 = vmatpush1.msra.mxu0 %v4266
        %v4268 = vand.u32 %v3895, 4294901760
        %4269 = vmatprep.subr.mxu0 %v4268
        %v4270 = vand.u32 %v3894, 4294901760
        %4271 = vmatpush1.msra.mxu0 %v4270
        %v4272 = vand.u32 %v3898, 4294901760
        %4273 = vmatprep.subr.mxu0 %v4272
        %v4274 = vand.u32 %v3897, 4294901760
        %4275 = vmatpush1.msra.mxu0 %v4274
        %v4276 = vand.u32 %v3901, 4294901760
        %4277 = vmatprep.subr.mxu0 %v4276
        %v4278 = vand.u32 %v3900, 4294901760
        %4279 = vmatpush1.msra.mxu0 %v4278
        %v4280 = vand.u32 %v3904, 4294901760
        %4281 = vmatprep.subr.mxu0 %v4280
        %v4282 = vand.u32 %v3903, 4294901760
        %4283 = vmatpush1.msra.mxu0 %v4282
        %v4284 = vand.u32 %v3907, 4294901760
        %4285 = vmatprep.subr.mxu0 %v4284
        %v4286 = vand.u32 %v3906, 4294901760
        %4287 = vmatpush1.msra.mxu0 %v4286
        %v4288 = vand.u32 %v3910, 4294901760
        %4289 = vmatprep.subr.mxu0 %v4288
        %v4290 = vand.u32 %v3909, 4294901760
        %4291 = vmatpush1.msra.mxu0 %v4290
        %v4292 = vand.u32 %v3913, 4294901760
        %4293 = vmatprep.subr.mxu0 %v4292
        %v4294 = vand.u32 %v3912, 4294901760
        %4295 = vmatpush1.msra.mxu0 %v4294
        %4296 = vmatprep.subr.mxu0 0.0
        %4297 = vmatpush1.msra.mxu0 0.0
        %4298 = vmatprep.subr.mxu0 0.0
        %4299 = vmatpush1.msra.mxu0 0.0
        %4300 = vmatprep.subr.mxu0 0.0
        %4301 = vmatpush1.msra.mxu0 0.0
        %4302 = vmatprep.subr.mxu0 0.0
        %4303 = vmatpush1.msra.mxu0 0.0
        %4304 = vmatprep.subr.mxu0 0.0
        %4305 = vmatpush1.msra.mxu0 0.0
        %4306 = vmatprep.subr.mxu0 0.0
        %4307 = vmatpush1.msra.mxu0 0.0
        %4308 = vmatprep.subr.mxu0 0.0
        %4309 = vmatpush1.msra.mxu0 0.0
        %4310 = vmatprep.subr.mxu0 0.0
        %4311 = vmatpush1.msra.mxu0 0.0
        %4312 = vmatprep.subr.mxu0 0.0
        %4313 = vmatpush1.msra.mxu0 0.0
        %4314 = vmatprep.subr.mxu0 0.0
        %4315 = vmatpush1.msra.mxu0 0.0
        %4316 = vmatprep.subr.mxu0 0.0
        %4317 = vmatpush1.msra.mxu0 0.0
        %4318 = vmatprep.subr.mxu0 0.0
        %4319 = vmatpush1.msra.mxu0 0.0
        %4320 = vmatprep.subr.mxu0 0.0
        %4321 = vmatpush1.msra.mxu0 0.0
        %4322 = vmatprep.subr.mxu0 0.0
        %4323 = vmatpush1.msra.mxu0 0.0
        %4324 = vmatprep.subr.mxu0 0.0
        %4325 = vmatpush1.msra.mxu0 0.0
        %4326 = vmatprep.subr.mxu0 0.0
        %4327 = vmatpush1.msra.mxu0 0.0
        %4328 = vmatprep.subr.mxu0 0.0
        %4329 = vmatpush1.msra.mxu0 0.0
        %4330 = vmatprep.subr.mxu0 0.0
        %4331 = vmatpush1.msra.mxu0 0.0
        %4332 = vmatprep.subr.mxu0 0.0
        %4333 = vmatpush1.msra.mxu0 0.0
        %4334 = vmatprep.subr.mxu0 0.0
        %4335 = vmatpush1.msra.mxu0 0.0
        %4336 = vmatprep.subr.mxu0 0.0
        %4337 = vmatpush1.msra.mxu0 0.0
        %4338 = vmatprep.subr.mxu0 0.0
        %4339 = vmatpush1.msra.mxu0 0.0
        %4340 = vmatprep.subr.mxu0 0.0
        %4341 = vmatpush1.msra.mxu0 0.0
        %4342 = vmatprep.subr.mxu0 0.0
        %4343 = vmatpush1.msra.mxu0 0.0
        %4344 = vmatprep.mubr.f32.mxu0 0.0
        %v4345 = vand.u32 %v2705, 4294901760
        %v4346 = vsub.f32 %v2705, %v4345
        %v4347 = vand.u32 %v4346, 4294901760
        %4348 = vmatmul.mubr.f32.gmra.mrb[0].mxu0 %v4347
        %v4349 = vpop.f32.mrb[0].mxu0
        %v4350 = vadd.f32 %v4260, %v4349
        %v4351 = vpop.f32.mrb[0].mxu0
        %v4352 = vadd.f32 %v4262, %v4351
        %4353 = vdwg.mxu0
        %v4354 = vand.u32 %v3892, 4294901760
        %v4355 = vsub.f32 %v3892, %v4354
        %v4356 = vand.u32 %v4355, 4294901760
        %4357 = vmatprep.subr.mxu0 %v4356
        %v4358 = vand.u32 %v3891, 4294901760
        %v4359 = vsub.f32 %v3891, %v4358
        %v4360 = vand.u32 %v4359, 4294901760
        %4361 = vmatpush1.msra.mxu0 %v4360
        %v4362 = vand.u32 %v3895, 4294901760
        %v4363 = vsub.f32 %v3895, %v4362
        %v4364 = vand.u32 %v4363, 4294901760
        %4365 = vmatprep.subr.mxu0 %v4364
        %v4366 = vand.u32 %v3894, 4294901760
        %v4367 = vsub.f32 %v3894, %v4366
        %v4368 = vand.u32 %v4367, 4294901760
        %4369 = vmatpush1.msra.mxu0 %v4368
        %v4370 = vand.u32 %v3898, 4294901760
        %v4371 = vsub.f32 %v3898, %v4370
        %v4372 = vand.u32 %v4371, 4294901760
        %4373 = vmatprep.subr.mxu0 %v4372
        %v4374 = vand.u32 %v3897, 4294901760
        %v4375 = vsub.f32 %v3897, %v4374
        %v4376 = vand.u32 %v4375, 4294901760
        %4377 = vmatpush1.msra.mxu0 %v4376
        %v4378 = vand.u32 %v3901, 4294901760
        %v4379 = vsub.f32 %v3901, %v4378
        %v4380 = vand.u32 %v4379, 4294901760
        %4381 = vmatprep.subr.mxu0 %v4380
        %v4382 = vand.u32 %v3900, 4294901760
        %v4383 = vsub.f32 %v3900, %v4382
        %v4384 = vand.u32 %v4383, 4294901760
        %4385 = vmatpush1.msra.mxu0 %v4384
        %v4386 = vand.u32 %v3904, 4294901760
        %v4387 = vsub.f32 %v3904, %v4386
        %v4388 = vand.u32 %v4387, 4294901760
        %4389 = vmatprep.subr.mxu0 %v4388
        %v4390 = vand.u32 %v3903, 4294901760
        %v4391 = vsub.f32 %v3903, %v4390
        %v4392 = vand.u32 %v4391, 4294901760
        %4393 = vmatpush1.msra.mxu0 %v4392
        %v4394 = vand.u32 %v3907, 4294901760
        %v4395 = vsub.f32 %v3907, %v4394
        %v4396 = vand.u32 %v4395, 4294901760
        %4397 = vmatprep.subr.mxu0 %v4396
        %v4398 = vand.u32 %v3906, 4294901760
        %v4399 = vsub.f32 %v3906, %v4398
        %v4400 = vand.u32 %v4399, 4294901760
        %4401 = vmatpush1.msra.mxu0 %v4400
        %v4402 = vand.u32 %v3910, 4294901760
        %v4403 = vsub.f32 %v3910, %v4402
        %v4404 = vand.u32 %v4403, 4294901760
        %4405 = vmatprep.subr.mxu0 %v4404
        %v4406 = vand.u32 %v3909, 4294901760
        %v4407 = vsub.f32 %v3909, %v4406
        %v4408 = vand.u32 %v4407, 4294901760
        %4409 = vmatpush1.msra.mxu0 %v4408
        %v4410 = vand.u32 %v3913, 4294901760
        %v4411 = vsub.f32 %v3913, %v4410
        %v4412 = vand.u32 %v4411, 4294901760
        %4413 = vmatprep.subr.mxu0 %v4412
        %v4414 = vand.u32 %v3912, 4294901760
        %v4415 = vsub.f32 %v3912, %v4414
        %v4416 = vand.u32 %v4415, 4294901760
        %4417 = vmatpush1.msra.mxu0 %v4416
        %4418 = vmatprep.subr.mxu0 0.0
        %4419 = vmatpush1.msra.mxu0 0.0
        %4420 = vmatprep.subr.mxu0 0.0
        %4421 = vmatpush1.msra.mxu0 0.0
        %4422 = vmatprep.subr.mxu0 0.0
        %4423 = vmatpush1.msra.mxu0 0.0
        %4424 = vmatprep.subr.mxu0 0.0
        %4425 = vmatpush1.msra.mxu0 0.0
        %4426 = vmatprep.subr.mxu0 0.0
        %4427 = vmatpush1.msra.mxu0 0.0
        %4428 = vmatprep.subr.mxu0 0.0
        %4429 = vmatpush1.msra.mxu0 0.0
        %4430 = vmatprep.subr.mxu0 0.0
        %4431 = vmatpush1.msra.mxu0 0.0
        %4432 = vmatprep.subr.mxu0 0.0
        %4433 = vmatpush1.msra.mxu0 0.0
        %4434 = vmatprep.subr.mxu0 0.0
        %4435 = vmatpush1.msra.mxu0 0.0
        %4436 = vmatprep.subr.mxu0 0.0
        %4437 = vmatpush1.msra.mxu0 0.0
        %4438 = vmatprep.subr.mxu0 0.0
        %4439 = vmatpush1.msra.mxu0 0.0
        %4440 = vmatprep.subr.mxu0 0.0
        %4441 = vmatpush1.msra.mxu0 0.0
        %4442 = vmatprep.subr.mxu0 0.0
        %4443 = vmatpush1.msra.mxu0 0.0
        %4444 = vmatprep.subr.mxu0 0.0
        %4445 = vmatpush1.msra.mxu0 0.0
        %4446 = vmatprep.subr.mxu0 0.0
        %4447 = vmatpush1.msra.mxu0 0.0
        %4448 = vmatprep.subr.mxu0 0.0
        %4449 = vmatpush1.msra.mxu0 0.0
        %4450 = vmatprep.subr.mxu0 0.0
        %4451 = vmatpush1.msra.mxu0 0.0
        %4452 = vmatprep.subr.mxu0 0.0
        %4453 = vmatpush1.msra.mxu0 0.0
        %4454 = vmatprep.subr.mxu0 0.0
        %4455 = vmatpush1.msra.mxu0 0.0
        %4456 = vmatprep.subr.mxu0 0.0
        %4457 = vmatpush1.msra.mxu0 0.0
        %4458 = vmatprep.subr.mxu0 0.0
        %4459 = vmatpush1.msra.mxu0 0.0
        %4460 = vmatprep.subr.mxu0 0.0
        %4461 = vmatpush1.msra.mxu0 0.0
        %4462 = vmatprep.subr.mxu0 0.0
        %4463 = vmatpush1.msra.mxu0 0.0
        %4464 = vmatprep.subr.mxu0 0.0
        %4465 = vmatpush1.msra.mxu0 0.0
        %4466 = vmatprep.mubr.f32.mxu0 0.0
        %v4467 = vand.u32 %v2705, 4294901760
        %4468 = vmatmul.mubr.f32.gmra.mrb[0].mxu0 %v4467
        %v4469 = vpop.f32.mrb[0].mxu0
        %v4470 = vadd.f32 %v4350, %v4469
        %v4471 = vpop.f32.mrb[0].mxu0
        %v4472 = vadd.f32 %v4352, %v4471
        %4473 = vdwg.mxu0
        %v4474 = vand.u32 %v3892, 4294901760
        %4475 = vmatprep.subr.mxu0 %v4474
        %v4476 = vand.u32 %v3891, 4294901760
        %4477 = vmatpush1.msra.mxu0 %v4476
        %v4478 = vand.u32 %v3895, 4294901760
        %4479 = vmatprep.subr.mxu0 %v4478
        %v4480 = vand.u32 %v3894, 4294901760
        %4481 = vmatpush1.msra.mxu0 %v4480
        %v4482 = vand.u32 %v3898, 4294901760
        %4483 = vmatprep.subr.mxu0 %v4482
        %v4484 = vand.u32 %v3897, 4294901760
        %4485 = vmatpush1.msra.mxu0 %v4484
        %v4486 = vand.u32 %v3901, 4294901760
        %4487 = vmatprep.subr.mxu0 %v4486
        %v4488 = vand.u32 %v3900, 4294901760
        %4489 = vmatpush1.msra.mxu0 %v4488
        %v4490 = vand.u32 %v3904, 4294901760
        %4491 = vmatprep.subr.mxu0 %v4490
        %v4492 = vand.u32 %v3903, 4294901760
        %4493 = vmatpush1.msra.mxu0 %v4492
        %v4494 = vand.u32 %v3907, 4294901760
        %4495 = vmatprep.subr.mxu0 %v4494
        %v4496 = vand.u32 %v3906, 4294901760
        %4497 = vmatpush1.msra.mxu0 %v4496
        %v4498 = vand.u32 %v3910, 4294901760
        %4499 = vmatprep.subr.mxu0 %v4498
        %v4500 = vand.u32 %v3909, 4294901760
        %4501 = vmatpush1.msra.mxu0 %v4500
        %v4502 = vand.u32 %v3913, 4294901760
        %4503 = vmatprep.subr.mxu0 %v4502
        %v4504 = vand.u32 %v3912, 4294901760
        %4505 = vmatpush1.msra.mxu0 %v4504
        %4506 = vmatprep.subr.mxu0 0.0
        %4507 = vmatpush1.msra.mxu0 0.0
        %4508 = vmatprep.subr.mxu0 0.0
        %4509 = vmatpush1.msra.mxu0 0.0
        %4510 = vmatprep.subr.mxu0 0.0
        %4511 = vmatpush1.msra.mxu0 0.0
        %4512 = vmatprep.subr.mxu0 0.0
        %4513 = vmatpush1.msra.mxu0 0.0
        %4514 = vmatprep.subr.mxu0 0.0
        %4515 = vmatpush1.msra.mxu0 0.0
        %4516 = vmatprep.subr.mxu0 0.0
        %4517 = vmatpush1.msra.mxu0 0.0
        %4518 = vmatprep.subr.mxu0 0.0
        %4519 = vmatpush1.msra.mxu0 0.0
        %4520 = vmatprep.subr.mxu0 0.0
        %4521 = vmatpush1.msra.mxu0 0.0
        %4522 = vmatprep.subr.mxu0 0.0
        %4523 = vmatpush1.msra.mxu0 0.0
        %4524 = vmatprep.subr.mxu0 0.0
        %4525 = vmatpush1.msra.mxu0 0.0
        %4526 = vmatprep.subr.mxu0 0.0
        %4527 = vmatpush1.msra.mxu0 0.0
        %4528 = vmatprep.subr.mxu0 0.0
        %4529 = vmatpush1.msra.mxu0 0.0
        %4530 = vmatprep.subr.mxu0 0.0
        %4531 = vmatpush1.msra.mxu0 0.0
        %4532 = vmatprep.subr.mxu0 0.0
        %4533 = vmatpush1.msra.mxu0 0.0
        %4534 = vmatprep.subr.mxu0 0.0
        %4535 = vmatpush1.msra.mxu0 0.0
        %4536 = vmatprep.subr.mxu0 0.0
        %4537 = vmatpush1.msra.mxu0 0.0
        %4538 = vmatprep.subr.mxu0 0.0
        %4539 = vmatpush1.msra.mxu0 0.0
        %4540 = vmatprep.subr.mxu0 0.0
        %4541 = vmatpush1.msra.mxu0 0.0
        %4542 = vmatprep.subr.mxu0 0.0
        %4543 = vmatpush1.msra.mxu0 0.0
        %4544 = vmatprep.subr.mxu0 0.0
        %4545 = vmatpush1.msra.mxu0 0.0
        %4546 = vmatprep.subr.mxu0 0.0
        %4547 = vmatpush1.msra.mxu0 0.0
        %4548 = vmatprep.subr.mxu0 0.0
        %4549 = vmatpush1.msra.mxu0 0.0
        %4550 = vmatprep.subr.mxu0 0.0
        %4551 = vmatpush1.msra.mxu0 0.0
        %4552 = vmatprep.subr.mxu0 0.0
        %4553 = vmatpush1.msra.mxu0 0.0
        %4554 = vmatprep.mubr.f32.mxu0 0.0
        %v4555 = vand.u32 %v2705, 4294901760
        %4556 = vmatmul.mubr.f32.gmra.mrb[0].mxu0 %v4555
        %v4557 = vpop.f32.mrb[0].mxu0
        %v4558 = vadd.f32 %v4470, %v4557
        %v4559 = vpop.f32.mrb[0].mxu0
        %v4560 = vadd.f32 %v4472, %v4559
        %4561 = vdwg.mxu0
        %4562 = vmatprep.subr.mxu0 0.0
        %v4563 = vand.u32 %v3893, 4294901760
        %4564 = vmatpush1.msra.mxu0 %v4563
        %4565 = vmatprep.subr.mxu0 0.0
        %v4566 = vand.u32 %v3896, 4294901760
        %4567 = vmatpush1.msra.mxu0 %v4566
        %4568 = vmatprep.subr.mxu0 0.0
        %v4569 = vand.u32 %v3899, 4294901760
        %4570 = vmatpush1.msra.mxu0 %v4569
        %4571 = vmatprep.subr.mxu0 0.0
        %v4572 = vand.u32 %v3902, 4294901760
        %4573 = vmatpush1.msra.mxu0 %v4572
        %4574 = vmatprep.subr.mxu0 0.0
        %v4575 = vand.u32 %v3905, 4294901760
        %4576 = vmatpush1.msra.mxu0 %v4575
        %4577 = vmatprep.subr.mxu0 0.0
        %v4578 = vand.u32 %v3908, 4294901760
        %4579 = vmatpush1.msra.mxu0 %v4578
        %4580 = vmatprep.subr.mxu0 0.0
        %v4581 = vand.u32 %v3911, 4294901760
        %4582 = vmatpush1.msra.mxu0 %v4581
        %4583 = vmatprep.subr.mxu0 0.0
        %v4584 = vand.u32 %v3914, 4294901760
        %4585 = vmatpush1.msra.mxu0 %v4584
        %4586 = vmatprep.subr.mxu0 0.0
        %4587 = vmatpush1.msra.mxu0 0.0
        %4588 = vmatprep.subr.mxu0 0.0
        %4589 = vmatpush1.msra.mxu0 0.0
        %4590 = vmatprep.subr.mxu0 0.0
        %4591 = vmatpush1.msra.mxu0 0.0
        %4592 = vmatprep.subr.mxu0 0.0
        %4593 = vmatpush1.msra.mxu0 0.0
        %4594 = vmatprep.subr.mxu0 0.0
        %4595 = vmatpush1.msra.mxu0 0.0
        %4596 = vmatprep.subr.mxu0 0.0
        %4597 = vmatpush1.msra.mxu0 0.0
        %4598 = vmatprep.subr.mxu0 0.0
        %4599 = vmatpush1.msra.mxu0 0.0
        %4600 = vmatprep.subr.mxu0 0.0
        %4601 = vmatpush1.msra.mxu0 0.0
        %4602 = vmatprep.subr.mxu0 0.0
        %4603 = vmatpush1.msra.mxu0 0.0
        %4604 = vmatprep.subr.mxu0 0.0
        %4605 = vmatpush1.msra.mxu0 0.0
        %4606 = vmatprep.subr.mxu0 0.0
        %4607 = vmatpush1.msra.mxu0 0.0
        %4608 = vmatprep.subr.mxu0 0.0
        %4609 = vmatpush1.msra.mxu0 0.0
        %4610 = vmatprep.subr.mxu0 0.0
        %4611 = vmatpush1.msra.mxu0 0.0
        %4612 = vmatprep.subr.mxu0 0.0
        %4613 = vmatpush1.msra.mxu0 0.0
        %4614 = vmatprep.subr.mxu0 0.0
        %4615 = vmatpush1.msra.mxu0 0.0
        %4616 = vmatprep.subr.mxu0 0.0
        %4617 = vmatpush1.msra.mxu0 0.0
        %4618 = vmatprep.subr.mxu0 0.0
        %4619 = vmatpush1.msra.mxu0 0.0
        %4620 = vmatprep.subr.mxu0 0.0
        %4621 = vmatpush1.msra.mxu0 0.0
        %4622 = vmatprep.subr.mxu0 0.0
        %4623 = vmatpush1.msra.mxu0 0.0
        %4624 = vmatprep.subr.mxu0 0.0
        %4625 = vmatpush1.msra.mxu0 0.0
        %4626 = vmatprep.subr.mxu0 0.0
        %4627 = vmatpush1.msra.mxu0 0.0
        %4628 = vmatprep.subr.mxu0 0.0
        %4629 = vmatpush1.msra.mxu0 0.0
        %4630 = vmatprep.subr.mxu0 0.0
        %4631 = vmatpush1.msra.mxu0 0.0
        %4632 = vmatprep.subr.mxu0 0.0
        %4633 = vmatpush1.msra.mxu0 0.0
        %4634 = vmatprep.mubr.f32.mxu0 0.0
        %v4635 = vand.u32 %v2705, 4294901760
        %v4636 = vsub.f32 %v2705, %v4635
        %v4637 = vand.u32 %v4636, 4294901760
        %v4638 = vsub.f32 %v4636, %v4637
        %v4639 = vand.u32 %v4638, 4294901760
        %4640 = vmatmul.mubr.f32.gmra.mrb[0].mxu0 %v4639
        %v4641 = vpop.f32.mrb[0].mxu0
        %v4642 = vadd.f32 0.0, %v4641
        %v4643 = vpop.f32.mrb[0].mxu0
        %4644 = vdwg.mxu0
        %4645 = vmatprep.subr.mxu0 0.0
        %v4646 = vand.u32 %v3893, 4294901760
        %v4647 = vsub.f32 %v3893, %v4646
        %v4648 = vand.u32 %v4647, 4294901760
        %v4649 = vsub.f32 %v4647, %v4648
        %v4650 = vand.u32 %v4649, 4294901760
        %4651 = vmatpush1.msra.mxu0 %v4650
        %4652 = vmatprep.subr.mxu0 0.0
        %v4653 = vand.u32 %v3896, 4294901760
        %v4654 = vsub.f32 %v3896, %v4653
        %v4655 = vand.u32 %v4654, 4294901760
        %v4656 = vsub.f32 %v4654, %v4655
        %v4657 = vand.u32 %v4656, 4294901760
        %4658 = vmatpush1.msra.mxu0 %v4657
        %4659 = vmatprep.subr.mxu0 0.0
        %v4660 = vand.u32 %v3899, 4294901760
        %v4661 = vsub.f32 %v3899, %v4660
        %v4662 = vand.u32 %v4661, 4294901760
        %v4663 = vsub.f32 %v4661, %v4662
        %v4664 = vand.u32 %v4663, 4294901760
        %4665 = vmatpush1.msra.mxu0 %v4664
        %4666 = vmatprep.subr.mxu0 0.0
        %v4667 = vand.u32 %v3902, 4294901760
        %v4668 = vsub.f32 %v3902, %v4667
        %v4669 = vand.u32 %v4668, 4294901760
        %v4670 = vsub.f32 %v4668, %v4669
        %v4671 = vand.u32 %v4670, 4294901760
        %4672 = vmatpush1.msra.mxu0 %v4671
        %4673 = vmatprep.subr.mxu0 0.0
        %v4674 = vand.u32 %v3905, 4294901760
        %v4675 = vsub.f32 %v3905, %v4674
        %v4676 = vand.u32 %v4675, 4294901760
        %v4677 = vsub.f32 %v4675, %v4676
        %v4678 = vand.u32 %v4677, 4294901760
        %4679 = vmatpush1.msra.mxu0 %v4678
        %4680 = vmatprep.subr.mxu0 0.0
        %v4681 = vand.u32 %v3908, 4294901760
        %v4682 = vsub.f32 %v3908, %v4681
        %v4683 = vand.u32 %v4682, 4294901760
        %v4684 = vsub.f32 %v4682, %v4683
        %v4685 = vand.u32 %v4684, 4294901760
        %4686 = vmatpush1.msra.mxu0 %v4685
        %4687 = vmatprep.subr.mxu0 0.0
        %v4688 = vand.u32 %v3911, 4294901760
        %v4689 = vsub.f32 %v3911, %v4688
        %v4690 = vand.u32 %v4689, 4294901760
        %v4691 = vsub.f32 %v4689, %v4690
        %v4692 = vand.u32 %v4691, 4294901760
        %4693 = vmatpush1.msra.mxu0 %v4692
        %4694 = vmatprep.subr.mxu0 0.0
        %v4695 = vand.u32 %v3914, 4294901760
        %v4696 = vsub.f32 %v3914, %v4695
        %v4697 = vand.u32 %v4696, 4294901760
        %v4698 = vsub.f32 %v4696, %v4697
        %v4699 = vand.u32 %v4698, 4294901760
        %4700 = vmatpush1.msra.mxu0 %v4699
        %4701 = vmatprep.subr.mxu0 0.0
        %4702 = vmatpush1.msra.mxu0 0.0
        %4703 = vmatprep.subr.mxu0 0.0
        %4704 = vmatpush1.msra.mxu0 0.0
        %4705 = vmatprep.subr.mxu0 0.0
        %4706 = vmatpush1.msra.mxu0 0.0
        %4707 = vmatprep.subr.mxu0 0.0
        %4708 = vmatpush1.msra.mxu0 0.0
        %4709 = vmatprep.subr.mxu0 0.0
        %4710 = vmatpush1.msra.mxu0 0.0
        %4711 = vmatprep.subr.mxu0 0.0
        %4712 = vmatpush1.msra.mxu0 0.0
        %4713 = vmatprep.subr.mxu0 0.0
        %4714 = vmatpush1.msra.mxu0 0.0
        %4715 = vmatprep.subr.mxu0 0.0
        %4716 = vmatpush1.msra.mxu0 0.0
        %4717 = vmatprep.subr.mxu0 0.0
        %4718 = vmatpush1.msra.mxu0 0.0
        %4719 = vmatprep.subr.mxu0 0.0
        %4720 = vmatpush1.msra.mxu0 0.0
        %4721 = vmatprep.subr.mxu0 0.0
        %4722 = vmatpush1.msra.mxu0 0.0
        %4723 = vmatprep.subr.mxu0 0.0
        %4724 = vmatpush1.msra.mxu0 0.0
        %4725 = vmatprep.subr.mxu0 0.0
        %4726 = vmatpush1.msra.mxu0 0.0
        %4727 = vmatprep.subr.mxu0 0.0
        %4728 = vmatpush1.msra.mxu0 0.0
        %4729 = vmatprep.subr.mxu0 0.0
        %4730 = vmatpush1.msra.mxu0 0.0
        %4731 = vmatprep.subr.mxu0 0.0
        %4732 = vmatpush1.msra.mxu0 0.0
        %4733 = vmatprep.subr.mxu0 0.0
        %4734 = vmatpush1.msra.mxu0 0.0
        %4735 = vmatprep.subr.mxu0 0.0
        %4736 = vmatpush1.msra.mxu0 0.0
        %4737 = vmatprep.subr.mxu0 0.0
        %4738 = vmatpush1.msra.mxu0 0.0
        %4739 = vmatprep.subr.mxu0 0.0
        %4740 = vmatpush1.msra.mxu0 0.0
        %4741 = vmatprep.subr.mxu0 0.0
        %4742 = vmatpush1.msra.mxu0 0.0
        %4743 = vmatprep.subr.mxu0 0.0
        %4744 = vmatpush1.msra.mxu0 0.0
        %4745 = vmatprep.subr.mxu0 0.0
        %4746 = vmatpush1.msra.mxu0 0.0
        %4747 = vmatprep.subr.mxu0 0.0
        %4748 = vmatpush1.msra.mxu0 0.0
        %4749 = vmatprep.mubr.f32.mxu0 0.0
        %v4750 = vand.u32 %v2705, 4294901760
        %4751 = vmatmul.mubr.f32.gmra.mrb[0].mxu0 %v4750
        %v4752 = vpop.f32.mrb[0].mxu0
        %v4753 = vadd.f32 %v4642, %v4752
        %v4754 = vpop.f32.mrb[0].mxu0
        %4755 = vdwg.mxu0
        %4756 = vmatprep.subr.mxu0 0.0
        %v4757 = vand.u32 %v3893, 4294901760
        %v4758 = vsub.f32 %v3893, %v4757
        %4759 = vmatpush1.msra.mxu0 %v4758
        %4760 = vmatprep.subr.mxu0 0.0
        %v4761 = vand.u32 %v3896, 4294901760
        %v4762 = vsub.f32 %v3896, %v4761
        %4763 = vmatpush1.msra.mxu0 %v4762
        %4764 = vmatprep.subr.mxu0 0.0
        %v4765 = vand.u32 %v3899, 4294901760
        %v4766 = vsub.f32 %v3899, %v4765
        %4767 = vmatpush1.msra.mxu0 %v4766
        %4768 = vmatprep.subr.mxu0 0.0
        %v4769 = vand.u32 %v3902, 4294901760
        %v4770 = vsub.f32 %v3902, %v4769
        %4771 = vmatpush1.msra.mxu0 %v4770
        %4772 = vmatprep.subr.mxu0 0.0
        %v4773 = vand.u32 %v3905, 4294901760
        %v4774 = vsub.f32 %v3905, %v4773
        %4775 = vmatpush1.msra.mxu0 %v4774
        %4776 = vmatprep.subr.mxu0 0.0
        %v4777 = vand.u32 %v3908, 4294901760
        %v4778 = vsub.f32 %v3908, %v4777
        %4779 = vmatpush1.msra.mxu0 %v4778
        %4780 = vmatprep.subr.mxu0 0.0
        %v4781 = vand.u32 %v3911, 4294901760
        %v4782 = vsub.f32 %v3911, %v4781
        %4783 = vmatpush1.msra.mxu0 %v4782
        %4784 = vmatprep.subr.mxu0 0.0
        %v4785 = vand.u32 %v3914, 4294901760
        %v4786 = vsub.f32 %v3914, %v4785
        %4787 = vmatpush1.msra.mxu0 %v4786
        %4788 = vmatprep.subr.mxu0 0.0
        %4789 = vmatpush1.msra.mxu0 0.0
        %4790 = vmatprep.subr.mxu0 0.0
        %4791 = vmatpush1.msra.mxu0 0.0
        %4792 = vmatprep.subr.mxu0 0.0
        %4793 = vmatpush1.msra.mxu0 0.0
        %4794 = vmatprep.subr.mxu0 0.0
        %4795 = vmatpush1.msra.mxu0 0.0
        %4796 = vmatprep.subr.mxu0 0.0
        %4797 = vmatpush1.msra.mxu0 0.0
        %4798 = vmatprep.subr.mxu0 0.0
        %4799 = vmatpush1.msra.mxu0 0.0
        %4800 = vmatprep.subr.mxu0 0.0
        %4801 = vmatpush1.msra.mxu0 0.0
        %4802 = vmatprep.subr.mxu0 0.0
        %4803 = vmatpush1.msra.mxu0 0.0
        %4804 = vmatprep.subr.mxu0 0.0
        %4805 = vmatpush1.msra.mxu0 0.0
        %4806 = vmatprep.subr.mxu0 0.0
        %4807 = vmatpush1.msra.mxu0 0.0
        %4808 = vmatprep.subr.mxu0 0.0
        %4809 = vmatpush1.msra.mxu0 0.0
        %4810 = vmatprep.subr.mxu0 0.0
        %4811 = vmatpush1.msra.mxu0 0.0
        %4812 = vmatprep.subr.mxu0 0.0
        %4813 = vmatpush1.msra.mxu0 0.0
        %4814 = vmatprep.subr.mxu0 0.0
        %4815 = vmatpush1.msra.mxu0 0.0
        %4816 = vmatprep.subr.mxu0 0.0
        %4817 = vmatpush1.msra.mxu0 0.0
        %4818 = vmatprep.subr.mxu0 0.0
        %4819 = vmatpush1.msra.mxu0 0.0
        %4820 = vmatprep.subr.mxu0 0.0
        %4821 = vmatpush1.msra.mxu0 0.0
        %4822 = vmatprep.subr.mxu0 0.0
        %4823 = vmatpush1.msra.mxu0 0.0
        %4824 = vmatprep.subr.mxu0 0.0
        %4825 = vmatpush1.msra.mxu0 0.0
        %4826 = vmatprep.subr.mxu0 0.0
        %4827 = vmatpush1.msra.mxu0 0.0
        %4828 = vmatprep.subr.mxu0 0.0
        %4829 = vmatpush1.msra.mxu0 0.0
        %4830 = vmatprep.subr.mxu0 0.0
        %4831 = vmatpush1.msra.mxu0 0.0
        %4832 = vmatprep.subr.mxu0 0.0
        %4833 = vmatpush1.msra.mxu0 0.0
        %4834 = vmatprep.subr.mxu0 0.0
        %4835 = vmatpush1.msra.mxu0 0.0
        %4836 = vmatprep.mubr.f32.mxu0 0.0
        %v4837 = vand.u32 %v2705, 4294901760
        %v4838 = vsub.f32 %v2705, %v4837
        %4839 = vmatmul.mubr.f32.gmra.mrb[0].mxu0 %v4838
        %v4840 = vpop.f32.mrb[0].mxu0
        %v4841 = vadd.f32 %v4753, %v4840
        %v4842 = vpop.f32.mrb[0].mxu0
        %4843 = vdwg.mxu0
        %4844 = vmatprep.subr.mxu0 0.0
        %v4845 = vand.u32 %v3893, 4294901760
        %4846 = vmatpush1.msra.mxu0 %v4845
        %4847 = vmatprep.subr.mxu0 0.0
        %v4848 = vand.u32 %v3896, 4294901760
        %4849 = vmatpush1.msra.mxu0 %v4848
        %4850 = vmatprep.subr.mxu0 0.0
        %v4851 = vand.u32 %v3899, 4294901760
        %4852 = vmatpush1.msra.mxu0 %v4851
        %4853 = vmatprep.subr.mxu0 0.0
        %v4854 = vand.u32 %v3902, 4294901760
        %4855 = vmatpush1.msra.mxu0 %v4854
        %4856 = vmatprep.subr.mxu0 0.0
        %v4857 = vand.u32 %v3905, 4294901760
        %4858 = vmatpush1.msra.mxu0 %v4857
        %4859 = vmatprep.subr.mxu0 0.0
        %v4860 = vand.u32 %v3908, 4294901760
        %4861 = vmatpush1.msra.mxu0 %v4860
        %4862 = vmatprep.subr.mxu0 0.0
        %v4863 = vand.u32 %v3911, 4294901760
        %4864 = vmatpush1.msra.mxu0 %v4863
        %4865 = vmatprep.subr.mxu0 0.0
        %v4866 = vand.u32 %v3914, 4294901760
        %4867 = vmatpush1.msra.mxu0 %v4866
        %4868 = vmatprep.subr.mxu0 0.0
        %4869 = vmatpush1.msra.mxu0 0.0
        %4870 = vmatprep.subr.mxu0 0.0
        %4871 = vmatpush1.msra.mxu0 0.0
        %4872 = vmatprep.subr.mxu0 0.0
        %4873 = vmatpush1.msra.mxu0 0.0
        %4874 = vmatprep.subr.mxu0 0.0
        %4875 = vmatpush1.msra.mxu0 0.0
        %4876 = vmatprep.subr.mxu0 0.0
        %4877 = vmatpush1.msra.mxu0 0.0
        %4878 = vmatprep.subr.mxu0 0.0
        %4879 = vmatpush1.msra.mxu0 0.0
        %4880 = vmatprep.subr.mxu0 0.0
        %4881 = vmatpush1.msra.mxu0 0.0
        %4882 = vmatprep.subr.mxu0 0.0
        %4883 = vmatpush1.msra.mxu0 0.0
        %4884 = vmatprep.subr.mxu0 0.0
        %4885 = vmatpush1.msra.mxu0 0.0
        %4886 = vmatprep.subr.mxu0 0.0
        %4887 = vmatpush1.msra.mxu0 0.0
        %4888 = vmatprep.subr.mxu0 0.0
        %4889 = vmatpush1.msra.mxu0 0.0
        %4890 = vmatprep.subr.mxu0 0.0
        %4891 = vmatpush1.msra.mxu0 0.0
        %4892 = vmatprep.subr.mxu0 0.0
        %4893 = vmatpush1.msra.mxu0 0.0
        %4894 = vmatprep.subr.mxu0 0.0
        %4895 = vmatpush1.msra.mxu0 0.0
        %4896 = vmatprep.subr.mxu0 0.0
        %4897 = vmatpush1.msra.mxu0 0.0
        %4898 = vmatprep.subr.mxu0 0.0
        %4899 = vmatpush1.msra.mxu0 0.0
        %4900 = vmatprep.subr.mxu0 0.0
        %4901 = vmatpush1.msra.mxu0 0.0
        %4902 = vmatprep.subr.mxu0 0.0
        %4903 = vmatpush1.msra.mxu0 0.0
        %4904 = vmatprep.subr.mxu0 0.0
        %4905 = vmatpush1.msra.mxu0 0.0
        %4906 = vmatprep.subr.mxu0 0.0
        %4907 = vmatpush1.msra.mxu0 0.0
        %4908 = vmatprep.subr.mxu0 0.0
        %4909 = vmatpush1.msra.mxu0 0.0
        %4910 = vmatprep.subr.mxu0 0.0
        %4911 = vmatpush1.msra.mxu0 0.0
        %4912 = vmatprep.subr.mxu0 0.0
        %4913 = vmatpush1.msra.mxu0 0.0
        %4914 = vmatprep.subr.mxu0 0.0
        %4915 = vmatpush1.msra.mxu0 0.0
        %4916 = vmatprep.mubr.f32.mxu0 0.0
        %v4917 = vand.u32 %v2705, 4294901760
        %v4918 = vsub.f32 %v2705, %v4917
        %v4919 = vand.u32 %v4918, 4294901760
        %4920 = vmatmul.mubr.f32.gmra.mrb[0].mxu0 %v4919
        %v4921 = vpop.f32.mrb[0].mxu0
        %v4922 = vadd.f32 %v4841, %v4921
        %v4923 = vpop.f32.mrb[0].mxu0
        %4924 = vdwg.mxu0
        %4925 = vmatprep.subr.mxu0 0.0
        %v4926 = vand.u32 %v3893, 4294901760
        %v4927 = vsub.f32 %v3893, %v4926
        %v4928 = vand.u32 %v4927, 4294901760
        %4929 = vmatpush1.msra.mxu0 %v4928
        %4930 = vmatprep.subr.mxu0 0.0
        %v4931 = vand.u32 %v3896, 4294901760
        %v4932 = vsub.f32 %v3896, %v4931
        %v4933 = vand.u32 %v4932, 4294901760
        %4934 = vmatpush1.msra.mxu0 %v4933
        %4935 = vmatprep.subr.mxu0 0.0
        %v4936 = vand.u32 %v3899, 4294901760
        %v4937 = vsub.f32 %v3899, %v4936
        %v4938 = vand.u32 %v4937, 4294901760
        %4939 = vmatpush1.msra.mxu0 %v4938
        %4940 = vmatprep.subr.mxu0 0.0
        %v4941 = vand.u32 %v3902, 4294901760
        %v4942 = vsub.f32 %v3902, %v4941
        %v4943 = vand.u32 %v4942, 4294901760
        %4944 = vmatpush1.msra.mxu0 %v4943
        %4945 = vmatprep.subr.mxu0 0.0
        %v4946 = vand.u32 %v3905, 4294901760
        %v4947 = vsub.f32 %v3905, %v4946
        %v4948 = vand.u32 %v4947, 4294901760
        %4949 = vmatpush1.msra.mxu0 %v4948
        %4950 = vmatprep.subr.mxu0 0.0
        %v4951 = vand.u32 %v3908, 4294901760
        %v4952 = vsub.f32 %v3908, %v4951
        %v4953 = vand.u32 %v4952, 4294901760
        %4954 = vmatpush1.msra.mxu0 %v4953
        %4955 = vmatprep.subr.mxu0 0.0
        %v4956 = vand.u32 %v3911, 4294901760
        %v4957 = vsub.f32 %v3911, %v4956
        %v4958 = vand.u32 %v4957, 4294901760
        %4959 = vmatpush1.msra.mxu0 %v4958
        %4960 = vmatprep.subr.mxu0 0.0
        %v4961 = vand.u32 %v3914, 4294901760
        %v4962 = vsub.f32 %v3914, %v4961
        %v4963 = vand.u32 %v4962, 4294901760
        %4964 = vmatpush1.msra.mxu0 %v4963
        %4965 = vmatprep.subr.mxu0 0.0
        %4966 = vmatpush1.msra.mxu0 0.0
        %4967 = vmatprep.subr.mxu0 0.0
        %4968 = vmatpush1.msra.mxu0 0.0
        %4969 = vmatprep.subr.mxu0 0.0
        %4970 = vmatpush1.msra.mxu0 0.0
        %4971 = vmatprep.subr.mxu0 0.0
        %4972 = vmatpush1.msra.mxu0 0.0
        %4973 = vmatprep.subr.mxu0 0.0
        %4974 = vmatpush1.msra.mxu0 0.0
        %4975 = vmatprep.subr.mxu0 0.0
        %4976 = vmatpush1.msra.mxu0 0.0
        %4977 = vmatprep.subr.mxu0 0.0
        %4978 = vmatpush1.msra.mxu0 0.0
        %4979 = vmatprep.subr.mxu0 0.0
        %4980 = vmatpush1.msra.mxu0 0.0
        %4981 = vmatprep.subr.mxu0 0.0
        %4982 = vmatpush1.msra.mxu0 0.0
        %4983 = vmatprep.subr.mxu0 0.0
        %4984 = vmatpush1.msra.mxu0 0.0
        %4985 = vmatprep.subr.mxu0 0.0
        %4986 = vmatpush1.msra.mxu0 0.0
        %4987 = vmatprep.subr.mxu0 0.0
        %4988 = vmatpush1.msra.mxu0 0.0
        %4989 = vmatprep.subr.mxu0 0.0
        %4990 = vmatpush1.msra.mxu0 0.0
        %4991 = vmatprep.subr.mxu0 0.0
        %4992 = vmatpush1.msra.mxu0 0.0
        %4993 = vmatprep.subr.mxu0 0.0
        %4994 = vmatpush1.msra.mxu0 0.0
        %4995 = vmatprep.subr.mxu0 0.0
        %4996 = vmatpush1.msra.mxu0 0.0
        %4997 = vmatprep.subr.mxu0 0.0
        %4998 = vmatpush1.msra.mxu0 0.0
        %4999 = vmatprep.subr.mxu0 0.0
        %5000 = vmatpush1.msra.mxu0 0.0
        %5001 = vmatprep.subr.mxu0 0.0
        %5002 = vmatpush1.msra.mxu0 0.0
        %5003 = vmatprep.subr.mxu0 0.0
        %5004 = vmatpush1.msra.mxu0 0.0
        %5005 = vmatprep.subr.mxu0 0.0
        %5006 = vmatpush1.msra.mxu0 0.0
        %5007 = vmatprep.subr.mxu0 0.0
        %5008 = vmatpush1.msra.mxu0 0.0
        %5009 = vmatprep.subr.mxu0 0.0
        %5010 = vmatpush1.msra.mxu0 0.0
        %5011 = vmatprep.subr.mxu0 0.0
        %5012 = vmatpush1.msra.mxu0 0.0
        %5013 = vmatprep.mubr.f32.mxu0 0.0
        %v5014 = vand.u32 %v2705, 4294901760
        %5015 = vmatmul.mubr.f32.gmra.mrb[0].mxu0 %v5014
        %v5016 = vpop.f32.mrb[0].mxu0
        %v5017 = vadd.f32 %v4922, %v5016
        %v5018 = vpop.f32.mrb[0].mxu0
        %5019 = vdwg.mxu0
        %5020 = vmatprep.subr.mxu0 0.0
        %v5021 = vand.u32 %v3893, 4294901760
        %5022 = vmatpush1.msra.mxu0 %v5021
        %5023 = vmatprep.subr.mxu0 0.0
        %v5024 = vand.u32 %v3896, 4294901760
        %5025 = vmatpush1.msra.mxu0 %v5024
        %5026 = vmatprep.subr.mxu0 0.0
        %v5027 = vand.u32 %v3899, 4294901760
        %5028 = vmatpush1.msra.mxu0 %v5027
        %5029 = vmatprep.subr.mxu0 0.0
        %v5030 = vand.u32 %v3902, 4294901760
        %5031 = vmatpush1.msra.mxu0 %v5030
        %5032 = vmatprep.subr.mxu0 0.0
        %v5033 = vand.u32 %v3905, 4294901760
        %5034 = vmatpush1.msra.mxu0 %v5033
        %5035 = vmatprep.subr.mxu0 0.0
        %v5036 = vand.u32 %v3908, 4294901760
        %5037 = vmatpush1.msra.mxu0 %v5036
        %5038 = vmatprep.subr.mxu0 0.0
        %v5039 = vand.u32 %v3911, 4294901760
        %5040 = vmatpush1.msra.mxu0 %v5039
        %5041 = vmatprep.subr.mxu0 0.0
        %v5042 = vand.u32 %v3914, 4294901760
        %5043 = vmatpush1.msra.mxu0 %v5042
        %5044 = vmatprep.subr.mxu0 0.0
        %5045 = vmatpush1.msra.mxu0 0.0
        %5046 = vmatprep.subr.mxu0 0.0
        %5047 = vmatpush1.msra.mxu0 0.0
        %5048 = vmatprep.subr.mxu0 0.0
        %5049 = vmatpush1.msra.mxu0 0.0
        %5050 = vmatprep.subr.mxu0 0.0
        %5051 = vmatpush1.msra.mxu0 0.0
        %5052 = vmatprep.subr.mxu0 0.0
        %5053 = vmatpush1.msra.mxu0 0.0
        %5054 = vmatprep.subr.mxu0 0.0
        %5055 = vmatpush1.msra.mxu0 0.0
        %5056 = vmatprep.subr.mxu0 0.0
        %5057 = vmatpush1.msra.mxu0 0.0
        %5058 = vmatprep.subr.mxu0 0.0
        %5059 = vmatpush1.msra.mxu0 0.0
        %5060 = vmatprep.subr.mxu0 0.0
        %5061 = vmatpush1.msra.mxu0 0.0
        %5062 = vmatprep.subr.mxu0 0.0
        %5063 = vmatpush1.msra.mxu0 0.0
        %5064 = vmatprep.subr.mxu0 0.0
        %5065 = vmatpush1.msra.mxu0 0.0
        %5066 = vmatprep.subr.mxu0 0.0
        %5067 = vmatpush1.msra.mxu0 0.0
        %5068 = vmatprep.subr.mxu0 0.0
        %5069 = vmatpush1.msra.mxu0 0.0
        %5070 = vmatprep.subr.mxu0 0.0
        %5071 = vmatpush1.msra.mxu0 0.0
        %5072 = vmatprep.subr.mxu0 0.0
        %5073 = vmatpush1.msra.mxu0 0.0
        %5074 = vmatprep.subr.mxu0 0.0
        %5075 = vmatpush1.msra.mxu0 0.0
        %5076 = vmatprep.subr.mxu0 0.0
        %5077 = vmatpush1.msra.mxu0 0.0
        %5078 = vmatprep.subr.mxu0 0.0
        %5079 = vmatpush1.msra.mxu0 0.0
        %5080 = vmatprep.subr.mxu0 0.0
        %5081 = vmatpush1.msra.mxu0 0.0
        %5082 = vmatprep.subr.mxu0 0.0
        %5083 = vmatpush1.msra.mxu0 0.0
        %5084 = vmatprep.subr.mxu0 0.0
        %5085 = vmatpush1.msra.mxu0 0.0
        %5086 = vmatprep.subr.mxu0 0.0
        %5087 = vmatpush1.msra.mxu0 0.0
        %5088 = vmatprep.subr.mxu0 0.0
        %5089 = vmatpush1.msra.mxu0 0.0
        %5090 = vmatprep.subr.mxu0 0.0
        %5091 = vmatpush1.msra.mxu0 0.0
        %5092 = vmatprep.mubr.f32.mxu0 0.0
        %v5093 = vand.u32 %v2705, 4294901760
        %5094 = vmatmul.mubr.f32.gmra.mrb[0].mxu0 %v5093
        %v5095 = vpop.f32.mrb[0].mxu0
        %v5096 = vadd.f32 %v5017, %v5095
        %v5097 = vpop.f32.mrb[0].mxu0
        %5098 = vdwg.mxu0
        %v5099 = vrsqrt.pop %v3350
        %v5100 = vmul.f32 %v3350, %v5099
        %vm5101 = vcmp.eq.f32.partialorder %v3350, inf
        %v5102 = vsel %vm5101, %v3350, %v5100
        %vm5103 = vcmp.eq.f32.partialorder %v3350, 0.0
        %v5104 = vand.u32 %v3350, 2147483648
        %v5105 = vsel %vm5103, %v5104, %v5102
        %v5106 = vrsqrt.pop %v3352
        %v5107 = vmul.f32 %v3352, %v5106
        %vm5108 = vcmp.eq.f32.partialorder %v3352, inf
        %v5109 = vsel %vm5108, %v3352, %v5107
        %vm5110 = vcmp.eq.f32.partialorder %v3352, 0.0
        %v5111 = vand.u32 %v3352, 2147483648
        %v5112 = vsel %vm5110, %v5111, %v5109
        %v5113 = vrsqrt.pop %v3888
        %v5114 = vmul.f32 %v3888, %v5113
        %vm5115 = vcmp.eq.f32.partialorder %v3888, inf
        %v5116 = vsel %vm5115, %v3888, %v5114
        %vm5117 = vcmp.eq.f32.partialorder %v3888, 0.0
        %v5118 = vand.u32 %v3888, 2147483648
        %v5119 = vsel %vm5117, %v5118, %v5116
        %v5120 = vadd.f32 %v5105, 1e-10
        %v5121 = vadd.f32 %v5112, 1e-10
        %v5122 = vadd.f32 %v5119, 1e-10
        %v5123 = vrcp.pop %v5120
        %v5124 = vmul.f32 %v955, %v5123
        %v5125 = vrcp.pop %v5121
        %v5126 = vmul.f32 %v957, %v5125
        %v5127 = vrcp.pop %v5122
        %v5128 = vmul.f32 %v1493, %v5127
        %v5129 = vrsqrt.pop %v4558
        %v5130 = vmul.f32 %v4558, %v5129
        %vm5131 = vcmp.eq.f32.partialorder %v4558, inf
        %v5132 = vsel %vm5131, %v4558, %v5130
        %vm5133 = vcmp.eq.f32.partialorder %v4558, 0.0
        %v5134 = vand.u32 %v4558, 2147483648
        %v5135 = vsel %vm5133, %v5134, %v5132
        %v5136 = vrsqrt.pop %v4560
        %v5137 = vmul.f32 %v4560, %v5136
        %vm5138 = vcmp.eq.f32.partialorder %v4560, inf
        %v5139 = vsel %vm5138, %v4560, %v5137
        %vm5140 = vcmp.eq.f32.partialorder %v4560, 0.0
        %v5141 = vand.u32 %v4560, 2147483648
        %v5142 = vsel %vm5140, %v5141, %v5139
        %v5143 = vrsqrt.pop %v5096
        %v5144 = vmul.f32 %v5096, %v5143
        %vm5145 = vcmp.eq.f32.partialorder %v5096, inf
        %v5146 = vsel %vm5145, %v5096, %v5144
        %vm5147 = vcmp.eq.f32.partialorder %v5096, 0.0
        %v5148 = vand.u32 %v5096, 2147483648
        %v5149 = vsel %vm5147, %v5148, %v5146
        %v5150 = vadd.f32 %v5135, 1e-10
        %v5151 = vadd.f32 %v5142, 1e-10
        %v5152 = vadd.f32 %v5149, 1e-10
        %v5153 = vrcp.pop %v5150
        %v5154 = vmul.f32 %v2139, %v5153
        %v5155 = vrcp.pop %v5151
        %v5156 = vmul.f32 %v2141, %v5155
        %v5157 = vrcp.pop %v5152
        %v5158 = vmul.f32 %v2677, %v5157
        %v5159 = vsub.f32 %v5124, %v5154
        %v5160 = vsub.f32 %v5126, %v5156
        %v5161 = vsub.f32 %v5128, %v5158
        %v5162 = vmul.f32 %v5159, %v5159
        %v5163 = vmul.f32 %v5160, %v5160
        %v5164 = vmul.f32 %v5161, %v5161
        %v5165 = vld [vmem:[#allocation2] sm:$0x7]
        %v5169 = vcombine.low %v5162, %v5163
        %v5171 = vunpack.c.l.s4 1966171168
        %v5172 = vunpack.c.0.s8 %v5171
        %v5173 = vlaneseq
        %v5174 = vshrl.u32 %v5173, 7
        %v5175 = vsub.s32 %v5172, %v5174
        %v5176 = vrot.slane %v5169, %v5175
        %v5178 = vunpack.c.l.s4 1966171168
        %v5179 = vunpack.c.0.s8 %v5178
        %v5180 = vlaneseq
        %v5181 = vshrl.u32 %v5180, 7
        %v5182 = vsub.s32 %v5179, %v5181
        %v5183 = vrot.slane %v5164, %v5182
        %v5184 = vcombine.low %v5176, %v5183
        %v5186 = vunpack.c.l.s4 1966171168
        %v5187 = vunpack.c.0.s8 %v5186
        %v5188 = vlaneseq
        %v5189 = vshrl.u32 %v5188, 7
        %v5190 = vsub.s32 %v5187, %v5189
        %v5191 = vrot.slane %v5184, %v5190
        %v5193 = vadd.f32 %v5165, %v5191
        %v5194 = vlaneseq
        %vm5195 = vcmp.ge.s32.totalorder %v5194, 0
        %vm5196 = vcmp.lt.s32.totalorder %v5194, 324
        %vm5197 = vmand %vm5195, %vm5196
        %5198 = vst.msk [vmem:[#allocation2] sm:$0x7] %vm5197, %v5193
        // Predicated region
        $region45: #{tpu_custom_call.1} parent=31 // pred_check
          %p5199 = pneg %p249
        $region46: #{tpu_custom_call.1} parent=31 // pred_check_branch
          %5201 = sbr.rel (%p5199) target = $region48
        $region47: #{tpu_custom_call.1} parent=31 // pred_region
          %v5202 = vld [vmem:[#allocation2] sm:$0x7]
          %v5204 = vlaneseq
          %v5205 = vshrl.u32 %v5204, 7
          %v5206 = vsub.s32 0, %v5205
          %v5207 = vrot.slane %v5202, %v5206
          %v5208 = vlaneseq
          %v5209 = vshrl.u32 %v5208, 7
          %v5210 = vsub.s32 1, %v5209
          %v5211 = vrot.slane %v5202, %v5210
          %v5212 = vlaneseq
          %v5213 = vshrl.u32 %v5212, 7
          %v5214 = vsub.s32 2, %v5213
          %v5215 = vrot.slane %v5202, %v5214
          %vm5219 = vcmask 1040384
          %v5220 = vsel %vm5219, %v5207, 0.0
          %v5221 = vsel %vm5219, %v5211, 0.0
          %v5222 = vadd.f32 %v5220, %v5221
          %vm5223 = vcmask 548864
          %v5224 = vsel %vm5223, %v5215, 0.0
          %v5225 = vadd.f32 %v5222, %v5224
          %5226 = vadd.xlane.f32.xlu0 %v5225
          %v5227 = vpop.xlane.xlu0 %5226
          %v5228 = vmul.f32 %v5227, 0.0030864198
          %vm5229 = vcmask 0
          %5230 = vst.msk [vmem:[%s248] sm:$0x1] %vm5229, %v5228
        $region48: #{tpu_custom_call.1} parent=31 // pred_fallthru
          _
        %p5231 = scmp.lt.s32.totalorder %s24, 1
        %s5232 = scalar_select %p5231, %s24, 1
        %s5233 = scalar_lea.vmem %s3, %s5232
        // Predicated region
        $region49: #{tpu_custom_call.1} parent=31 // pred_check
          %p5234 = pneg %p127
        $region50: #{tpu_custom_call.1} parent=31 // pred_check_branch
          %5236 = sbr.rel (%p5234) target = $region52
        $region51: #{tpu_custom_call.1} parent=31 // pred_region
          _
        $region52: #{tpu_custom_call.1} parent=31 // pred_fallthru
          _
      $region32: #{tpu_custom_call.1} parent=5 // pred_fallthru
        _
      %p5237 = scmp.le.s32.totalorder 2, %s15
      // Predicated region
      $region53: #{tpu_custom_call.1} parent=5 // pred_check
        %p5238 = pneg %p5237
      $region54: #{tpu_custom_call.1} parent=5 // pred_check_branch
        %5240 = sbr.rel (%p5238) target = $region56
      $region55: #{tpu_custom_call.1} parent=5 // pred_region
        %s5241 = ssub.s32 %s15, 2
        // Predicated region
        $region57: #{tpu_custom_call.1} parent=55 // pred_check
          %p5242 = pneg %p133
        $region58: #{tpu_custom_call.1} parent=55 // pred_check_branch
          %5244 = sbr.rel (%p5242) target = $region60
        $region59: #{tpu_custom_call.1} parent=55 // pred_region
          %p5245 = scmp.lt.s32.totalorder %s26, 1
          %s5246 = scalar_select %p5245, %s26, 1
          %s5247 = scalar_lea.vmem %s3, %s5246
        $region60: #{tpu_custom_call.1} parent=55 // pred_fallthru
          _
      $region56: #{tpu_custom_call.1} parent=5 // pred_fallthru
        _
    $region6: #{tpu_custom_call.1} parent=1 // loop_footer
      %s19 = sadd.s32 1, %s15
    $region7: #{tpu_custom_call.1} parent=1 // loop_footer_branch
      %14 = sbr.rel target = $region3
    $region8: #{tpu_custom_call.1} parent=1 // loop_exit
      _
    %5248 = vsyncpa [#allocation4], 1
    %s5249 = scalar_lea.sflag [#allocation4], 1
    %5250 = vsyncpa %s5249, 1
    %5251 = vsyncpa [#allocation6], 1
    %s5252 = scalar_lea.sflag [#allocation6], 1
    %5253 = vsyncpa %s5252, 1

</llo_original>
